<compile_context>
chip_gen: v7x
topology: tpu7x:2x2x1
jax: 0.10.0
libtpu: 0.0.40
codegen_flags: <defaults>
</compile_context>

<pallas_src>
import jax
import jax.numpy as jnp
from jax.experimental import pallas as pl
from jax.experimental.pallas import tpu as pltpu

EPS = 1e-5
LANE = 128
FPAD = 8   # front/back row pad of the flat halo scratch (keeps all stores aligned)


# ----------------------------------------------------------------------------------
# helpers
# ----------------------------------------------------------------------------------
def _round_up(n, m):
    return (n + m - 1) // m * m


def _pad_axis(a, axis, target):
    pad = target - a.shape[axis]
    if pad <= 0:
        return a
    cfg = [(0, 0)] * a.ndim
    cfg[axis] = (0, pad)
    return jnp.pad(a, cfg)


def _bn_fold(gamma, beta, mean, var):
    scale = gamma / jnp.sqrt(var + EPS)
    shift = beta - mean * scale
    return scale, shift


# ----------------------------------------------------------------------------------
# fused resblock kernel
# ----------------------------------------------------------------------------------
def _make_resblock_kernel(H, W, Ho, Wo, Cin_p, Cout_p, downsample):
    HWo = Ho * Wo
    ROWS = 2 * FPAD + (Ho + 2) * Wo          # flat halo-scratch rows
    ITOP = FPAD + Wo                         # first interior (image) row of the scratch

    def flat_conv3x3(pad_ref, w_ref, cin, m_lo, m_hi):
        # 3x3 stride-1 conv on the flat halo scratch.  Tap (kh,kw) is the contiguous
        # (HWo, cin) slice starting at row FPAD + kh*Wo + kw - 1; the two horizontally
        # wrapped columns (w==0 for kw=0, w==Wo-1 for kw=2) are zeroed with masks.
        # One K = 3*cin matmul per kernel row, f32 accumulation.
        acc = None
        for kh in range(3):
            base = FPAD + kh * Wo
            t0 = pad_ref[base - 1:base - 1 + HWo, :] * m_lo
            t1 = pad_ref[base:base + HWo, :]
            t2 = pad_ref[base + 1:base + 1 + HWo, :] * m_hi
            patch = jnp.concatenate([t0, t1, t2], axis=1)             # (HWo, 3*cin) bf16
            part = jnp.dot(patch, w_ref[3 * kh * cin:3 * (kh + 1) * cin, :],
                           preferred_element_type=jnp.float32)
            acc = part if acc is None else acc + part
        return acc                                                    # (HWo, Cout_p) f32

    def kernel(*refs):
        if downsample:
            (xq_ref, w1_ref, s1_ref, b1_ref, w2_ref, s2_ref, b2_ref,
             mlo_ref, mhi_ref, wds_ref, sds_ref, bds_ref,
             o_ref, pad_ref) = refs
        else:
            (x_ref, w1_ref, s1_ref, b1_ref, w2_ref, s2_ref, b2_ref,
             mlo_ref, mhi_ref, o_ref, pad_ref) = refs

        m_lo = mlo_ref[...]                                           # (HWo, 1) bf16
        m_hi = mhi_ref[...]

        # Zero only the halo strips (interior is fully overwritten each step).
        # Done every step so it stays correct when the batch axis is megacore-split.
        pad_ref[0:ITOP, :] = jnp.zeros((ITOP, Cout_p), jnp.bfloat16)
        pad_ref[ITOP + HWo:ROWS, :] = jnp.zeros((ROWS - ITOP - HWo, Cout_p),
                                                jnp.bfloat16)

        # ----------------- conv1 + BN1 + ReLU --------------------------------
        if downsample:
            # Strided im2col on the de-interleaved padded planes:
            #   xq[plane*(Ho+1) + i, j, :] == xpad[2*i + rp, 2*j + cp, :],
            #   plane = 2*rp + cp.  Only the Ho*Wo output rows are ever computed.
            acc1 = None
            for kh in range(3):
                taps = []
                for kw in range(3):
                    plane = 2 * (kh % 2) + (kw % 2)
                    r0 = plane * (Ho + 1) + kh // 2
                    t = xq_ref[0, r0:r0 + Ho, kw // 2:kw // 2 + Wo, :]
                    taps.append(t.reshape(HWo, Cin_p))
                patch = jnp.concatenate(taps, axis=1)                 # (HWo, 3*Cin_p)
                part = jnp.dot(patch, w1_ref[3 * kh * Cin_p:3 * (kh + 1) * Cin_p, :],
                               preferred_element_type=jnp.float32)
                acc1 = part if acc1 is None else acc1 + part
            # residual branch: 1x1 conv stride 2 + BN; plane (rp=1, cp=1) is x[2i, 2j]
            r0 = 3 * (Ho + 1)
            x_sub = xq_ref[0, r0:r0 + Ho, 0:Wo, :].reshape(HWo, Cin_p)
            rds = jnp.dot(x_sub, wds_ref[...], preferred_element_type=jnp.float32)
            residual = rds * sds_ref[...] + bds_ref[...]              # (HWo, Cout_p) f32
        else:
            x_flat = x_ref[0].reshape(HWo, Cin_p)                     # bf16
            pad_ref[ITOP:ITOP + HWo, :] = x_flat                      # aligned flat store
            acc1 = flat_conv3x3(pad_ref, w1_ref, Cin_p, m_lo, m_hi)
            # TODO(synk): identity residual uses the bf16-cast input (PyTorch adds f32).
            residual = x_flat.astype(jnp.float32)

        act1 = jnp.maximum(acc1 * s1_ref[...] + b1_ref[...], 0.0)     # (HWo, Cout_p) f32

        # ----------------- conv2 + BN2 + residual add + ReLU -------------------
        pad_ref[ITOP:ITOP + HWo, :] = act1.astype(jnp.bfloat16)       # reuse the scratch
        acc2 = flat_conv3x3(pad_ref, w2_ref, Cout_p, m_lo, m_hi)
        out = jnp.maximum(acc2 * s2_ref[...] + b2_ref[...] + residual, 0.0)
        o_ref[0] = out.reshape(Ho, Wo, Cout_p).astype(o_ref.dtype)

    return kernel


# ----------------------------------------------------------------------------------
# public forward (NCHW in / NCHW out, like the PyTorch module)
# ----------------------------------------------------------------------------------
def resblock_forward(x_nchw, params, in_channels, out_channels):
    downsample = in_channels != out_channels
    x = jnp.transpose(x_nchw, (0, 2, 3, 1))                           # NCHW -> NHWC
    N, H, W, Cin = x.shape
    assert Cin == in_channels
    if downsample:
        assert H % 2 == 0 and W % 2 == 0, "stride-2 path assumes even spatial dims"
        Ho, Wo = H // 2, W // 2
    else:
        Ho, Wo = H, W
    # TODO(synk): Wo % 8 != 0 (e.g. 7x7 ResNet stages) needs an unaligned-store path.
    assert Wo % 8 == 0, "flat halo layout assumes sublane-aligned output width"
    HWo = Ho * Wo

    Cin_p = _round_up(Cin, LANE)
    Cout_p = _round_up(out_channels, LANE)
    if not downsample:
        assert Cin_p == Cout_p

    # fold BN, pad channels to the 128-lane width, bf16 matmul data path
    s1, b1 = _bn_fold(*params["bn1"])
    s2, b2 = _bn_fold(*params["bn2"])

    def vec(v):
        return _pad_axis(v, 0, Cout_p).reshape(1, Cout_p).astype(jnp.float32)

    xp = _pad_axis(x, 3, Cin_p).astype(jnp.bfloat16)
    w1 = _pad_axis(_pad_axis(params["w1"], 2, Cin_p), 3, Cout_p)
    w1 = w1.reshape(9 * Cin_p, Cout_p).astype(jnp.bfloat16)
    w2 = _pad_axis(_pad_axis(params["w2"], 2, Cout_p), 3, Cout_p)
    w2 = w2.reshape(9 * Cout_p, Cout_p).astype(jnp.bfloat16)

    # masks zeroing the horizontally wrapped tap columns of the flat halo layout
    col = jnp.arange(HWo, dtype=jnp.int32) % Wo
    mlo = (col != 0).astype(jnp.bfloat16).reshape(HWo, 1)
    mhi = (col != Wo - 1).astype(jnp.bfloat16).reshape(HWo, 1)

    if downsample:
        # de-interleave the zero-padded image into 4 (row-parity x col-parity) planes
        # so the kernel's stride-2 conv uses only unit-stride slices (layout plumbing).
        xq = jnp.pad(xp, ((0, 0), (1, 1), (1, 1), (0, 0)))
        xq = xq.reshape(N, Ho + 1, 2, Wo + 1, 2, Cin_p)
        xq = jnp.transpose(xq, (0, 2, 4, 1, 3, 5))
        xq = xq.reshape(N, 4 * (Ho + 1), Wo + 1, Cin_p)
        x_arg = xq
        x_spec = pl.BlockSpec((1, 4 * (Ho + 1), Wo + 1, Cin_p), lambda n: (n, 0, 0, 0))
    else:
        x_arg = xp
        x_spec = pl.BlockSpec((1, H, W, Cin_p), lambda n: (n, 0, 0, 0))

    args = [x_arg, w1, vec(s1), vec(b1), w2, vec(s2), vec(b2), mlo, mhi]
    in_specs = [
        x_spec,
        pl.BlockSpec((9 * Cin_p, Cout_p), lambda n: (0, 0)),
        pl.BlockSpec((1, Cout_p), lambda n: (0, 0)),
        pl.BlockSpec((1, Cout_p), lambda n: (0, 0)),
        pl.BlockSpec((9 * Cout_p, Cout_p), lambda n: (0, 0)),
        pl.BlockSpec((1, Cout_p), lambda n: (0, 0)),
        pl.BlockSpec((1, Cout_p), lambda n: (0, 0)),
        pl.BlockSpec((HWo, 1), lambda n: (0, 0)),
        pl.BlockSpec((HWo, 1), lambda n: (0, 0)),
    ]
    if downsample:
        sds, bds = _bn_fold(*params["bnds"])
        wds = _pad_axis(_pad_axis(params["wds"], 0, Cin_p), 1, Cout_p).astype(jnp.bfloat16)
        args += [wds, vec(sds), vec(bds)]
        in_specs += [
            pl.BlockSpec((Cin_p, Cout_p), lambda n: (0, 0)),
            pl.BlockSpec((1, Cout_p), lambda n: (0, 0)),
            pl.BlockSpec((1, Cout_p), lambda n: (0, 0)),
        ]

    rows = 2 * FPAD + (Ho + 2) * Wo

    # honest per-step VMEM footprint: double-buffered x/out blocks + weights + scratch
    # + live in-kernel temporaries (patches, f32 accumulators / activations).
    x_bytes = (4 * (Ho + 1) * (Wo + 1) * Cin_p if downsample else H * W * Cin_p) * 2
    o_bytes = HWo * Cout_p * 2
    w_bytes = (9 * Cin_p + 9 * Cout_p + (Cin_p if downsample else 0)) * Cout_p * 2
    t_bytes = HWo * (3 * max(Cin_p, Cout_p) * 2 + 4 * Cout_p * 4)
    est = 2 * (x_bytes + o_bytes) + w_bytes + rows * Cout_p * 2 + t_bytes
    try:
        phys = pltpu.get_tpu_info().vmem_capacity_bytes               # 64 MiB on v7x, 128 on v5e/v6e
    except Exception:
        phys = 64 << 20
    vmem_limit = int(max(32 << 20, min(int(0.75 * phys), 2 * est)))

    kernel = _make_resblock_kernel(H, W, Ho, Wo, Cin_p, Cout_p, downsample)
    out = pl.pallas_call(
        kernel,
        out_shape=jax.ShapeDtypeStruct((N, Ho, Wo, Cout_p), jnp.bfloat16),
        grid=(N,),                              # one image / step: >= 2 steps, pipelined
        in_specs=in_specs,
        out_specs=pl.BlockSpec((1, Ho, Wo, Cout_p), lambda n: (n, 0, 0, 0)),
        scratch_shapes=[pltpu.VMEM((rows, Cout_p), jnp.bfloat16)],    # flat halo scratch
        compiler_params=pltpu.CompilerParams(
            dimension_semantics=("parallel",),
            vmem_limit_bytes=vmem_limit,
        ),
    )(*args)

    out = out[..., :out_channels].astype(jnp.float32)                 # drop channel pad
    return jnp.transpose(out, (0, 3, 1, 2))                           # NHWC -> NCHW


# ----------------------------------------------------------------------------------
# parameters / pure-JAX reference
# ----------------------------------------------------------------------------------
def init_resblock_params(key, in_channels, out_channels):
    ks = jax.random.split(key, 6)

    def bn_params(k, c):
        k1, k2, k3, k4 = jax.random.split(k, 4)
        gamma = jax.random.uniform(k1, (c,), jnp.float32, 0.5, 1.5)
        beta = 0.1 * jax.random.normal(k2, (c,), jnp.float32)
        mean = 0.1 * jax.random.normal(k3, (c,), jnp.float32)
        var = jax.random.uniform(k4, (c,), jnp.float32, 0.5, 1.5)
        return gamma, beta, mean, var

    p = {
        "w1": 0.1 * jax.random.normal(ks[0], (3, 3, in_channels, out_channels), jnp.float32),
        "bn1": bn_params(ks[1], out_channels),
        "w2": 0.1 * jax.random.normal(ks[2], (3, 3, out_channels, out_channels), jnp.float32),
        "bn2": bn_params(ks[3], out_channels),
    }
    if in_channels != out_channels:
        p["wds"] = 0.1 * jax.random.normal(ks[4], (in_channels, out_channels), jnp.float32)
        p["bnds"] = bn_params(ks[5], out_channels)
    return p


def ref_resblock(x_nchw, params, in_channels, out_channels):
    """Pure-JAX f32 reference (same semantics) for correctness checking."""
    downsample = in_channels != out_channels
    x = jnp.transpose(x_nchw, (0, 2, 3, 1)).astype(jnp.float32)

    def conv(inp, w, stride, pad):
        return jax.lax.conv_general_dilated(
            inp, w, (stride, stride), [(pad, pad), (pad, pad)],
            dimension_numbers=("NHWC", "HWIO", "NHWC"))

    def bn(y, p):
        s, b = _bn_fold(*p)
        return y * s + b

    s1 = 2 if downsample else 1
    out = jnp.maximum(bn(conv(x, params["w1"], s1, 1), params["bn1"]), 0.0)
    out = bn(conv(out, params["w2"], 1, 1), params["bn2"])
    if downsample:
        residual = bn(conv(x, params["wds"][None, None], 2, 0), params["bnds"])
    else:
        residual = x
    return jnp.transpose(jnp.maximum(out + residual, 0.0), (0, 3, 1, 2))


# ----------------------------------------------------------------------------------
if __name__ == "__main__":
    key = jax.random.PRNGKey(0)
    kx, kp1, kp2 = jax.random.split(key, 3)
    x = jax.random.normal(kx, (2, 4, 16, 16), jnp.float32)            # NCHW, like PyTorch

    fwd = jax.jit(resblock_forward, static_argnums=(2, 3))

    # Case 1: downsample branch (in_channels != out_channels, stride 2)
    p_ds = init_resblock_params(kp1, 4, 8)
    out_ds = jax.block_until_ready(fwd(x, p_ds, 4, 8))
    ref_ds = ref_resblock(x, p_ds, 4, 8)
    assert out_ds.shape == (2, 8, 8, 8), out_ds.shape
    # bf16 matmul inputs / bf16 output, f32 accumulation -> loose tolerance vs f32 ref
    assert jnp.allclose(out_ds, ref_ds, atol=4e-2, rtol=4e-2), \
        float(jnp.max(jnp.abs(out_ds - ref_ds)))

    # Case 2: identity branch (in_channels == out_channels, stride 1)
    p_id = init_resblock_params(kp2, 4, 4)
    out_id = jax.block_until_ready(fwd(x, p_id, 4, 4))
    ref_id = ref_resblock(x, p_id, 4, 4)
    assert out_id.shape == (2, 4, 16, 16), out_id.shape
    assert jnp.allclose(out_id, ref_id, atol=4e-2, rtol=4e-2), \
        float(jnp.max(jnp.abs(out_id - ref_id)))

    print("KERNEL_OK")
</pallas_src>

<mosaic_0001>
module attributes {stable_mosaic.version = 11 : i64} {
  func.func @kernel(%arg0: i32, %arg1: memref<1x36x9x128xbf16, #tpu.memory_space<vmem>>, %arg2: memref<1152x128xbf16, #tpu.memory_space<vmem>>, %arg3: memref<1x128xf32, #tpu.memory_space<vmem>>, %arg4: memref<1x128xf32, #tpu.memory_space<vmem>>, %arg5: memref<1152x128xbf16, #tpu.memory_space<vmem>>, %arg6: memref<1x128xf32, #tpu.memory_space<vmem>>, %arg7: memref<1x128xf32, #tpu.memory_space<vmem>>, %arg8: memref<64x1xbf16, #tpu.memory_space<vmem>>, %arg9: memref<64x1xbf16, #tpu.memory_space<vmem>>, %arg10: memref<128x128xbf16, #tpu.memory_space<vmem>>, %arg11: memref<1x128xf32, #tpu.memory_space<vmem>>, %arg12: memref<1x128xf32, #tpu.memory_space<vmem>>, %arg13: memref<1x8x8x128xbf16, #tpu.memory_space<vmem>>, %arg14: memref<96x128xbf16, #tpu.memory_space<vmem>>) attributes {dimension_semantics = [#tpu.dimension_semantics<parallel>], iteration_bounds = array<i64: 2>, scalar_prefetch = 0 : i64, scratch_operands = 1 : i64, tpu.core_type = #tpu.core_type<tc>, window_params = [{transform_indices = @transform_0, window_bounds = array<i64: 1, 36, 9, 128>}, {pipeline_mode = #tpu.pipeline_mode<synchronous>, transform_indices = @transform_1, window_bounds = array<i64: 1152, 128>}, {pipeline_mode = #tpu.pipeline_mode<synchronous>, transform_indices = @transform_2, window_bounds = array<i64: 1, 128>}, {pipeline_mode = #tpu.pipeline_mode<synchronous>, transform_indices = @transform_3, window_bounds = array<i64: 1, 128>}, {pipeline_mode = #tpu.pipeline_mode<synchronous>, transform_indices = @transform_4, window_bounds = array<i64: 1152, 128>}, {pipeline_mode = #tpu.pipeline_mode<synchronous>, transform_indices = @transform_5, window_bounds = array<i64: 1, 128>}, {pipeline_mode = #tpu.pipeline_mode<synchronous>, transform_indices = @transform_6, window_bounds = array<i64: 1, 128>}, {pipeline_mode = #tpu.pipeline_mode<synchronous>, transform_indices = @transform_7, window_bounds = array<i64: 64, 1>}, {pipeline_mode = #tpu.pipeline_mode<synchronous>, transform_indices = @transform_8, window_bounds = array<i64: 64, 1>}, {pipeline_mode = #tpu.pipeline_mode<synchronous>, transform_indices = @transform_9, window_bounds = array<i64: 128, 128>}, {pipeline_mode = #tpu.pipeline_mode<synchronous>, transform_indices = @transform_10, window_bounds = array<i64: 1, 128>}, {pipeline_mode = #tpu.pipeline_mode<synchronous>, transform_indices = @transform_11, window_bounds = array<i64: 1, 128>}, {transform_indices = @transform_12, window_bounds = array<i64: 1, 8, 8, 128>}]} {
    %c0 = arith.constant 0 : index
    %c0_0 = arith.constant 0 : index
    %0 = vector.load %arg8[%c0, %c0_0] : memref<64x1xbf16, #tpu.memory_space<vmem>>, vector<64x1xbf16>
    %c0_1 = arith.constant 0 : index
    %c0_2 = arith.constant 0 : index
    %1 = vector.load %arg9[%c0_1, %c0_2] : memref<64x1xbf16, #tpu.memory_space<vmem>>, vector<64x1xbf16>
    %cst = arith.constant 0.000000e+00 : bf16
    %2 = vector.broadcast %cst : bf16 to vector<16x128xbf16>
    %c0_3 = arith.constant 0 : index
    %c0_4 = arith.constant 0 : index
    %3 = vector.load %arg14[%c0_3, %c0_4] : memref<96x128xbf16, #tpu.memory_space<vmem>>, vector<16x128xbf16>
    tpu.vector_store %arg14[%c0_3, %c0_4], %2 {strides = array<i32>} : memref<96x128xbf16, #tpu.memory_space<vmem>>, vector<16x128xbf16>,
    %cst_5 = arith.constant 0.000000e+00 : bf16
    %4 = vector.broadcast %cst_5 : bf16 to vector<16x128xbf16>
    %c80 = arith.constant 80 : index
    %c0_6 = arith.constant 0 : index
    %5 = vector.load %arg14[%c80, %c0_6] : memref<96x128xbf16, #tpu.memory_space<vmem>>, vector<16x128xbf16>
    tpu.vector_store %arg14[%c80, %c0_6], %4 {strides = array<i32>} : memref<96x128xbf16, #tpu.memory_space<vmem>>, vector<16x128xbf16>,
    %c0_7 = arith.constant 0 : index
    %c0_8 = arith.constant 0 : index
    %c0_9 = arith.constant 0 : index
    %c0_10 = arith.constant 0 : index
    %6 = vector.load %arg1[%c0_7, %c0_8, %c0_9, %c0_10] : memref<1x36x9x128xbf16, #tpu.memory_space<vmem>>, vector<1x8x8x128xbf16>
    %7 = vector.shape_cast %6 : vector<1x8x8x128xbf16> to vector<8x8x128xbf16>
    %8 = vector.shape_cast %7 : vector<8x8x128xbf16> to vector<64x128xbf16>
    %c0_11 = arith.constant 0 : index
    %c9 = arith.constant 9 : index
    %c0_12 = arith.constant 0 : index
    %c0_13 = arith.constant 0 : index
    %9 = vector.load %arg1[%c0_11, %c9, %c0_12, %c0_13] : memref<1x36x9x128xbf16, #tpu.memory_space<vmem>>, vector<1x8x8x128xbf16>
    %10 = vector.shape_cast %9 : vector<1x8x8x128xbf16> to vector<8x8x128xbf16>
    %11 = vector.shape_cast %10 : vector<8x8x128xbf16> to vector<64x128xbf16>
    %c0_14 = arith.constant 0 : index
    %c0_15 = arith.constant 0 : index
    %c1 = arith.constant 1 : index
    %c0_16 = arith.constant 0 : index
    %12 = vector.load %arg1[%c0_14, %c0_15, %c1, %c0_16] : memref<1x36x9x128xbf16, #tpu.memory_space<vmem>>, vector<1x8x8x128xbf16>
    %13 = vector.shape_cast %12 : vector<1x8x8x128xbf16> to vector<8x8x128xbf16>
    %14 = vector.shape_cast %13 : vector<8x8x128xbf16> to vector<64x128xbf16>
    %15 = tpu.concatenate %8, %11, %14 in 1 : vector<64x128xbf16>, vector<64x128xbf16>, vector<64x128xbf16> -> vector<64x384xbf16>
    %c0_17 = arith.constant 0 : index
    %c0_18 = arith.constant 0 : index
    %16 = vector.load %arg2[%c0_17, %c0_18] : memref<1152x128xbf16, #tpu.memory_space<vmem>>, vector<384x128xbf16>
    %cst_19 = arith.constant dense<0.000000e+00> : vector<64x128xf32>
    %17 = tpu.matmul %15, %16, %cst_19 {dimension_numbers = #tpu.dot_dimension_numbers<[1], [0], [0], [1], [0, 0, 1, 1], [], []>} : vector<64x384xbf16>, vector<384x128xbf16>, vector<64x128xf32> -> vector<64x128xf32>
    %c0_20 = arith.constant 0 : index
    %c18 = arith.constant 18 : index
    %c0_21 = arith.constant 0 : index
    %c0_22 = arith.constant 0 : index
    %18 = vector.load %arg1[%c0_20, %c18, %c0_21, %c0_22] : memref<1x36x9x128xbf16, #tpu.memory_space<vmem>>, vector<1x8x8x128xbf16>
    %19 = vector.shape_cast %18 : vector<1x8x8x128xbf16> to vector<8x8x128xbf16>
    %20 = vector.shape_cast %19 : vector<8x8x128xbf16> to vector<64x128xbf16>
    %c0_23 = arith.constant 0 : index
    %c27 = arith.constant 27 : index
    %c0_24 = arith.constant 0 : index
    %c0_25 = arith.constant 0 : index
    %21 = vector.load %arg1[%c0_23, %c27, %c0_24, %c0_25] : memref<1x36x9x128xbf16, #tpu.memory_space<vmem>>, vector<1x8x8x128xbf16>
    %22 = vector.shape_cast %21 : vector<1x8x8x128xbf16> to vector<8x8x128xbf16>
    %23 = vector.shape_cast %22 : vector<8x8x128xbf16> to vector<64x128xbf16>
    %c0_26 = arith.constant 0 : index
    %c18_27 = arith.constant 18 : index
    %c1_28 = arith.constant 1 : index
    %c0_29 = arith.constant 0 : index
    %24 = vector.load %arg1[%c0_26, %c18_27, %c1_28, %c0_29] : memref<1x36x9x128xbf16, #tpu.memory_space<vmem>>, vector<1x8x8x128xbf16>
    %25 = vector.shape_cast %24 : vector<1x8x8x128xbf16> to vector<8x8x128xbf16>
    %26 = vector.shape_cast %25 : vector<8x8x128xbf16> to vector<64x128xbf16>
    %27 = tpu.concatenate %20, %23, %26 in 1 : vector<64x128xbf16>, vector<64x128xbf16>, vector<64x128xbf16> -> vector<64x384xbf16>
    %c384 = arith.constant 384 : index
    %c0_30 = arith.constant 0 : index
    %28 = vector.load %arg2[%c384, %c0_30] : memref<1152x128xbf16, #tpu.memory_space<vmem>>, vector<384x128xbf16>
    %cst_31 = arith.constant dense<0.000000e+00> : vector<64x128xf32>
    %29 = tpu.matmul %27, %28, %cst_31 {dimension_numbers = #tpu.dot_dimension_numbers<[1], [0], [0], [1], [0, 0, 1, 1], [], []>} : vector<64x384xbf16>, vector<384x128xbf16>, vector<64x128xf32> -> vector<64x128xf32>
    %30 = arith.addf %17, %29 : vector<64x128xf32>
    %c0_32 = arith.constant 0 : index
    %c1_33 = arith.constant 1 : index
    %c0_34 = arith.constant 0 : index
    %c0_35 = arith.constant 0 : index
    %31 = vector.load %arg1[%c0_32, %c1_33, %c0_34, %c0_35] : memref<1x36x9x128xbf16, #tpu.memory_space<vmem>>, vector<1x8x8x128xbf16>
    %32 = vector.shape_cast %31 : vector<1x8x8x128xbf16> to vector<8x8x128xbf16>
    %33 = vector.shape_cast %32 : vector<8x8x128xbf16> to vector<64x128xbf16>
    %c0_36 = arith.constant 0 : index
    %c10 = arith.constant 10 : index
    %c0_37 = arith.constant 0 : index
    %c0_38 = arith.constant 0 : index
    %34 = vector.load %arg1[%c0_36, %c10, %c0_37, %c0_38] : memref<1x36x9x128xbf16, #tpu.memory_space<vmem>>, vector<1x8x8x128xbf16>
    %35 = vector.shape_cast %34 : vector<1x8x8x128xbf16> to vector<8x8x128xbf16>
    %36 = vector.shape_cast %35 : vector<8x8x128xbf16> to vector<64x128xbf16>
    %c0_39 = arith.constant 0 : index
    %c1_40 = arith.constant 1 : index
    %c1_41 = arith.constant 1 : index
    %c0_42 = arith.constant 0 : index
    %37 = vector.load %arg1[%c0_39, %c1_40, %c1_41, %c0_42] : memref<1x36x9x128xbf16, #tpu.memory_space<vmem>>, vector<1x8x8x128xbf16>
    %38 = vector.shape_cast %37 : vector<1x8x8x128xbf16> to vector<8x8x128xbf16>
    %39 = vector.shape_cast %38 : vector<8x8x128xbf16> to vector<64x128xbf16>
    %40 = tpu.concatenate %33, %36, %39 in 1 : vector<64x128xbf16>, vector<64x128xbf16>, vector<64x128xbf16> -> vector<64x384xbf16>
    %c768 = arith.constant 768 : index
    %c0_43 = arith.constant 0 : index
    %41 = vector.load %arg2[%c768, %c0_43] : memref<1152x128xbf16, #tpu.memory_space<vmem>>, vector<384x128xbf16>
    %cst_44 = arith.constant dense<0.000000e+00> : vector<64x128xf32>
    %42 = tpu.matmul %40, %41, %cst_44 {dimension_numbers = #tpu.dot_dimension_numbers<[1], [0], [0], [1], [0, 0, 1, 1], [], []>} : vector<64x384xbf16>, vector<384x128xbf16>, vector<64x128xf32> -> vector<64x128xf32>
    %43 = arith.addf %30, %42 : vector<64x128xf32>
    %c0_45 = arith.constant 0 : index
    %c27_46 = arith.constant 27 : index
    %c0_47 = arith.constant 0 : index
    %c0_48 = arith.constant 0 : index
    %44 = vector.load %arg1[%c0_45, %c27_46, %c0_47, %c0_48] : memref<1x36x9x128xbf16, #tpu.memory_space<vmem>>, vector<1x8x8x128xbf16>
    %45 = vector.shape_cast %44 : vector<1x8x8x128xbf16> to vector<8x8x128xbf16>
    %46 = vector.shape_cast %45 : vector<8x8x128xbf16> to vector<64x128xbf16>
    %c0_49 = arith.constant 0 : index
    %c0_50 = arith.constant 0 : index
    %47 = vector.load %arg10[%c0_49, %c0_50] : memref<128x128xbf16, #tpu.memory_space<vmem>>, vector<128x128xbf16>
    %cst_51 = arith.constant dense<0.000000e+00> : vector<64x128xf32>
    %48 = tpu.matmul %46, %47, %cst_51 {dimension_numbers = #tpu.dot_dimension_numbers<[1], [0], [0], [1], [0, 0, 1, 1], [], []>} : vector<64x128xbf16>, vector<128x128xbf16>, vector<64x128xf32> -> vector<64x128xf32>
    %c0_52 = arith.constant 0 : index
    %c0_53 = arith.constant 0 : index
    %49 = vector.load %arg11[%c0_52, %c0_53] : memref<1x128xf32, #tpu.memory_space<vmem>>, vector<1x128xf32>
    %50 = vector.broadcast %49 : vector<1x128xf32> to vector<64x128xf32>
    %51 = arith.mulf %48, %50 : vector<64x128xf32>
    %c0_54 = arith.constant 0 : index
    %c0_55 = arith.constant 0 : index
    %52 = vector.load %arg12[%c0_54, %c0_55] : memref<1x128xf32, #tpu.memory_space<vmem>>, vector<1x128xf32>
    %53 = vector.broadcast %52 : vector<1x128xf32> to vector<64x128xf32>
    %54 = arith.addf %51, %53 : vector<64x128xf32>
    %c0_56 = arith.constant 0 : index
    %c0_57 = arith.constant 0 : index
    %55 = vector.load %arg3[%c0_56, %c0_57] : memref<1x128xf32, #tpu.memory_space<vmem>>, vector<1x128xf32>
    %56 = vector.broadcast %55 : vector<1x128xf32> to vector<64x128xf32>
    %57 = arith.mulf %43, %56 : vector<64x128xf32>
    %c0_58 = arith.constant 0 : index
    %c0_59 = arith.constant 0 : index
    %58 = vector.load %arg4[%c0_58, %c0_59] : memref<1x128xf32, #tpu.memory_space<vmem>>, vector<1x128xf32>
    %59 = vector.broadcast %58 : vector<1x128xf32> to vector<64x128xf32>
    %60 = arith.addf %57, %59 : vector<64x128xf32>
    %cst_60 = arith.constant 0.000000e+00 : f32
    %61 = vector.broadcast %cst_60 : f32 to vector<64x128xf32>
    %62 = arith.maximumf %60, %61 : vector<64x128xf32>
    %63 = arith.truncf %62 : vector<64x128xf32> to vector<64x128xbf16>
    %c16 = arith.constant 16 : index
    %c0_61 = arith.constant 0 : index
    %64 = vector.load %arg14[%c16, %c0_61] : memref<96x128xbf16, #tpu.memory_space<vmem>>, vector<64x128xbf16>
    tpu.vector_store %arg14[%c16, %c0_61], %63 {strides = array<i32>} : memref<96x128xbf16, #tpu.memory_space<vmem>>, vector<64x128xbf16>,
    %c7 = arith.constant 7 : index
    %c0_62 = arith.constant 0 : index
    %65 = vector.load %arg14[%c7, %c0_62] : memref<96x128xbf16, #tpu.memory_space<vmem>>, vector<64x128xbf16>
    %66 = vector.broadcast %0 : vector<64x1xbf16> to vector<64x128xbf16>
    %67 = arith.mulf %65, %66 : vector<64x128xbf16>
    %c8 = arith.constant 8 : index
    %c0_63 = arith.constant 0 : index
    %68 = vector.load %arg14[%c8, %c0_63] : memref<96x128xbf16, #tpu.memory_space<vmem>>, vector<64x128xbf16>
    %c9_64 = arith.constant 9 : index
    %c0_65 = arith.constant 0 : index
    %69 = vector.load %arg14[%c9_64, %c0_65] : memref<96x128xbf16, #tpu.memory_space<vmem>>, vector<64x128xbf16>
    %70 = vector.broadcast %1 : vector<64x1xbf16> to vector<64x128xbf16>
    %71 = arith.mulf %69, %70 : vector<64x128xbf16>
    %72 = tpu.concatenate %67, %68, %71 in 1 : vector<64x128xbf16>, vector<64x128xbf16>, vector<64x128xbf16> -> vector<64x384xbf16>
    %c0_66 = arith.constant 0 : index
    %c0_67 = arith.constant 0 : index
    %73 = vector.load %arg5[%c0_66, %c0_67] : memref<1152x128xbf16, #tpu.memory_space<vmem>>, vector<384x128xbf16>
    %cst_68 = arith.constant dense<0.000000e+00> : vector<64x128xf32>
    %74 = tpu.matmul %72, %73, %cst_68 {dimension_numbers = #tpu.dot_dimension_numbers<[1], [0], [0], [1], [0, 0, 1, 1], [], []>} : vector<64x384xbf16>, vector<384x128xbf16>, vector<64x128xf32> -> vector<64x128xf32>
    %c15 = arith.constant 15 : index
    %c0_69 = arith.constant 0 : index
    %75 = vector.load %arg14[%c15, %c0_69] : memref<96x128xbf16, #tpu.memory_space<vmem>>, vector<64x128xbf16>
    %76 = vector.broadcast %0 : vector<64x1xbf16> to vector<64x128xbf16>
    %77 = arith.mulf %75, %76 : vector<64x128xbf16>
    %c16_70 = arith.constant 16 : index
    %c0_71 = arith.constant 0 : index
    %78 = vector.load %arg14[%c16_70, %c0_71] : memref<96x128xbf16, #tpu.memory_space<vmem>>, vector<64x128xbf16>
    %c17 = arith.constant 17 : index
    %c0_72 = arith.constant 0 : index
    %79 = vector.load %arg14[%c17, %c0_72] : memref<96x128xbf16, #tpu.memory_space<vmem>>, vector<64x128xbf16>
    %80 = vector.broadcast %1 : vector<64x1xbf16> to vector<64x128xbf16>
    %81 = arith.mulf %79, %80 : vector<64x128xbf16>
    %82 = tpu.concatenate %77, %78, %81 in 1 : vector<64x128xbf16>, vector<64x128xbf16>, vector<64x128xbf16> -> vector<64x384xbf16>
    %c384_73 = arith.constant 384 : index
    %c0_74 = arith.constant 0 : index
    %83 = vector.load %arg5[%c384_73, %c0_74] : memref<1152x128xbf16, #tpu.memory_space<vmem>>, vector<384x128xbf16>
    %cst_75 = arith.constant dense<0.000000e+00> : vector<64x128xf32>
    %84 = tpu.matmul %82, %83, %cst_75 {dimension_numbers = #tpu.dot_dimension_numbers<[1], [0], [0], [1], [0, 0, 1, 1], [], []>} : vector<64x384xbf16>, vector<384x128xbf16>, vector<64x128xf32> -> vector<64x128xf32>
    %85 = arith.addf %74, %84 : vector<64x128xf32>
    %c23 = arith.constant 23 : index
    %c0_76 = arith.constant 0 : index
    %86 = vector.load %arg14[%c23, %c0_76] : memref<96x128xbf16, #tpu.memory_space<vmem>>, vector<64x128xbf16>
    %87 = vector.broadcast %0 : vector<64x1xbf16> to vector<64x128xbf16>
    %88 = arith.mulf %86, %87 : vector<64x128xbf16>
    %c24 = arith.constant 24 : index
    %c0_77 = arith.constant 0 : index
    %89 = vector.load %arg14[%c24, %c0_77] : memref<96x128xbf16, #tpu.memory_space<vmem>>, vector<64x128xbf16>
    %c25 = arith.constant 25 : index
    %c0_78 = arith.constant 0 : index
    %90 = vector.load %arg14[%c25, %c0_78] : memref<96x128xbf16, #tpu.memory_space<vmem>>, vector<64x128xbf16>
    %91 = vector.broadcast %1 : vector<64x1xbf16> to vector<64x128xbf16>
    %92 = arith.mulf %90, %91 : vector<64x128xbf16>
    %93 = tpu.concatenate %88, %89, %92 in 1 : vector<64x128xbf16>, vector<64x128xbf16>, vector<64x128xbf16> -> vector<64x384xbf16>
    %c768_79 = arith.constant 768 : index
    %c0_80 = arith.constant 0 : index
    %94 = vector.load %arg5[%c768_79, %c0_80] : memref<1152x128xbf16, #tpu.memory_space<vmem>>, vector<384x128xbf16>
    %cst_81 = arith.constant dense<0.000000e+00> : vector<64x128xf32>
    %95 = tpu.matmul %93, %94, %cst_81 {dimension_numbers = #tpu.dot_dimension_numbers<[1], [0], [0], [1], [0, 0, 1, 1], [], []>} : vector<64x384xbf16>, vector<384x128xbf16>, vector<64x128xf32> -> vector<64x128xf32>
    %96 = arith.addf %85, %95 : vector<64x128xf32>
    %c0_82 = arith.constant 0 : index
    %c0_83 = arith.constant 0 : index
    %97 = vector.load %arg6[%c0_82, %c0_83] : memref<1x128xf32, #tpu.memory_space<vmem>>, vector<1x128xf32>
    %98 = vector.broadcast %97 : vector<1x128xf32> to vector<64x128xf32>
    %99 = arith.mulf %96, %98 : vector<64x128xf32>
    %c0_84 = arith.constant 0 : index
    %c0_85 = arith.constant 0 : index
    %100 = vector.load %arg7[%c0_84, %c0_85] : memref<1x128xf32, #tpu.memory_space<vmem>>, vector<1x128xf32>
    %101 = vector.broadcast %100 : vector<1x128xf32> to vector<64x128xf32>
    %102 = arith.addf %99, %101 : vector<64x128xf32>
    %103 = arith.addf %102, %54 : vector<64x128xf32>
    %cst_86 = arith.constant 0.000000e+00 : f32
    %104 = vector.broadcast %cst_86 : f32 to vector<64x128xf32>
    %105 = arith.maximumf %103, %104 : vector<64x128xf32>
    %106 = vector.shape_cast %105 : vector<64x128xf32> to vector<8x8x128xf32>
    %107 = arith.truncf %106 : vector<8x8x128xf32> to vector<8x8x128xbf16>
    %c0_87 = arith.constant 0 : index
    %c0_88 = arith.constant 0 : index
    %c0_89 = arith.constant 0 : index
    %c0_90 = arith.constant 0 : index
    %108 = vector.load %arg13[%c0_87, %c0_88, %c0_89, %c0_90] : memref<1x8x8x128xbf16, #tpu.memory_space<vmem>>, vector<1x8x8x128xbf16>
    %109 = vector.shape_cast %108 : vector<1x8x8x128xbf16> to vector<8x8x128xbf16>
    %110 = vector.shape_cast %107 : vector<8x8x128xbf16> to vector<1x8x8x128xbf16>
    tpu.vector_store %arg13[%c0_87, %c0_88, %c0_89, %c0_90], %110 {strides = array<i32>} : memref<1x8x8x128xbf16, #tpu.memory_space<vmem>>, vector<1x8x8x128xbf16>,
    return
  }
  func.func @transform_0(%arg0: i32) -> (i32, i32, i32, i32) {
    %c0_i32 = arith.constant 0 : i32
    %c0_i32_0 = arith.constant 0 : i32
    %c0_i32_1 = arith.constant 0 : i32
    %c0_i32_2 = arith.constant 0 : i32
    return %arg0, %c0_i32, %c0_i32_0, %c0_i32_1 : i32, i32, i32, i32
  }
  func.func @transform_1(%arg0: i32) -> (i32, i32) {
    %c0_i32 = arith.constant 0 : i32
    %c0_i32_0 = arith.constant 0 : i32
    %c0_i32_1 = arith.constant 0 : i32
    return %c0_i32, %c0_i32_0 : i32, i32
  }
  func.func @transform_2(%arg0: i32) -> (i32, i32) {
    %c0_i32 = arith.constant 0 : i32
    %c0_i32_0 = arith.constant 0 : i32
    %c0_i32_1 = arith.constant 0 : i32
    return %c0_i32, %c0_i32_0 : i32, i32
  }
  func.func @transform_3(%arg0: i32) -> (i32, i32) {
    %c0_i32 = arith.constant 0 : i32
    %c0_i32_0 = arith.constant 0 : i32
    %c0_i32_1 = arith.constant 0 : i32
    return %c0_i32, %c0_i32_0 : i32, i32
  }
  func.func @transform_4(%arg0: i32) -> (i32, i32) {
    %c0_i32 = arith.constant 0 : i32
    %c0_i32_0 = arith.constant 0 : i32
    %c0_i32_1 = arith.constant 0 : i32
    return %c0_i32, %c0_i32_0 : i32, i32
  }
  func.func @transform_5(%arg0: i32) -> (i32, i32) {
    %c0_i32 = arith.constant 0 : i32
    %c0_i32_0 = arith.constant 0 : i32
    %c0_i32_1 = arith.constant 0 : i32
    return %c0_i32, %c0_i32_0 : i32, i32
  }
  func.func @transform_6(%arg0: i32) -> (i32, i32) {
    %c0_i32 = arith.constant 0 : i32
    %c0_i32_0 = arith.constant 0 : i32
    %c0_i32_1 = arith.constant 0 : i32
    return %c0_i32, %c0_i32_0 : i32, i32
  }
  func.func @transform_7(%arg0: i32) -> (i32, i32) {
    %c0_i32 = arith.constant 0 : i32
    %c0_i32_0 = arith.constant 0 : i32
    %c0_i32_1 = arith.constant 0 : i32
    return %c0_i32, %c0_i32_0 : i32, i32
  }
  func.func @transform_8(%arg0: i32) -> (i32, i32) {
    %c0_i32 = arith.constant 0 : i32
    %c0_i32_0 = arith.constant 0 : i32
    %c0_i32_1 = arith.constant 0 : i32
    return %c0_i32, %c0_i32_0 : i32, i32
  }
  func.func @transform_9(%arg0: i32) -> (i32, i32) {
    %c0_i32 = arith.constant 0 : i32
    %c0_i32_0 = arith.constant 0 : i32
    %c0_i32_1 = arith.constant 0 : i32
    return %c0_i32, %c0_i32_0 : i32, i32
  }
  func.func @transform_10(%arg0: i32) -> (i32, i32) {
    %c0_i32 = arith.constant 0 : i32
    %c0_i32_0 = arith.constant 0 : i32
    %c0_i32_1 = arith.constant 0 : i32
    return %c0_i32, %c0_i32_0 : i32, i32
  }
  func.func @transform_11(%arg0: i32) -> (i32, i32) {
    %c0_i32 = arith.constant 0 : i32
    %c0_i32_0 = arith.constant 0 : i32
    %c0_i32_1 = arith.constant 0 : i32
    return %c0_i32, %c0_i32_0 : i32, i32
  }
  func.func @transform_12(%arg0: i32) -> (i32, i32, i32, i32) {
    %c0_i32 = arith.constant 0 : i32
    %c0_i32_0 = arith.constant 0 : i32
    %c0_i32_1 = arith.constant 0 : i32
    %c0_i32_2 = arith.constant 0 : i32
    return %arg0, %c0_i32, %c0_i32_0, %c0_i32_1 : i32, i32, i32, i32
  }
}

</mosaic_0001>

<llo_original>
// kernel: resblock_forward.1
$region0: #{resblock_forward.1}
  #allocation0 [shape = 'u32[]', space=smem, size = 0x4, offset = 0x4, fixed_abs, tag = 'smem constant byte address 0x4 - core index']
  #allocation1 [shape = 'u32[144,128]{1,0:T(1,128)}', space=vmem, size = 0x12000, scoped, tag = 'internal scratch']
  #allocation2 [shape = 'bf16[96,128]{1,0:T(16,128)(2,1)}', space=vmem, size = 0x6000, scoped, tag = 'scratch operand']
  %s0 = inlined_call_operand.vmem [shape: bf16[2,36,9,128], index: 0, kind: input, shape index: {}]
  %s1 = inlined_call_operand.vmem [shape: bf16[1152,128], index: 1, kind: input, shape index: {}]
  %s2 = inlined_call_operand.vmem [shape: f32[1,128], index: 2, kind: input, shape index: {}]
  %s3 = inlined_call_operand.vmem [shape: f32[1,128], index: 3, kind: input, shape index: {}]
  %s4 = inlined_call_operand.vmem [shape: bf16[1152,128], index: 4, kind: input, shape index: {}]
  %s5 = inlined_call_operand.vmem [shape: f32[1,128], index: 5, kind: input, shape index: {}]
  %s6 = inlined_call_operand.vmem [shape: f32[1,128], index: 6, kind: input, shape index: {}]
  %s7 = inlined_call_operand.vmem [shape: bf16[64,1], index: 7, kind: input, shape index: {}]
  %s8 = inlined_call_operand.vmem [shape: bf16[64,1], index: 8, kind: input, shape index: {}]
  %s9 = inlined_call_operand.vmem [shape: bf16[128,128], index: 9, kind: input, shape index: {}]
  %s10 = inlined_call_operand.vmem [shape: f32[1,128], index: 10, kind: input, shape index: {}]
  %s11 = inlined_call_operand.vmem [shape: f32[1,128], index: 11, kind: input, shape index: {}]
  %s12 = inlined_call_operand.vmem [shape: bf16[2,8,8,128], index: 12, kind: output, shape index: {}]
  %s13 = sld [smem:[#allocation0]]
  $region81: #{resblock_forward.1} parent=0
    _
  %s15 = ssub.s32 1, %s13
  %s16 = scalar_select 0, %s15, %s13
  loop: start=0, step=1, limit=4
  $region2: #{resblock_forward.1} parent=0 // loop_pre_header
    _
  $region3: #{resblock_forward.1} parent=0 // loop_header
    %s18 = sphi 0, %s22
    %p19 = scmp.ge.s32.totalorder %s18, 4
    %s28 = sphi 0, %s30
    %s31 = sphi 0, %s28
    %s32 = sphi 0, %s31
    %s48 = sphi 0, %s32
    %s52 = sphi 0, %s52
    %s54 = sphi 0, %s52
    %s55 = sphi 0, %s54
    %s69 = sphi 0, %s55
    %s73 = sphi 0, %s73
    %s75 = sphi 0, %s73
    %s76 = sphi 0, %s75
    %s90 = sphi 0, %s76
    %s94 = sphi 0, %s94
    %s96 = sphi 0, %s94
    %s97 = sphi 0, %s96
    %s111 = sphi 0, %s97
    %s115 = sphi 0, %s115
    %s117 = sphi 0, %s115
    %s118 = sphi 0, %s117
    %s132 = sphi 0, %s118
    %s136 = sphi 0, %s136
    %s138 = sphi 0, %s136
    %s139 = sphi 0, %s138
    %s153 = sphi 0, %s139
    %s157 = sphi 0, %s157
    %s159 = sphi 0, %s157
    %s160 = sphi 0, %s159
    %s174 = sphi 0, %s160
    %s178 = sphi 0, %s178
    %s180 = sphi 0, %s178
    %s181 = sphi 0, %s180
    %s195 = sphi 0, %s181
    %s199 = sphi 0, %s199
    %s201 = sphi 0, %s199
    %s202 = sphi 0, %s201
    %s216 = sphi 0, %s202
    %s220 = sphi 0, %s220
    %s222 = sphi 0, %s220
    %s223 = sphi 0, %s222
    %s237 = sphi 0, %s223
    %s241 = sphi 0, %s241
    %s243 = sphi 0, %s241
    %s244 = sphi 0, %s243
    %s258 = sphi 0, %s244
    %s262 = sphi 0, %s262
    %s264 = sphi 0, %s262
    %s265 = sphi 0, %s264
    %s279 = sphi 0, %s265
    %s285 = sphi 0, %s287
    %s288 = sphi 0, %s285
    %s289 = sphi 0, %s288
    %s305 = sphi 0, %s289
  $region4: #{resblock_forward.1} parent=0 // loop_header_branch
    %21 = sbr.rel (%p19) target = $region8
  $region5: #{resblock_forward.1} parent=0 // loop_body
    %s23 = ssub.s32 %s18, 1
    %s24 = ssub.s32 %s18, 2
    %s25 = sadd.s32 %s18, 1
    %s26 = ssub.s32 %s18, %s25
    %p27 = scmp.eq.s32.totalorder %s26, 0
    %s29 = sadd.s32 %s28, 1
    %s30 = scalar_select %p27, %s28, %s29
    %p33 = pneg %p27
    %p34 = scmp.eq.s32.totalorder %s18, 1
    %p35 = por %p33, %p34
    %p36 = scmp.ne.s32.totalorder %s28, %s31
    %p37 = scmp.eq.s32.totalorder %s18, 0
    %p38 = por %p36, %p37
    %p39 = scmp.ne.s32.totalorder %s28, %s31
    %p40 = scmp.eq.s32.totalorder %s23, 1
    %p41 = por %p39, %p40
    %p42 = scmp.ne.s32.totalorder %s31, %s32
    %p43 = scmp.eq.s32.totalorder %s23, 0
    %p44 = por %p42, %p43
    %p45 = scmp.ne.s32.totalorder %s31, %s32
    %p46 = scmp.eq.s32.totalorder %s24, 1
    %p47 = por %p45, %p46
    %p49 = scmp.ne.s32.totalorder %s32, %s48
    %p50 = scmp.eq.s32.totalorder %s24, 0
    %p51 = por %p49, %p50
    %s53 = sadd.s32 %s52, 1
    %p56 = scmp.eq.s32.totalorder %s18, 1
    %p57 = scmp.ne.s32.totalorder %s52, %s54
    %p58 = scmp.eq.s32.totalorder %s18, 0
    %p59 = por %p57, %p58
    %p60 = scmp.ne.s32.totalorder %s52, %s54
    %p61 = scmp.eq.s32.totalorder %s23, 1
    %p62 = por %p60, %p61
    %p63 = scmp.ne.s32.totalorder %s54, %s55
    %p64 = scmp.eq.s32.totalorder %s23, 0
    %p65 = por %p63, %p64
    %p66 = scmp.ne.s32.totalorder %s54, %s55
    %p67 = scmp.eq.s32.totalorder %s24, 1
    %p68 = por %p66, %p67
    %p70 = scmp.ne.s32.totalorder %s55, %s69
    %p71 = scmp.eq.s32.totalorder %s24, 0
    %p72 = por %p70, %p71
    %s74 = sadd.s32 %s73, 1
    %p77 = scmp.eq.s32.totalorder %s18, 1
    %p78 = scmp.ne.s32.totalorder %s73, %s75
    %p79 = scmp.eq.s32.totalorder %s18, 0
    %p80 = por %p78, %p79
    %p81 = scmp.ne.s32.totalorder %s73, %s75
    %p82 = scmp.eq.s32.totalorder %s23, 1
    %p83 = por %p81, %p82
    %p84 = scmp.ne.s32.totalorder %s75, %s76
    %p85 = scmp.eq.s32.totalorder %s23, 0
    %p86 = por %p84, %p85
    %p87 = scmp.ne.s32.totalorder %s75, %s76
    %p88 = scmp.eq.s32.totalorder %s24, 1
    %p89 = por %p87, %p88
    %p91 = scmp.ne.s32.totalorder %s76, %s90
    %p92 = scmp.eq.s32.totalorder %s24, 0
    %p93 = por %p91, %p92
    %s95 = sadd.s32 %s94, 1
    %p98 = scmp.eq.s32.totalorder %s18, 1
    %p99 = scmp.ne.s32.totalorder %s94, %s96
    %p100 = scmp.eq.s32.totalorder %s18, 0
    %p101 = por %p99, %p100
    %p102 = scmp.ne.s32.totalorder %s94, %s96
    %p103 = scmp.eq.s32.totalorder %s23, 1
    %p104 = por %p102, %p103
    %p105 = scmp.ne.s32.totalorder %s96, %s97
    %p106 = scmp.eq.s32.totalorder %s23, 0
    %p107 = por %p105, %p106
    %p108 = scmp.ne.s32.totalorder %s96, %s97
    %p109 = scmp.eq.s32.totalorder %s24, 1
    %p110 = por %p108, %p109
    %p112 = scmp.ne.s32.totalorder %s97, %s111
    %p113 = scmp.eq.s32.totalorder %s24, 0
    %p114 = por %p112, %p113
    %s116 = sadd.s32 %s115, 1
    %p119 = scmp.eq.s32.totalorder %s18, 1
    %p120 = scmp.ne.s32.totalorder %s115, %s117
    %p121 = scmp.eq.s32.totalorder %s18, 0
    %p122 = por %p120, %p121
    %p123 = scmp.ne.s32.totalorder %s115, %s117
    %p124 = scmp.eq.s32.totalorder %s23, 1
    %p125 = por %p123, %p124
    %p126 = scmp.ne.s32.totalorder %s117, %s118
    %p127 = scmp.eq.s32.totalorder %s23, 0
    %p128 = por %p126, %p127
    %p129 = scmp.ne.s32.totalorder %s117, %s118
    %p130 = scmp.eq.s32.totalorder %s24, 1
    %p131 = por %p129, %p130
    %p133 = scmp.ne.s32.totalorder %s118, %s132
    %p134 = scmp.eq.s32.totalorder %s24, 0
    %p135 = por %p133, %p134
    %s137 = sadd.s32 %s136, 1
    %p140 = scmp.eq.s32.totalorder %s18, 1
    %p141 = scmp.ne.s32.totalorder %s136, %s138
    %p142 = scmp.eq.s32.totalorder %s18, 0
    %p143 = por %p141, %p142
    %p144 = scmp.ne.s32.totalorder %s136, %s138
    %p145 = scmp.eq.s32.totalorder %s23, 1
    %p146 = por %p144, %p145
    %p147 = scmp.ne.s32.totalorder %s138, %s139
    %p148 = scmp.eq.s32.totalorder %s23, 0
    %p149 = por %p147, %p148
    %p150 = scmp.ne.s32.totalorder %s138, %s139
    %p151 = scmp.eq.s32.totalorder %s24, 1
    %p152 = por %p150, %p151
    %p154 = scmp.ne.s32.totalorder %s139, %s153
    %p155 = scmp.eq.s32.totalorder %s24, 0
    %p156 = por %p154, %p155
    %s158 = sadd.s32 %s157, 1
    %p161 = scmp.eq.s32.totalorder %s18, 1
    %p162 = scmp.ne.s32.totalorder %s157, %s159
    %p163 = scmp.eq.s32.totalorder %s18, 0
    %p164 = por %p162, %p163
    %p165 = scmp.ne.s32.totalorder %s157, %s159
    %p166 = scmp.eq.s32.totalorder %s23, 1
    %p167 = por %p165, %p166
    %p168 = scmp.ne.s32.totalorder %s159, %s160
    %p169 = scmp.eq.s32.totalorder %s23, 0
    %p170 = por %p168, %p169
    %p171 = scmp.ne.s32.totalorder %s159, %s160
    %p172 = scmp.eq.s32.totalorder %s24, 1
    %p173 = por %p171, %p172
    %p175 = scmp.ne.s32.totalorder %s160, %s174
    %p176 = scmp.eq.s32.totalorder %s24, 0
    %p177 = por %p175, %p176
    %s179 = sadd.s32 %s178, 1
    %p182 = scmp.eq.s32.totalorder %s18, 1
    %p183 = scmp.ne.s32.totalorder %s178, %s180
    %p184 = scmp.eq.s32.totalorder %s18, 0
    %p185 = por %p183, %p184
    %p186 = scmp.ne.s32.totalorder %s178, %s180
    %p187 = scmp.eq.s32.totalorder %s23, 1
    %p188 = por %p186, %p187
    %p189 = scmp.ne.s32.totalorder %s180, %s181
    %p190 = scmp.eq.s32.totalorder %s23, 0
    %p191 = por %p189, %p190
    %p192 = scmp.ne.s32.totalorder %s180, %s181
    %p193 = scmp.eq.s32.totalorder %s24, 1
    %p194 = por %p192, %p193
    %p196 = scmp.ne.s32.totalorder %s181, %s195
    %p197 = scmp.eq.s32.totalorder %s24, 0
    %p198 = por %p196, %p197
    %s200 = sadd.s32 %s199, 1
    %p203 = scmp.eq.s32.totalorder %s18, 1
    %p204 = scmp.ne.s32.totalorder %s199, %s201
    %p205 = scmp.eq.s32.totalorder %s18, 0
    %p206 = por %p204, %p205
    %p207 = scmp.ne.s32.totalorder %s199, %s201
    %p208 = scmp.eq.s32.totalorder %s23, 1
    %p209 = por %p207, %p208
    %p210 = scmp.ne.s32.totalorder %s201, %s202
    %p211 = scmp.eq.s32.totalorder %s23, 0
    %p212 = por %p210, %p211
    %p213 = scmp.ne.s32.totalorder %s201, %s202
    %p214 = scmp.eq.s32.totalorder %s24, 1
    %p215 = por %p213, %p214
    %p217 = scmp.ne.s32.totalorder %s202, %s216
    %p218 = scmp.eq.s32.totalorder %s24, 0
    %p219 = por %p217, %p218
    %s221 = sadd.s32 %s220, 1
    %p224 = scmp.eq.s32.totalorder %s18, 1
    %p225 = scmp.ne.s32.totalorder %s220, %s222
    %p226 = scmp.eq.s32.totalorder %s18, 0
    %p227 = por %p225, %p226
    %p228 = scmp.ne.s32.totalorder %s220, %s222
    %p229 = scmp.eq.s32.totalorder %s23, 1
    %p230 = por %p228, %p229
    %p231 = scmp.ne.s32.totalorder %s222, %s223
    %p232 = scmp.eq.s32.totalorder %s23, 0
    %p233 = por %p231, %p232
    %p234 = scmp.ne.s32.totalorder %s222, %s223
    %p235 = scmp.eq.s32.totalorder %s24, 1
    %p236 = por %p234, %p235
    %p238 = scmp.ne.s32.totalorder %s223, %s237
    %p239 = scmp.eq.s32.totalorder %s24, 0
    %p240 = por %p238, %p239
    %s242 = sadd.s32 %s241, 1
    %p245 = scmp.eq.s32.totalorder %s18, 1
    %p246 = scmp.ne.s32.totalorder %s241, %s243
    %p247 = scmp.eq.s32.totalorder %s18, 0
    %p248 = por %p246, %p247
    %p249 = scmp.ne.s32.totalorder %s241, %s243
    %p250 = scmp.eq.s32.totalorder %s23, 1
    %p251 = por %p249, %p250
    %p252 = scmp.ne.s32.totalorder %s243, %s244
    %p253 = scmp.eq.s32.totalorder %s23, 0
    %p254 = por %p252, %p253
    %p255 = scmp.ne.s32.totalorder %s243, %s244
    %p256 = scmp.eq.s32.totalorder %s24, 1
    %p257 = por %p255, %p256
    %p259 = scmp.ne.s32.totalorder %s244, %s258
    %p260 = scmp.eq.s32.totalorder %s24, 0
    %p261 = por %p259, %p260
    %s263 = sadd.s32 %s262, 1
    %p266 = scmp.eq.s32.totalorder %s18, 1
    %p267 = scmp.ne.s32.totalorder %s262, %s264
    %p268 = scmp.eq.s32.totalorder %s18, 0
    %p269 = por %p267, %p268
    %p270 = scmp.ne.s32.totalorder %s262, %s264
    %p271 = scmp.eq.s32.totalorder %s23, 1
    %p272 = por %p270, %p271
    %p273 = scmp.ne.s32.totalorder %s264, %s265
    %p274 = scmp.eq.s32.totalorder %s23, 0
    %p275 = por %p273, %p274
    %p276 = scmp.ne.s32.totalorder %s264, %s265
    %p277 = scmp.eq.s32.totalorder %s24, 1
    %p278 = por %p276, %p277
    %p280 = scmp.ne.s32.totalorder %s265, %s279
    %p281 = scmp.eq.s32.totalorder %s24, 0
    %p282 = por %p280, %p281
    %s283 = ssub.s32 %s18, %s25
    %p284 = scmp.eq.s32.totalorder %s283, 0
    %s286 = sadd.s32 %s285, 1
    %s287 = scalar_select %p284, %s285, %s286
    %p290 = pneg %p284
    %p291 = scmp.eq.s32.totalorder %s18, 1
    %p292 = por %p290, %p291
    %p293 = scmp.ne.s32.totalorder %s285, %s288
    %p294 = scmp.eq.s32.totalorder %s18, 0
    %p295 = por %p293, %p294
    %p296 = scmp.ne.s32.totalorder %s285, %s288
    %p297 = scmp.eq.s32.totalorder %s23, 1
    %p298 = por %p296, %p297
    %p299 = scmp.ne.s32.totalorder %s288, %s289
    %p300 = scmp.eq.s32.totalorder %s23, 0
    %p301 = por %p299, %p300
    %p302 = scmp.ne.s32.totalorder %s288, %s289
    %p303 = scmp.eq.s32.totalorder %s24, 1
    %p304 = por %p302, %p303
    %p306 = scmp.ne.s32.totalorder %s289, %s305
    %p307 = scmp.eq.s32.totalorder %s24, 0
    %p308 = por %p306, %p307
    %p309 = scmp.le.s32.totalorder 1, %s18
    %p310 = scmp.lt.s32.totalorder %s18, 3
    %p311 = pnand %p309, %p310
    %p312 = pneg %p311
    // Predicated region
    $region9: #{resblock_forward.1} parent=5 // pred_check
      _
    $region10: #{resblock_forward.1} parent=5 // pred_check_branch
      %314 = sbr.rel (%p311) target = $region12
    $region11: #{resblock_forward.1} parent=5 // pred_region
      %s315 = ssub.s32 %s18, 1
      // Predicated region
      $region13: #{resblock_forward.1} parent=11 // pred_check
        %p316 = pneg %p65
      $region14: #{resblock_forward.1} parent=11 // pred_check_branch
        %318 = sbr.rel (%p316) target = $region16
      $region15: #{resblock_forward.1} parent=11 // pred_region
        _
      $region16: #{resblock_forward.1} parent=11 // pred_fallthru
        _
      // Predicated region
      $region17: #{resblock_forward.1} parent=11 // pred_check
        %p319 = pneg %p86
      $region18: #{resblock_forward.1} parent=11 // pred_check_branch
        %321 = sbr.rel (%p319) target = $region20
      $region19: #{resblock_forward.1} parent=11 // pred_region
        _
      $region20: #{resblock_forward.1} parent=11 // pred_fallthru
        _
      // Predicated region
      $region21: #{resblock_forward.1} parent=11 // pred_check
        %p322 = pneg %p107
      $region22: #{resblock_forward.1} parent=11 // pred_check_branch
        %324 = sbr.rel (%p322) target = $region24
      $region23: #{resblock_forward.1} parent=11 // pred_region
        _
      $region24: #{resblock_forward.1} parent=11 // pred_fallthru
        _
      // Predicated region
      $region25: #{resblock_forward.1} parent=11 // pred_check
        %p325 = pneg %p128
      $region26: #{resblock_forward.1} parent=11 // pred_check_branch
        %327 = sbr.rel (%p325) target = $region28
      $region27: #{resblock_forward.1} parent=11 // pred_region
        _
      $region28: #{resblock_forward.1} parent=11 // pred_fallthru
        _
      // Predicated region
      $region29: #{resblock_forward.1} parent=11 // pred_check
        %p328 = pneg %p149
      $region30: #{resblock_forward.1} parent=11 // pred_check_branch
        %330 = sbr.rel (%p328) target = $region32
      $region31: #{resblock_forward.1} parent=11 // pred_region
        _
      $region32: #{resblock_forward.1} parent=11 // pred_fallthru
        _
      // Predicated region
      $region33: #{resblock_forward.1} parent=11 // pred_check
        %p331 = pneg %p170
      $region34: #{resblock_forward.1} parent=11 // pred_check_branch
        %333 = sbr.rel (%p331) target = $region36
      $region35: #{resblock_forward.1} parent=11 // pred_region
        _
      $region36: #{resblock_forward.1} parent=11 // pred_fallthru
        _
      // Predicated region
      $region37: #{resblock_forward.1} parent=11 // pred_check
        %p334 = pneg %p191
      $region38: #{resblock_forward.1} parent=11 // pred_check_branch
        %336 = sbr.rel (%p334) target = $region40
      $region39: #{resblock_forward.1} parent=11 // pred_region
        _
      $region40: #{resblock_forward.1} parent=11 // pred_fallthru
        _
      // Predicated region
      $region41: #{resblock_forward.1} parent=11 // pred_check
        %p337 = pneg %p212
      $region42: #{resblock_forward.1} parent=11 // pred_check_branch
        %339 = sbr.rel (%p337) target = $region44
      $region43: #{resblock_forward.1} parent=11 // pred_region
        _
      $region44: #{resblock_forward.1} parent=11 // pred_fallthru
        _
      // Predicated region
      $region45: #{resblock_forward.1} parent=11 // pred_check
        %p340 = pneg %p233
      $region46: #{resblock_forward.1} parent=11 // pred_check_branch
        %342 = sbr.rel (%p340) target = $region48
      $region47: #{resblock_forward.1} parent=11 // pred_region
        _
      $region48: #{resblock_forward.1} parent=11 // pred_fallthru
        _
      // Predicated region
      $region49: #{resblock_forward.1} parent=11 // pred_check
        %p343 = pneg %p254
      $region50: #{resblock_forward.1} parent=11 // pred_check_branch
        %345 = sbr.rel (%p343) target = $region52
      $region51: #{resblock_forward.1} parent=11 // pred_region
        _
      $region52: #{resblock_forward.1} parent=11 // pred_fallthru
        _
      // Predicated region
      $region53: #{resblock_forward.1} parent=11 // pred_check
        %p346 = pneg %p275
      $region54: #{resblock_forward.1} parent=11 // pred_check_branch
        %348 = sbr.rel (%p346) target = $region56
      $region55: #{resblock_forward.1} parent=11 // pred_region
        _
      $region56: #{resblock_forward.1} parent=11 // pred_fallthru
        _
    $region12: #{resblock_forward.1} parent=5 // pred_fallthru
      _
    %p349 = scmp.lt.s32.totalorder %s18, 2
    // Predicated region
    $region57: #{resblock_forward.1} parent=5 // pred_check
      %p350 = pneg %p349
    $region58: #{resblock_forward.1} parent=5 // pred_check_branch
      %352 = sbr.rel (%p350) target = $region60
    $region59: #{resblock_forward.1} parent=5 // pred_region
      // Predicated region
      $region61: #{resblock_forward.1} parent=59 // pred_check
        %p353 = pneg %p38
      $region62: #{resblock_forward.1} parent=59 // pred_check_branch
        %355 = sbr.rel (%p353) target = $region64
      $region63: #{resblock_forward.1} parent=59 // pred_region
        %p356 = scmp.lt.s32.totalorder %s18, 1
        %s357 = scalar_select %p356, %s18, 1
        %s358 = smul.addr %s357, 72
        %s359 = smul.addr %s358, 4
        %s360 = scalar_lea.vmem %s0, %s359
      $region64: #{resblock_forward.1} parent=59 // pred_fallthru
        _
    $region60: #{resblock_forward.1} parent=5 // pred_fallthru
      _
    %p361 = scmp.le.s32.totalorder 1, %s18
    %p362 = scmp.lt.s32.totalorder %s18, 3
    %p363 = pnand %p361, %p362
    %p364 = pneg %p363
    // Predicated region
    $region65: #{resblock_forward.1} parent=5 // pred_check
      _
    $region66: #{resblock_forward.1} parent=5 // pred_check_branch
      %366 = sbr.rel (%p363) target = $region68
    $region67: #{resblock_forward.1} parent=5 // pred_region
      %s367 = ssub.s32 %s18, 1
      %p368 = scmp.lt.s32.totalorder %s23, 1
      %s369 = scalar_select %p368, %s23, 1
      %s370 = smul.addr %s369, 72
      %s371 = smul.addr %s370, 4
      %s372 = scalar_lea.vmem %s0, %s371
      %p373 = pneg %p44
      %p374 = pneg %p41
      %p375 = pneg %p65
      %p376 = pneg %p62
      %p377 = pneg %p86
      %p378 = pneg %p83
      %p379 = pneg %p107
      %p380 = pneg %p104
      %p381 = pneg %p128
      %p382 = pneg %p125
      %p383 = pneg %p149
      %p384 = pneg %p146
      %p385 = pneg %p170
      %p386 = pneg %p167
      %p387 = pneg %p191
      %p388 = pneg %p188
      %p389 = pneg %p212
      %p390 = pneg %p209
      %p391 = pneg %p233
      %p392 = pneg %p230
      %p393 = pneg %p254
      %p394 = pneg %p251
      %p395 = pneg %p275
      %p396 = pneg %p272
      %p397 = pneg %p301
      %p398 = pneg %p298
      %p399 = scmp.lt.s32.totalorder %s23, 1
      %s400 = scalar_select %p399, %s23, 1
      %s401 = smul.addr %s400, 8
      %s402 = smul.addr %s401, 4
      %s403 = scalar_lea.vmem %s12, %s402
      %p404 = scmp.lt.s32.totalorder %s23, 1
      %s405 = scalar_select %p404, %s23, 1
      %s406 = smul.addr %s405, 72
      %s407 = smul.addr %s406, 4
      %s408 = scalar_lea.vmem %s0, %s407
      %p409 = scmp.lt.s32.totalorder %s23, 1
      %s410 = scalar_select %p409, %s23, 1
      %s411 = smul.addr %s410, 8
      %s412 = smul.addr %s411, 4
      %s413 = scalar_lea.vmem %s12, %s412
      %v415 = vld [vmem:[%s7] sm:$0xf]
      %v416 = vld [vmem:[%s7 + $0x4] sm:$0xf]
      %v417 = vld [vmem:[%s7 + $0x8] sm:$0xf]
      %v418 = vld [vmem:[%s7 + $0xc] sm:$0xf]
      %v419 = vld [vmem:[%s7 + $0x10] sm:$0xf]
      %v420 = vld [vmem:[%s7 + $0x14] sm:$0xf]
      %v421 = vld [vmem:[%s7 + $0x18] sm:$0xf]
      %v422 = vld [vmem:[%s7 + $0x1c] sm:$0xf]
      %v423 = vld [vmem:[%s8] sm:$0xf]
      %v424 = vld [vmem:[%s8 + $0x4] sm:$0xf]
      %v425 = vld [vmem:[%s8 + $0x8] sm:$0xf]
      %v426 = vld [vmem:[%s8 + $0xc] sm:$0xf]
      %v427 = vld [vmem:[%s8 + $0x10] sm:$0xf]
      %v428 = vld [vmem:[%s8 + $0x14] sm:$0xf]
      %v429 = vld [vmem:[%s8 + $0x18] sm:$0xf]
      %v430 = vld [vmem:[%s8 + $0x1c] sm:$0xf]
      %431 = vst [vmem:[#allocation2] sm:$0xff] 0
      %432 = vst [vmem:[#allocation2 + $0x28] sm:$0xff] 0
      %v433 = vld [vmem:[%s408] sm:$0xf]
      %v434 = vld [vmem:[%s408 + $0x8] sm:$0xf]
      %v435 = vld [vmem:[%s408 + $0x10] sm:$0xf]
      %v436 = vld [vmem:[%s408 + $0x18] sm:$0xf]
      %v437 = vld [vmem:[%s408 + $0x20] sm:$0xf]
      %v438 = vld [vmem:[%s408 + $0x28] sm:$0xf]
      %v439 = vld [vmem:[%s408 + $0x30] sm:$0xf]
      %v440 = vld [vmem:[%s408 + $0x38] sm:$0xf]
      %s441 = scalar_lea.vmem %s408, 72
      %v442 = vld [vmem:[%s441] sm:$0xf]
      %v443 = vld [vmem:[%s441 + $0x8] sm:$0xf]
      %v444 = vld [vmem:[%s441 + $0x10] sm:$0xf]
      %v445 = vld [vmem:[%s441 + $0x18] sm:$0xf]
      %v446 = vld [vmem:[%s441 + $0x20] sm:$0xf]
      %v447 = vld [vmem:[%s441 + $0x28] sm:$0xf]
      %v448 = vld [vmem:[%s441 + $0x30] sm:$0xf]
      %v449 = vld [vmem:[%s441 + $0x38] sm:$0xf]
      %v450 = vld [vmem:[%s408 + $0x4] sm:$0x1]
      %v451 = vld [vmem:[%s408 + $0xc] sm:$0x1]
      %v452 = vld [vmem:[%s408 + $0x14] sm:$0x1]
      %v453 = vld [vmem:[%s408 + $0x1c] sm:$0x1]
      %v454 = vld [vmem:[%s408 + $0x24] sm:$0x1]
      %v455 = vld [vmem:[%s408 + $0x2c] sm:$0x1]
      %v456 = vld [vmem:[%s408 + $0x34] sm:$0x1]
      %v457 = vld [vmem:[%s408 + $0x3c] sm:$0x1]
      %vm458 = vsmask.f32 3328
      %vm459 = vsmask.f32 7440
      %vm460 = vmor %vm458, %vm459
      %v462 = vshrl.u32 %v433, 16
      %v464 = vrot.slane %v462, 4
      %v465 = vshll.u32 %v433, 16
      %v467 = vrot.slane %v465, 5
      %v468 = vor.u32 %v464, %v467
      %v469 = vrot.slane %v468, 4
      %v471 = vshll.u32 %v450, 16
      %v473 = vrot.slane %v471, 5
      %v474 = vsel %vm460, %v469, %v473
      %v476 = vshrl.u32 %v434, 16
      %v478 = vrot.slane %v476, 4
      %v479 = vshll.u32 %v434, 16
      %v481 = vrot.slane %v479, 5
      %v482 = vor.u32 %v478, %v481
      %v483 = vrot.slane %v482, 4
      %v485 = vshll.u32 %v451, 16
      %v487 = vrot.slane %v485, 5
      %v488 = vsel %vm460, %v483, %v487
      %v490 = vshrl.u32 %v435, 16
      %v492 = vrot.slane %v490, 4
      %v493 = vshll.u32 %v435, 16
      %v495 = vrot.slane %v493, 5
      %v496 = vor.u32 %v492, %v495
      %v497 = vrot.slane %v496, 4
      %v499 = vshll.u32 %v452, 16
      %v501 = vrot.slane %v499, 5
      %v502 = vsel %vm460, %v497, %v501
      %v504 = vshrl.u32 %v436, 16
      %v506 = vrot.slane %v504, 4
      %v507 = vshll.u32 %v436, 16
      %v509 = vrot.slane %v507, 5
      %v510 = vor.u32 %v506, %v509
      %v511 = vrot.slane %v510, 4
      %v513 = vshll.u32 %v453, 16
      %v515 = vrot.slane %v513, 5
      %v516 = vsel %vm460, %v511, %v515
      %v518 = vshrl.u32 %v437, 16
      %v520 = vrot.slane %v518, 4
      %v521 = vshll.u32 %v437, 16
      %v523 = vrot.slane %v521, 5
      %v524 = vor.u32 %v520, %v523
      %v525 = vrot.slane %v524, 4
      %v527 = vshll.u32 %v454, 16
      %v529 = vrot.slane %v527, 5
      %v530 = vsel %vm460, %v525, %v529
      %v532 = vshrl.u32 %v438, 16
      %v534 = vrot.slane %v532, 4
      %v535 = vshll.u32 %v438, 16
      %v537 = vrot.slane %v535, 5
      %v538 = vor.u32 %v534, %v537
      %v539 = vrot.slane %v538, 4
      %v541 = vshll.u32 %v455, 16
      %v543 = vrot.slane %v541, 5
      %v544 = vsel %vm460, %v539, %v543
      %v546 = vshrl.u32 %v439, 16
      %v548 = vrot.slane %v546, 4
      %v549 = vshll.u32 %v439, 16
      %v551 = vrot.slane %v549, 5
      %v552 = vor.u32 %v548, %v551
      %v553 = vrot.slane %v552, 4
      %v555 = vshll.u32 %v456, 16
      %v557 = vrot.slane %v555, 5
      %v558 = vsel %vm460, %v553, %v557
      %v560 = vshrl.u32 %v440, 16
      %v562 = vrot.slane %v560, 4
      %v563 = vshll.u32 %v440, 16
      %v565 = vrot.slane %v563, 5
      %v566 = vor.u32 %v562, %v565
      %v567 = vrot.slane %v566, 4
      %v569 = vshll.u32 %v457, 16
      %v571 = vrot.slane %v569, 5
      %v572 = vsel %vm460, %v567, %v571
      %v581 = vunpack.c.l.b16 %v433
      %v582 = vunpack.c.l.b16 %v434
      %v583 = vunpack.c.l.b16 %v435
      %v584 = vunpack.c.l.b16 %v436
      %v585 = vunpack.c.l.b16 %v437
      %v586 = vunpack.c.l.b16 %v438
      %v587 = vunpack.c.l.b16 %v439
      %v588 = vunpack.c.l.b16 %v440
      %v589 = vpack.c.b16 %v582, %v581
      %v590 = vpack.c.b16 %v584, %v583
      %v591 = vpack.c.b16 %v586, %v585
      %v592 = vpack.c.b16 %v588, %v587
      %v605 = vunpack.c.l.b16 %v442
      %v606 = vunpack.c.l.b16 %v443
      %v607 = vunpack.c.l.b16 %v444
      %v608 = vunpack.c.l.b16 %v445
      %v609 = vunpack.c.l.b16 %v446
      %v610 = vunpack.c.l.b16 %v447
      %v611 = vunpack.c.l.b16 %v448
      %v612 = vunpack.c.l.b16 %v449
      %v613 = vpack.c.b16 %v606, %v605
      %v614 = vpack.c.b16 %v608, %v607
      %v615 = vpack.c.b16 %v610, %v609
      %v616 = vpack.c.b16 %v612, %v611
      %v621 = vunpack.c.l.b16 %v474
      %v622 = vunpack.c.l.b16 %v488
      %v623 = vunpack.c.l.b16 %v502
      %v624 = vunpack.c.l.b16 %v516
      %v625 = vunpack.c.l.b16 %v530
      %v626 = vunpack.c.l.b16 %v544
      %v627 = vunpack.c.l.b16 %v558
      %v628 = vunpack.c.l.b16 %v572
      %v629 = vpack.c.b16 %v622, %v621
      %v630 = vpack.c.b16 %v624, %v623
      %v631 = vpack.c.b16 %v626, %v625
      %v632 = vpack.c.b16 %v628, %v627
      %v637 = vld [vmem:[%s1] sm:$0xf]
      %v638 = vld [vmem:[%s1 + $0x4] sm:$0xf]
      %v639 = vld [vmem:[%s1 + $0x8] sm:$0xf]
      %v640 = vld [vmem:[%s1 + $0xc] sm:$0xf]
      %v641 = vld [vmem:[%s1 + $0x10] sm:$0xf]
      %v642 = vld [vmem:[%s1 + $0x14] sm:$0xf]
      %v643 = vld [vmem:[%s1 + $0x18] sm:$0xf]
      %v644 = vld [vmem:[%s1 + $0x1c] sm:$0xf]
      %v645 = vld [vmem:[%s1 + $0x20] sm:$0xf]
      %v646 = vld [vmem:[%s1 + $0x24] sm:$0xf]
      %v647 = vld [vmem:[%s1 + $0x28] sm:$0xf]
      %v648 = vld [vmem:[%s1 + $0x2c] sm:$0xf]
      %v649 = vld [vmem:[%s1 + $0x30] sm:$0xf]
      %v650 = vld [vmem:[%s1 + $0x34] sm:$0xf]
      %v651 = vld [vmem:[%s1 + $0x38] sm:$0xf]
      %v652 = vld [vmem:[%s1 + $0x3c] sm:$0xf]
      %v653 = vld [vmem:[%s1 + $0x40] sm:$0xf]
      %v654 = vld [vmem:[%s1 + $0x44] sm:$0xf]
      %v655 = vld [vmem:[%s1 + $0x48] sm:$0xf]
      %v656 = vld [vmem:[%s1 + $0x4c] sm:$0xf]
      %v657 = vld [vmem:[%s1 + $0x50] sm:$0xf]
      %v658 = vld [vmem:[%s1 + $0x54] sm:$0xf]
      %v659 = vld [vmem:[%s1 + $0x58] sm:$0xf]
      %v660 = vld [vmem:[%s1 + $0x5c] sm:$0xf]
      %v661 = vld [vmem:[%s1 + $0x60] sm:$0xf]
      %v662 = vld [vmem:[%s1 + $0x64] sm:$0xf]
      %v663 = vld [vmem:[%s1 + $0x68] sm:$0xf]
      %v664 = vld [vmem:[%s1 + $0x6c] sm:$0xf]
      %v665 = vld [vmem:[%s1 + $0x70] sm:$0xf]
      %v666 = vld [vmem:[%s1 + $0x74] sm:$0xf]
      %v667 = vld [vmem:[%s1 + $0x78] sm:$0xf]
      %v668 = vld [vmem:[%s1 + $0x7c] sm:$0xf]
      %v669 = vld [vmem:[%s1 + $0x80] sm:$0xf]
      %v670 = vld [vmem:[%s1 + $0x84] sm:$0xf]
      %v671 = vld [vmem:[%s1 + $0x88] sm:$0xf]
      %v672 = vld [vmem:[%s1 + $0x8c] sm:$0xf]
      %v673 = vld [vmem:[%s1 + $0x90] sm:$0xf]
      %v674 = vld [vmem:[%s1 + $0x94] sm:$0xf]
      %v675 = vld [vmem:[%s1 + $0x98] sm:$0xf]
      %v676 = vld [vmem:[%s1 + $0x9c] sm:$0xf]
      %v677 = vld [vmem:[%s1 + $0xa0] sm:$0xf]
      %v678 = vld [vmem:[%s1 + $0xa4] sm:$0xf]
      %v679 = vld [vmem:[%s1 + $0xa8] sm:$0xf]
      %v680 = vld [vmem:[%s1 + $0xac] sm:$0xf]
      %v681 = vld [vmem:[%s1 + $0xb0] sm:$0xf]
      %v682 = vld [vmem:[%s1 + $0xb4] sm:$0xf]
      %v683 = vld [vmem:[%s1 + $0xb8] sm:$0xf]
      %v684 = vld [vmem:[%s1 + $0xbc] sm:$0xf]
      %s685 = scalar_lea.vmem %s408, 144
      %v686 = vld [vmem:[%s685] sm:$0xf]
      %v687 = vld [vmem:[%s685 + $0x8] sm:$0xf]
      %v688 = vld [vmem:[%s685 + $0x10] sm:$0xf]
      %v689 = vld [vmem:[%s685 + $0x18] sm:$0xf]
      %v690 = vld [vmem:[%s685 + $0x20] sm:$0xf]
      %v691 = vld [vmem:[%s685 + $0x28] sm:$0xf]
      %v692 = vld [vmem:[%s685 + $0x30] sm:$0xf]
      %v693 = vld [vmem:[%s685 + $0x38] sm:$0xf]
      %s694 = scalar_lea.vmem %s408, 216
      %v695 = vld [vmem:[%s694] sm:$0xf]
      %v696 = vld [vmem:[%s694 + $0x8] sm:$0xf]
      %v697 = vld [vmem:[%s694 + $0x10] sm:$0xf]
      %v698 = vld [vmem:[%s694 + $0x18] sm:$0xf]
      %v699 = vld [vmem:[%s694 + $0x20] sm:$0xf]
      %v700 = vld [vmem:[%s694 + $0x28] sm:$0xf]
      %v701 = vld [vmem:[%s694 + $0x30] sm:$0xf]
      %v702 = vld [vmem:[%s694 + $0x38] sm:$0xf]
      %v703 = vld [vmem:[%s685 + $0x4] sm:$0x1]
      %v704 = vld [vmem:[%s685 + $0xc] sm:$0x1]
      %v705 = vld [vmem:[%s685 + $0x14] sm:$0x1]
      %v706 = vld [vmem:[%s685 + $0x1c] sm:$0x1]
      %v707 = vld [vmem:[%s685 + $0x24] sm:$0x1]
      %v708 = vld [vmem:[%s685 + $0x2c] sm:$0x1]
      %v709 = vld [vmem:[%s685 + $0x34] sm:$0x1]
      %v710 = vld [vmem:[%s685 + $0x3c] sm:$0x1]
      %v712 = vshrl.u32 %v686, 16
      %v714 = vrot.slane %v712, 4
      %v715 = vshll.u32 %v686, 16
      %v717 = vrot.slane %v715, 5
      %v718 = vor.u32 %v714, %v717
      %v719 = vrot.slane %v718, 4
      %v721 = vshll.u32 %v703, 16
      %v723 = vrot.slane %v721, 5
      %v724 = vsel %vm460, %v719, %v723
      %v726 = vshrl.u32 %v687, 16
      %v728 = vrot.slane %v726, 4
      %v729 = vshll.u32 %v687, 16
      %v731 = vrot.slane %v729, 5
      %v732 = vor.u32 %v728, %v731
      %v733 = vrot.slane %v732, 4
      %v735 = vshll.u32 %v704, 16
      %v737 = vrot.slane %v735, 5
      %v738 = vsel %vm460, %v733, %v737
      %v740 = vshrl.u32 %v688, 16
      %v742 = vrot.slane %v740, 4
      %v743 = vshll.u32 %v688, 16
      %v745 = vrot.slane %v743, 5
      %v746 = vor.u32 %v742, %v745
      %v747 = vrot.slane %v746, 4
      %v749 = vshll.u32 %v705, 16
      %v751 = vrot.slane %v749, 5
      %v752 = vsel %vm460, %v747, %v751
      %v754 = vshrl.u32 %v689, 16
      %v756 = vrot.slane %v754, 4
      %v757 = vshll.u32 %v689, 16
      %v759 = vrot.slane %v757, 5
      %v760 = vor.u32 %v756, %v759
      %v761 = vrot.slane %v760, 4
      %v763 = vshll.u32 %v706, 16
      %v765 = vrot.slane %v763, 5
      %v766 = vsel %vm460, %v761, %v765
      %v768 = vshrl.u32 %v690, 16
      %v770 = vrot.slane %v768, 4
      %v771 = vshll.u32 %v690, 16
      %v773 = vrot.slane %v771, 5
      %v774 = vor.u32 %v770, %v773
      %v775 = vrot.slane %v774, 4
      %v777 = vshll.u32 %v707, 16
      %v779 = vrot.slane %v777, 5
      %v780 = vsel %vm460, %v775, %v779
      %v782 = vshrl.u32 %v691, 16
      %v784 = vrot.slane %v782, 4
      %v785 = vshll.u32 %v691, 16
      %v787 = vrot.slane %v785, 5
      %v788 = vor.u32 %v784, %v787
      %v789 = vrot.slane %v788, 4
      %v791 = vshll.u32 %v708, 16
      %v793 = vrot.slane %v791, 5
      %v794 = vsel %vm460, %v789, %v793
      %v796 = vshrl.u32 %v692, 16
      %v798 = vrot.slane %v796, 4
      %v799 = vshll.u32 %v692, 16
      %v801 = vrot.slane %v799, 5
      %v802 = vor.u32 %v798, %v801
      %v803 = vrot.slane %v802, 4
      %v805 = vshll.u32 %v709, 16
      %v807 = vrot.slane %v805, 5
      %v808 = vsel %vm460, %v803, %v807
      %v810 = vshrl.u32 %v693, 16
      %v812 = vrot.slane %v810, 4
      %v813 = vshll.u32 %v693, 16
      %v815 = vrot.slane %v813, 5
      %v816 = vor.u32 %v812, %v815
      %v817 = vrot.slane %v816, 4
      %v819 = vshll.u32 %v710, 16
      %v821 = vrot.slane %v819, 5
      %v822 = vsel %vm460, %v817, %v821
      %v831 = vunpack.c.l.b16 %v686
      %v832 = vunpack.c.l.b16 %v687
      %v833 = vunpack.c.l.b16 %v688
      %v834 = vunpack.c.l.b16 %v689
      %v835 = vunpack.c.l.b16 %v690
      %v836 = vunpack.c.l.b16 %v691
      %v837 = vunpack.c.l.b16 %v692
      %v838 = vunpack.c.l.b16 %v693
      %v839 = vpack.c.b16 %v832, %v831
      %v840 = vpack.c.b16 %v834, %v833
      %v841 = vpack.c.b16 %v836, %v835
      %v842 = vpack.c.b16 %v838, %v837
      %v855 = vunpack.c.l.b16 %v695
      %v856 = vunpack.c.l.b16 %v696
      %v857 = vunpack.c.l.b16 %v697
      %v858 = vunpack.c.l.b16 %v698
      %v859 = vunpack.c.l.b16 %v699
      %v860 = vunpack.c.l.b16 %v700
      %v861 = vunpack.c.l.b16 %v701
      %v862 = vunpack.c.l.b16 %v702
      %v863 = vpack.c.b16 %v856, %v855
      %v864 = vpack.c.b16 %v858, %v857
      %v865 = vpack.c.b16 %v860, %v859
      %v866 = vpack.c.b16 %v862, %v861
      %v871 = vunpack.c.l.b16 %v724
      %v872 = vunpack.c.l.b16 %v738
      %v873 = vunpack.c.l.b16 %v752
      %v874 = vunpack.c.l.b16 %v766
      %v875 = vunpack.c.l.b16 %v780
      %v876 = vunpack.c.l.b16 %v794
      %v877 = vunpack.c.l.b16 %v808
      %v878 = vunpack.c.l.b16 %v822
      %v879 = vpack.c.b16 %v872, %v871
      %v880 = vpack.c.b16 %v874, %v873
      %v881 = vpack.c.b16 %v876, %v875
      %v882 = vpack.c.b16 %v878, %v877
      %v887 = vld [vmem:[%s1 + $0xc0] sm:$0xf]
      %v888 = vld [vmem:[%s1 + $0xc4] sm:$0xf]
      %v889 = vld [vmem:[%s1 + $0xc8] sm:$0xf]
      %v890 = vld [vmem:[%s1 + $0xcc] sm:$0xf]
      %v891 = vld [vmem:[%s1 + $0xd0] sm:$0xf]
      %v892 = vld [vmem:[%s1 + $0xd4] sm:$0xf]
      %v893 = vld [vmem:[%s1 + $0xd8] sm:$0xf]
      %v894 = vld [vmem:[%s1 + $0xdc] sm:$0xf]
      %v895 = vld [vmem:[%s1 + $0xe0] sm:$0xf]
      %v896 = vld [vmem:[%s1 + $0xe4] sm:$0xf]
      %v897 = vld [vmem:[%s1 + $0xe8] sm:$0xf]
      %v898 = vld [vmem:[%s1 + $0xec] sm:$0xf]
      %v899 = vld [vmem:[%s1 + $0xf0] sm:$0xf]
      %v900 = vld [vmem:[%s1 + $0xf4] sm:$0xf]
      %v901 = vld [vmem:[%s1 + $0xf8] sm:$0xf]
      %v902 = vld [vmem:[%s1 + $0xfc] sm:$0xf]
      %v903 = vld [vmem:[%s1 + $0x100] sm:$0xf]
      %v904 = vld [vmem:[%s1 + $0x104] sm:$0xf]
      %v905 = vld [vmem:[%s1 + $0x108] sm:$0xf]
      %v906 = vld [vmem:[%s1 + $0x10c] sm:$0xf]
      %v907 = vld [vmem:[%s1 + $0x110] sm:$0xf]
      %v908 = vld [vmem:[%s1 + $0x114] sm:$0xf]
      %v909 = vld [vmem:[%s1 + $0x118] sm:$0xf]
      %v910 = vld [vmem:[%s1 + $0x11c] sm:$0xf]
      %v911 = vld [vmem:[%s1 + $0x120] sm:$0xf]
      %v912 = vld [vmem:[%s1 + $0x124] sm:$0xf]
      %v913 = vld [vmem:[%s1 + $0x128] sm:$0xf]
      %v914 = vld [vmem:[%s1 + $0x12c] sm:$0xf]
      %v915 = vld [vmem:[%s1 + $0x130] sm:$0xf]
      %v916 = vld [vmem:[%s1 + $0x134] sm:$0xf]
      %v917 = vld [vmem:[%s1 + $0x138] sm:$0xf]
      %v918 = vld [vmem:[%s1 + $0x13c] sm:$0xf]
      %v919 = vld [vmem:[%s1 + $0x140] sm:$0xf]
      %v920 = vld [vmem:[%s1 + $0x144] sm:$0xf]
      %v921 = vld [vmem:[%s1 + $0x148] sm:$0xf]
      %v922 = vld [vmem:[%s1 + $0x14c] sm:$0xf]
      %v923 = vld [vmem:[%s1 + $0x150] sm:$0xf]
      %v924 = vld [vmem:[%s1 + $0x154] sm:$0xf]
      %v925 = vld [vmem:[%s1 + $0x158] sm:$0xf]
      %v926 = vld [vmem:[%s1 + $0x15c] sm:$0xf]
      %v927 = vld [vmem:[%s1 + $0x160] sm:$0xf]
      %v928 = vld [vmem:[%s1 + $0x164] sm:$0xf]
      %v929 = vld [vmem:[%s1 + $0x168] sm:$0xf]
      %v930 = vld [vmem:[%s1 + $0x16c] sm:$0xf]
      %v931 = vld [vmem:[%s1 + $0x170] sm:$0xf]
      %v932 = vld [vmem:[%s1 + $0x174] sm:$0xf]
      %v933 = vld [vmem:[%s1 + $0x178] sm:$0xf]
      %v934 = vld [vmem:[%s1 + $0x17c] sm:$0xf]
      %v983 = vunpack.c.l.b16 %v887
      %v984 = vunpack.c.l.b16 %v888
      %v985 = vunpack.c.l.b16 %v889
      %v986 = vunpack.c.l.b16 %v890
      %v987 = vunpack.c.l.b16 %v891
      %v988 = vunpack.c.l.b16 %v892
      %v989 = vunpack.c.l.b16 %v893
      %v990 = vunpack.c.l.b16 %v894
      %v991 = vunpack.c.l.b16 %v895
      %v992 = vunpack.c.l.b16 %v896
      %v993 = vunpack.c.l.b16 %v897
      %v994 = vunpack.c.l.b16 %v898
      %v995 = vunpack.c.l.b16 %v899
      %v996 = vunpack.c.l.b16 %v900
      %v997 = vunpack.c.l.b16 %v901
      %v998 = vunpack.c.l.b16 %v902
      %v999 = vunpack.c.l.b16 %v903
      %v1000 = vunpack.c.l.b16 %v904
      %v1001 = vunpack.c.l.b16 %v905
      %v1002 = vunpack.c.l.b16 %v906
      %v1003 = vunpack.c.l.b16 %v907
      %v1004 = vunpack.c.l.b16 %v908
      %v1005 = vunpack.c.l.b16 %v909
      %v1006 = vunpack.c.l.b16 %v910
      %v1007 = vunpack.c.l.b16 %v911
      %v1008 = vunpack.c.l.b16 %v912
      %v1009 = vunpack.c.l.b16 %v913
      %v1010 = vunpack.c.l.b16 %v914
      %v1011 = vunpack.c.l.b16 %v915
      %v1012 = vunpack.c.l.b16 %v916
      %v1013 = vunpack.c.l.b16 %v917
      %v1014 = vunpack.c.l.b16 %v918
      %v1015 = vunpack.c.l.b16 %v919
      %v1016 = vunpack.c.l.b16 %v920
      %v1017 = vunpack.c.l.b16 %v921
      %v1018 = vunpack.c.l.b16 %v922
      %v1019 = vunpack.c.l.b16 %v923
      %v1020 = vunpack.c.l.b16 %v924
      %v1021 = vunpack.c.l.b16 %v925
      %v1022 = vunpack.c.l.b16 %v926
      %v1023 = vunpack.c.l.b16 %v927
      %v1024 = vunpack.c.l.b16 %v928
      %v1025 = vunpack.c.l.b16 %v929
      %v1026 = vunpack.c.l.b16 %v930
      %v1027 = vunpack.c.l.b16 %v931
      %v1028 = vunpack.c.l.b16 %v932
      %v1029 = vunpack.c.l.b16 %v933
      %v1030 = vunpack.c.l.b16 %v934
      %v1031 = vpack.c.b16 %v984, %v983
      %v1032 = vpack.c.b16 %v986, %v985
      %v1033 = vpack.c.b16 %v988, %v987
      %v1034 = vpack.c.b16 %v990, %v989
      %v1035 = vpack.c.b16 %v992, %v991
      %v1036 = vpack.c.b16 %v994, %v993
      %v1037 = vpack.c.b16 %v996, %v995
      %v1038 = vpack.c.b16 %v998, %v997
      %v1039 = vpack.c.b16 %v1000, %v999
      %v1040 = vpack.c.b16 %v1002, %v1001
      %v1041 = vpack.c.b16 %v1004, %v1003
      %v1042 = vpack.c.b16 %v1006, %v1005
      %v1043 = vpack.c.b16 %v1008, %v1007
      %v1044 = vpack.c.b16 %v1010, %v1009
      %v1045 = vpack.c.b16 %v1012, %v1011
      %v1046 = vpack.c.b16 %v1014, %v1013
      %v1047 = vpack.c.b16 %v1016, %v1015
      %v1048 = vpack.c.b16 %v1018, %v1017
      %v1049 = vpack.c.b16 %v1020, %v1019
      %v1050 = vpack.c.b16 %v1022, %v1021
      %v1051 = vpack.c.b16 %v1024, %v1023
      %v1052 = vpack.c.b16 %v1026, %v1025
      %v1053 = vpack.c.b16 %v1028, %v1027
      %v1054 = vpack.c.b16 %v1030, %v1029
      %1079 = vmatprep.subr.bf16.mxu0 0
      %1080 = vmatpush1.bf16.msra.mxu0 %v1031
      %1081 = vmatprep.subr.bf16.mxu0 0
      %1082 = vmatpush1.bf16.msra.mxu0 %v1032
      %1083 = vmatprep.subr.bf16.mxu0 0
      %1084 = vmatpush1.bf16.msra.mxu0 %v1033
      %1085 = vmatprep.subr.bf16.mxu0 0
      %1086 = vmatpush1.bf16.msra.mxu0 %v1034
      %1087 = vmatprep.subr.bf16.mxu0 0
      %1088 = vmatpush1.bf16.msra.mxu0 %v1035
      %1089 = vmatprep.subr.bf16.mxu0 0
      %1090 = vmatpush1.bf16.msra.mxu0 %v1036
      %1091 = vmatprep.subr.bf16.mxu0 0
      %1092 = vmatpush1.bf16.msra.mxu0 %v1037
      %1093 = vmatprep.subr.bf16.mxu0 0
      %1094 = vmatpush1.bf16.msra.mxu0 %v1038
      %1095 = vmatprep.subr.bf16.mxu0 0
      %1096 = vmatpush1.bf16.msra.mxu0 %v1039
      %1097 = vmatprep.subr.bf16.mxu0 0
      %1098 = vmatpush1.bf16.msra.mxu0 %v1040
      %1099 = vmatprep.subr.bf16.mxu0 0
      %1100 = vmatpush1.bf16.msra.mxu0 %v1041
      %1101 = vmatprep.subr.bf16.mxu0 0
      %1102 = vmatpush1.bf16.msra.mxu0 %v1042
      %1103 = vmatprep.subr.bf16.mxu0 0
      %1104 = vmatpush1.bf16.msra.mxu0 %v1043
      %1105 = vmatprep.subr.bf16.mxu0 0
      %1106 = vmatpush1.bf16.msra.mxu0 %v1044
      %1107 = vmatprep.subr.bf16.mxu0 0
      %1108 = vmatpush1.bf16.msra.mxu0 %v1045
      %1109 = vmatprep.subr.bf16.mxu0 0
      %1110 = vmatpush1.bf16.msra.mxu0 %v1046
      %1111 = vmatprep.mubr.bf16.mxu0 %v863
      %1112 = vmatmul.mubr.bf16.gmra.mrb[0].mxu0 %v839
      %v1113 = vpop.f32.mrb[0].mxu0
      %v1114 = vadd.f32 0.0, %v1113
      %v1115 = vpop.f32.mrb[0].mxu0
      %v1116 = vpop.f32.mrb[0].mxu0
      %v1117 = vadd.f32 0.0, %v1116
      %v1118 = vpop.f32.mrb[0].mxu0
      %1119 = vmatprep.mubr.bf16.mxu0 %v864
      %1120 = vmatmul.mubr.bf16.gmra.mrb[0].mxu0 %v840
      %v1121 = vpop.f32.mrb[0].mxu0
      %v1122 = vadd.f32 0.0, %v1121
      %v1123 = vpop.f32.mrb[0].mxu0
      %v1124 = vpop.f32.mrb[0].mxu0
      %v1125 = vadd.f32 0.0, %v1124
      %v1126 = vpop.f32.mrb[0].mxu0
      %1127 = vmatprep.mubr.bf16.mxu0 %v865
      %1128 = vmatmul.mubr.bf16.gmra.mrb[0].mxu0 %v841
      %v1129 = vpop.f32.mrb[0].mxu0
      %v1130 = vadd.f32 0.0, %v1129
      %v1131 = vpop.f32.mrb[0].mxu0
      %v1132 = vpop.f32.mrb[0].mxu0
      %v1133 = vadd.f32 0.0, %v1132
      %v1134 = vpop.f32.mrb[0].mxu0
      %1135 = vmatprep.mubr.bf16.mxu0 %v866
      %1136 = vmatmul.mubr.bf16.gmra.mrb[0].mxu0 %v842
      %v1137 = vpop.f32.mrb[0].mxu0
      %v1138 = vadd.f32 0.0, %v1137
      %v1139 = vpop.f32.mrb[0].mxu0
      %v1140 = vpop.f32.mrb[0].mxu0
      %v1141 = vadd.f32 0.0, %v1140
      %v1142 = vpop.f32.mrb[0].mxu0
      %1143 = vdwg.mxu0
      %1144 = vmatprep.subr.bf16.mxu0 0
      %1145 = vmatpush1.bf16.msra.mxu0 %v1047
      %1146 = vmatprep.subr.bf16.mxu0 0
      %1147 = vmatpush1.bf16.msra.mxu0 %v1048
      %1148 = vmatprep.subr.bf16.mxu0 0
      %1149 = vmatpush1.bf16.msra.mxu0 %v1049
      %1150 = vmatprep.subr.bf16.mxu0 0
      %1151 = vmatpush1.bf16.msra.mxu0 %v1050
      %1152 = vmatprep.subr.bf16.mxu0 0
      %1153 = vmatpush1.bf16.msra.mxu0 %v1051
      %1154 = vmatprep.subr.bf16.mxu0 0
      %1155 = vmatpush1.bf16.msra.mxu0 %v1052
      %1156 = vmatprep.subr.bf16.mxu0 0
      %1157 = vmatpush1.bf16.msra.mxu0 %v1053
      %1158 = vmatprep.subr.bf16.mxu0 0
      %1159 = vmatpush1.bf16.msra.mxu0 %v1054
      %1160 = vmatprep.subr.bf16.mxu0 0
      %1161 = vmatpush1.bf16.msra.mxu0 0
      %1162 = vmatprep.subr.bf16.mxu0 0
      %1163 = vmatpush1.bf16.msra.mxu0 0
      %1164 = vmatprep.subr.bf16.mxu0 0
      %1165 = vmatpush1.bf16.msra.mxu0 0
      %1166 = vmatprep.subr.bf16.mxu0 0
      %1167 = vmatpush1.bf16.msra.mxu0 0
      %1168 = vmatprep.subr.bf16.mxu0 0
      %1169 = vmatpush1.bf16.msra.mxu0 0
      %1170 = vmatprep.subr.bf16.mxu0 0
      %1171 = vmatpush1.bf16.msra.mxu0 0
      %1172 = vmatprep.subr.bf16.mxu0 0
      %1173 = vmatpush1.bf16.msra.mxu0 0
      %1174 = vmatprep.subr.bf16.mxu0 0
      %1175 = vmatpush1.bf16.msra.mxu0 0
      %1176 = vmatprep.mubr.bf16.mxu0 0
      %1177 = vmatmul.mubr.bf16.gmra.mrb[0].mxu0 %v879
      %v1178 = vpop.f32.mrb[0].mxu0
      %v1179 = vadd.f32 %v1114, %v1178
      %v1180 = vpop.f32.mrb[0].mxu0
      %v1181 = vpop.f32.mrb[0].mxu0
      %v1182 = vadd.f32 %v1117, %v1181
      %v1183 = vpop.f32.mrb[0].mxu0
      %1184 = vmatprep.mubr.bf16.mxu0 0
      %1185 = vmatmul.mubr.bf16.gmra.mrb[0].mxu0 %v880
      %v1186 = vpop.f32.mrb[0].mxu0
      %v1187 = vadd.f32 %v1122, %v1186
      %v1188 = vpop.f32.mrb[0].mxu0
      %v1189 = vpop.f32.mrb[0].mxu0
      %v1190 = vadd.f32 %v1125, %v1189
      %v1191 = vpop.f32.mrb[0].mxu0
      %1192 = vmatprep.mubr.bf16.mxu0 0
      %1193 = vmatmul.mubr.bf16.gmra.mrb[0].mxu0 %v881
      %v1194 = vpop.f32.mrb[0].mxu0
      %v1195 = vadd.f32 %v1130, %v1194
      %v1196 = vpop.f32.mrb[0].mxu0
      %v1197 = vpop.f32.mrb[0].mxu0
      %v1198 = vadd.f32 %v1133, %v1197
      %v1199 = vpop.f32.mrb[0].mxu0
      %1200 = vmatprep.mubr.bf16.mxu0 0
      %1201 = vmatmul.mubr.bf16.gmra.mrb[0].mxu0 %v882
      %v1202 = vpop.f32.mrb[0].mxu0
      %v1203 = vadd.f32 %v1138, %v1202
      %v1204 = vpop.f32.mrb[0].mxu0
      %v1205 = vpop.f32.mrb[0].mxu0
      %v1206 = vadd.f32 %v1141, %v1205
      %v1207 = vpop.f32.mrb[0].mxu0
      %1208 = vdwg.mxu0
      %v1257 = vunpack.c.l.b16 %v637
      %v1258 = vunpack.c.l.b16 %v638
      %v1259 = vunpack.c.l.b16 %v639
      %v1260 = vunpack.c.l.b16 %v640
      %v1261 = vunpack.c.l.b16 %v641
      %v1262 = vunpack.c.l.b16 %v642
      %v1263 = vunpack.c.l.b16 %v643
      %v1264 = vunpack.c.l.b16 %v644
      %v1265 = vunpack.c.l.b16 %v645
      %v1266 = vunpack.c.l.b16 %v646
      %v1267 = vunpack.c.l.b16 %v647
      %v1268 = vunpack.c.l.b16 %v648
      %v1269 = vunpack.c.l.b16 %v649
      %v1270 = vunpack.c.l.b16 %v650
      %v1271 = vunpack.c.l.b16 %v651
      %v1272 = vunpack.c.l.b16 %v652
      %v1273 = vunpack.c.l.b16 %v653
      %v1274 = vunpack.c.l.b16 %v654
      %v1275 = vunpack.c.l.b16 %v655
      %v1276 = vunpack.c.l.b16 %v656
      %v1277 = vunpack.c.l.b16 %v657
      %v1278 = vunpack.c.l.b16 %v658
      %v1279 = vunpack.c.l.b16 %v659
      %v1280 = vunpack.c.l.b16 %v660
      %v1281 = vunpack.c.l.b16 %v661
      %v1282 = vunpack.c.l.b16 %v662
      %v1283 = vunpack.c.l.b16 %v663
      %v1284 = vunpack.c.l.b16 %v664
      %v1285 = vunpack.c.l.b16 %v665
      %v1286 = vunpack.c.l.b16 %v666
      %v1287 = vunpack.c.l.b16 %v667
      %v1288 = vunpack.c.l.b16 %v668
      %v1289 = vunpack.c.l.b16 %v669
      %v1290 = vunpack.c.l.b16 %v670
      %v1291 = vunpack.c.l.b16 %v671
      %v1292 = vunpack.c.l.b16 %v672
      %v1293 = vunpack.c.l.b16 %v673
      %v1294 = vunpack.c.l.b16 %v674
      %v1295 = vunpack.c.l.b16 %v675
      %v1296 = vunpack.c.l.b16 %v676
      %v1297 = vunpack.c.l.b16 %v677
      %v1298 = vunpack.c.l.b16 %v678
      %v1299 = vunpack.c.l.b16 %v679
      %v1300 = vunpack.c.l.b16 %v680
      %v1301 = vunpack.c.l.b16 %v681
      %v1302 = vunpack.c.l.b16 %v682
      %v1303 = vunpack.c.l.b16 %v683
      %v1304 = vunpack.c.l.b16 %v684
      %v1305 = vpack.c.b16 %v1258, %v1257
      %v1306 = vpack.c.b16 %v1260, %v1259
      %v1307 = vpack.c.b16 %v1262, %v1261
      %v1308 = vpack.c.b16 %v1264, %v1263
      %v1309 = vpack.c.b16 %v1266, %v1265
      %v1310 = vpack.c.b16 %v1268, %v1267
      %v1311 = vpack.c.b16 %v1270, %v1269
      %v1312 = vpack.c.b16 %v1272, %v1271
      %v1313 = vpack.c.b16 %v1274, %v1273
      %v1314 = vpack.c.b16 %v1276, %v1275
      %v1315 = vpack.c.b16 %v1278, %v1277
      %v1316 = vpack.c.b16 %v1280, %v1279
      %v1317 = vpack.c.b16 %v1282, %v1281
      %v1318 = vpack.c.b16 %v1284, %v1283
      %v1319 = vpack.c.b16 %v1286, %v1285
      %v1320 = vpack.c.b16 %v1288, %v1287
      %v1321 = vpack.c.b16 %v1290, %v1289
      %v1322 = vpack.c.b16 %v1292, %v1291
      %v1323 = vpack.c.b16 %v1294, %v1293
      %v1324 = vpack.c.b16 %v1296, %v1295
      %v1325 = vpack.c.b16 %v1298, %v1297
      %v1326 = vpack.c.b16 %v1300, %v1299
      %v1327 = vpack.c.b16 %v1302, %v1301
      %v1328 = vpack.c.b16 %v1304, %v1303
      %1353 = vmatprep.subr.bf16.mxu0 0
      %1354 = vmatpush1.bf16.msra.mxu0 %v1305
      %1355 = vmatprep.subr.bf16.mxu0 0
      %1356 = vmatpush1.bf16.msra.mxu0 %v1306
      %1357 = vmatprep.subr.bf16.mxu0 0
      %1358 = vmatpush1.bf16.msra.mxu0 %v1307
      %1359 = vmatprep.subr.bf16.mxu0 0
      %1360 = vmatpush1.bf16.msra.mxu0 %v1308
      %1361 = vmatprep.subr.bf16.mxu0 0
      %1362 = vmatpush1.bf16.msra.mxu0 %v1309
      %1363 = vmatprep.subr.bf16.mxu0 0
      %1364 = vmatpush1.bf16.msra.mxu0 %v1310
      %1365 = vmatprep.subr.bf16.mxu0 0
      %1366 = vmatpush1.bf16.msra.mxu0 %v1311
      %1367 = vmatprep.subr.bf16.mxu0 0
      %1368 = vmatpush1.bf16.msra.mxu0 %v1312
      %1369 = vmatprep.subr.bf16.mxu0 0
      %1370 = vmatpush1.bf16.msra.mxu0 %v1313
      %1371 = vmatprep.subr.bf16.mxu0 0
      %1372 = vmatpush1.bf16.msra.mxu0 %v1314
      %1373 = vmatprep.subr.bf16.mxu0 0
      %1374 = vmatpush1.bf16.msra.mxu0 %v1315
      %1375 = vmatprep.subr.bf16.mxu0 0
      %1376 = vmatpush1.bf16.msra.mxu0 %v1316
      %1377 = vmatprep.subr.bf16.mxu0 0
      %1378 = vmatpush1.bf16.msra.mxu0 %v1317
      %1379 = vmatprep.subr.bf16.mxu0 0
      %1380 = vmatpush1.bf16.msra.mxu0 %v1318
      %1381 = vmatprep.subr.bf16.mxu0 0
      %1382 = vmatpush1.bf16.msra.mxu0 %v1319
      %1383 = vmatprep.subr.bf16.mxu0 0
      %1384 = vmatpush1.bf16.msra.mxu0 %v1320
      %1385 = vmatprep.mubr.bf16.mxu0 %v613
      %1386 = vmatmul.mubr.bf16.gmra.mrb[0].mxu0 %v589
      %v1387 = vpop.f32.mrb[0].mxu0
      %v1388 = vadd.f32 %v1179, %v1387
      %v1389 = vpop.f32.mrb[0].mxu0
      %v1390 = vpop.f32.mrb[0].mxu0
      %v1391 = vadd.f32 %v1182, %v1390
      %v1392 = vpop.f32.mrb[0].mxu0
      %1393 = vmatprep.mubr.bf16.mxu0 %v614
      %1394 = vmatmul.mubr.bf16.gmra.mrb[0].mxu0 %v590
      %v1395 = vpop.f32.mrb[0].mxu0
      %v1396 = vadd.f32 %v1187, %v1395
      %v1397 = vpop.f32.mrb[0].mxu0
      %v1398 = vpop.f32.mrb[0].mxu0
      %v1399 = vadd.f32 %v1190, %v1398
      %v1400 = vpop.f32.mrb[0].mxu0
      %1401 = vmatprep.mubr.bf16.mxu0 %v615
      %1402 = vmatmul.mubr.bf16.gmra.mrb[0].mxu0 %v591
      %v1403 = vpop.f32.mrb[0].mxu0
      %v1404 = vadd.f32 %v1195, %v1403
      %v1405 = vpop.f32.mrb[0].mxu0
      %v1406 = vpop.f32.mrb[0].mxu0
      %v1407 = vadd.f32 %v1198, %v1406
      %v1408 = vpop.f32.mrb[0].mxu0
      %1409 = vmatprep.mubr.bf16.mxu0 %v616
      %1410 = vmatmul.mubr.bf16.gmra.mrb[0].mxu0 %v592
      %v1411 = vpop.f32.mrb[0].mxu0
      %v1412 = vadd.f32 %v1203, %v1411
      %v1413 = vpop.f32.mrb[0].mxu0
      %v1414 = vpop.f32.mrb[0].mxu0
      %v1415 = vadd.f32 %v1206, %v1414
      %v1416 = vpop.f32.mrb[0].mxu0
      %1417 = vdwg.mxu0
      %1418 = vmatprep.subr.bf16.mxu0 0
      %1419 = vmatpush1.bf16.msra.mxu0 %v1321
      %1420 = vmatprep.subr.bf16.mxu0 0
      %1421 = vmatpush1.bf16.msra.mxu0 %v1322
      %1422 = vmatprep.subr.bf16.mxu0 0
      %1423 = vmatpush1.bf16.msra.mxu0 %v1323
      %1424 = vmatprep.subr.bf16.mxu0 0
      %1425 = vmatpush1.bf16.msra.mxu0 %v1324
      %1426 = vmatprep.subr.bf16.mxu0 0
      %1427 = vmatpush1.bf16.msra.mxu0 %v1325
      %1428 = vmatprep.subr.bf16.mxu0 0
      %1429 = vmatpush1.bf16.msra.mxu0 %v1326
      %1430 = vmatprep.subr.bf16.mxu0 0
      %1431 = vmatpush1.bf16.msra.mxu0 %v1327
      %1432 = vmatprep.subr.bf16.mxu0 0
      %1433 = vmatpush1.bf16.msra.mxu0 %v1328
      %1434 = vmatprep.subr.bf16.mxu0 0
      %1435 = vmatpush1.bf16.msra.mxu0 0
      %1436 = vmatprep.subr.bf16.mxu0 0
      %1437 = vmatpush1.bf16.msra.mxu0 0
      %1438 = vmatprep.subr.bf16.mxu0 0
      %1439 = vmatpush1.bf16.msra.mxu0 0
      %1440 = vmatprep.subr.bf16.mxu0 0
      %1441 = vmatpush1.bf16.msra.mxu0 0
      %1442 = vmatprep.subr.bf16.mxu0 0
      %1443 = vmatpush1.bf16.msra.mxu0 0
      %1444 = vmatprep.subr.bf16.mxu0 0
      %1445 = vmatpush1.bf16.msra.mxu0 0
      %1446 = vmatprep.subr.bf16.mxu0 0
      %1447 = vmatpush1.bf16.msra.mxu0 0
      %1448 = vmatprep.subr.bf16.mxu0 0
      %1449 = vmatpush1.bf16.msra.mxu0 0
      %1450 = vmatprep.mubr.bf16.mxu0 0
      %1451 = vmatmul.mubr.bf16.gmra.mrb[0].mxu0 %v629
      %v1452 = vpop.f32.mrb[0].mxu0
      %v1453 = vadd.f32 %v1388, %v1452
      %v1454 = vpop.f32.mrb[0].mxu0
      %v1455 = vpop.f32.mrb[0].mxu0
      %v1456 = vadd.f32 %v1391, %v1455
      %v1457 = vpop.f32.mrb[0].mxu0
      %1458 = vmatprep.mubr.bf16.mxu0 0
      %1459 = vmatmul.mubr.bf16.gmra.mrb[0].mxu0 %v630
      %v1460 = vpop.f32.mrb[0].mxu0
      %v1461 = vadd.f32 %v1396, %v1460
      %v1462 = vpop.f32.mrb[0].mxu0
      %v1463 = vpop.f32.mrb[0].mxu0
      %v1464 = vadd.f32 %v1399, %v1463
      %v1465 = vpop.f32.mrb[0].mxu0
      %1466 = vmatprep.mubr.bf16.mxu0 0
      %1467 = vmatmul.mubr.bf16.gmra.mrb[0].mxu0 %v631
      %v1468 = vpop.f32.mrb[0].mxu0
      %v1469 = vadd.f32 %v1404, %v1468
      %v1470 = vpop.f32.mrb[0].mxu0
      %v1471 = vpop.f32.mrb[0].mxu0
      %v1472 = vadd.f32 %v1407, %v1471
      %v1473 = vpop.f32.mrb[0].mxu0
      %1474 = vmatprep.mubr.bf16.mxu0 0
      %1475 = vmatmul.mubr.bf16.gmra.mrb[0].mxu0 %v632
      %v1476 = vpop.f32.mrb[0].mxu0
      %v1477 = vadd.f32 %v1412, %v1476
      %v1478 = vpop.f32.mrb[0].mxu0
      %v1479 = vpop.f32.mrb[0].mxu0
      %v1480 = vadd.f32 %v1415, %v1479
      %v1481 = vpop.f32.mrb[0].mxu0
      %1482 = vdwg.mxu0
      %s1483 = scalar_lea.vmem %s408, 8
      %v1484 = vld [vmem:[%s1483] sm:$0xf]
      %v1485 = vld [vmem:[%s1483 + $0x8] sm:$0xf]
      %v1486 = vld [vmem:[%s1483 + $0x10] sm:$0xf]
      %v1487 = vld [vmem:[%s1483 + $0x18] sm:$0xf]
      %v1488 = vld [vmem:[%s1483 + $0x20] sm:$0xf]
      %v1489 = vld [vmem:[%s1483 + $0x28] sm:$0xf]
      %v1490 = vld [vmem:[%s1483 + $0x30] sm:$0xf]
      %v1491 = vld [vmem:[%s1483 + $0x38] sm:$0xf]
      %s1492 = scalar_lea.vmem %s408, 80
      %v1493 = vld [vmem:[%s1492] sm:$0xf]
      %v1494 = vld [vmem:[%s1492 + $0x8] sm:$0xf]
      %v1495 = vld [vmem:[%s1492 + $0x10] sm:$0xf]
      %v1496 = vld [vmem:[%s1492 + $0x18] sm:$0xf]
      %v1497 = vld [vmem:[%s1492 + $0x20] sm:$0xf]
      %v1498 = vld [vmem:[%s1492 + $0x28] sm:$0xf]
      %v1499 = vld [vmem:[%s1492 + $0x30] sm:$0xf]
      %v1500 = vld [vmem:[%s1492 + $0x38] sm:$0xf]
      %v1501 = vld [vmem:[%s1483 + $0x4] sm:$0x1]
      %v1502 = vld [vmem:[%s1483 + $0xc] sm:$0x1]
      %v1503 = vld [vmem:[%s1483 + $0x14] sm:$0x1]
      %v1504 = vld [vmem:[%s1483 + $0x1c] sm:$0x1]
      %v1505 = vld [vmem:[%s1483 + $0x24] sm:$0x1]
      %v1506 = vld [vmem:[%s1483 + $0x2c] sm:$0x1]
      %v1507 = vld [vmem:[%s1483 + $0x34] sm:$0x1]
      %v1508 = vld [vmem:[%s1483 + $0x3c] sm:$0x1]
      %v1510 = vshrl.u32 %v1484, 16
      %v1512 = vrot.slane %v1510, 4
      %v1513 = vshll.u32 %v1484, 16
      %v1515 = vrot.slane %v1513, 5
      %v1516 = vor.u32 %v1512, %v1515
      %v1517 = vrot.slane %v1516, 4
      %v1519 = vshll.u32 %v1501, 16
      %v1521 = vrot.slane %v1519, 5
      %v1522 = vsel %vm460, %v1517, %v1521
      %v1524 = vshrl.u32 %v1485, 16
      %v1526 = vrot.slane %v1524, 4
      %v1527 = vshll.u32 %v1485, 16
      %v1529 = vrot.slane %v1527, 5
      %v1530 = vor.u32 %v1526, %v1529
      %v1531 = vrot.slane %v1530, 4
      %v1533 = vshll.u32 %v1502, 16
      %v1535 = vrot.slane %v1533, 5
      %v1536 = vsel %vm460, %v1531, %v1535
      %v1538 = vshrl.u32 %v1486, 16
      %v1540 = vrot.slane %v1538, 4
      %v1541 = vshll.u32 %v1486, 16
      %v1543 = vrot.slane %v1541, 5
      %v1544 = vor.u32 %v1540, %v1543
      %v1545 = vrot.slane %v1544, 4
      %v1547 = vshll.u32 %v1503, 16
      %v1549 = vrot.slane %v1547, 5
      %v1550 = vsel %vm460, %v1545, %v1549
      %v1552 = vshrl.u32 %v1487, 16
      %v1554 = vrot.slane %v1552, 4
      %v1555 = vshll.u32 %v1487, 16
      %v1557 = vrot.slane %v1555, 5
      %v1558 = vor.u32 %v1554, %v1557
      %v1559 = vrot.slane %v1558, 4
      %v1561 = vshll.u32 %v1504, 16
      %v1563 = vrot.slane %v1561, 5
      %v1564 = vsel %vm460, %v1559, %v1563
      %v1566 = vshrl.u32 %v1488, 16
      %v1568 = vrot.slane %v1566, 4
      %v1569 = vshll.u32 %v1488, 16
      %v1571 = vrot.slane %v1569, 5
      %v1572 = vor.u32 %v1568, %v1571
      %v1573 = vrot.slane %v1572, 4
      %v1575 = vshll.u32 %v1505, 16
      %v1577 = vrot.slane %v1575, 5
      %v1578 = vsel %vm460, %v1573, %v1577
      %v1580 = vshrl.u32 %v1489, 16
      %v1582 = vrot.slane %v1580, 4
      %v1583 = vshll.u32 %v1489, 16
      %v1585 = vrot.slane %v1583, 5
      %v1586 = vor.u32 %v1582, %v1585
      %v1587 = vrot.slane %v1586, 4
      %v1589 = vshll.u32 %v1506, 16
      %v1591 = vrot.slane %v1589, 5
      %v1592 = vsel %vm460, %v1587, %v1591
      %v1594 = vshrl.u32 %v1490, 16
      %v1596 = vrot.slane %v1594, 4
      %v1597 = vshll.u32 %v1490, 16
      %v1599 = vrot.slane %v1597, 5
      %v1600 = vor.u32 %v1596, %v1599
      %v1601 = vrot.slane %v1600, 4
      %v1603 = vshll.u32 %v1507, 16
      %v1605 = vrot.slane %v1603, 5
      %v1606 = vsel %vm460, %v1601, %v1605
      %v1608 = vshrl.u32 %v1491, 16
      %v1610 = vrot.slane %v1608, 4
      %v1611 = vshll.u32 %v1491, 16
      %v1613 = vrot.slane %v1611, 5
      %v1614 = vor.u32 %v1610, %v1613
      %v1615 = vrot.slane %v1614, 4
      %v1617 = vshll.u32 %v1508, 16
      %v1619 = vrot.slane %v1617, 5
      %v1620 = vsel %vm460, %v1615, %v1619
      %v1629 = vunpack.c.l.b16 %v1484
      %v1630 = vunpack.c.l.b16 %v1485
      %v1631 = vunpack.c.l.b16 %v1486
      %v1632 = vunpack.c.l.b16 %v1487
      %v1633 = vunpack.c.l.b16 %v1488
      %v1634 = vunpack.c.l.b16 %v1489
      %v1635 = vunpack.c.l.b16 %v1490
      %v1636 = vunpack.c.l.b16 %v1491
      %v1637 = vpack.c.b16 %v1630, %v1629
      %v1638 = vpack.c.b16 %v1632, %v1631
      %v1639 = vpack.c.b16 %v1634, %v1633
      %v1640 = vpack.c.b16 %v1636, %v1635
      %v1653 = vunpack.c.l.b16 %v1493
      %v1654 = vunpack.c.l.b16 %v1494
      %v1655 = vunpack.c.l.b16 %v1495
      %v1656 = vunpack.c.l.b16 %v1496
      %v1657 = vunpack.c.l.b16 %v1497
      %v1658 = vunpack.c.l.b16 %v1498
      %v1659 = vunpack.c.l.b16 %v1499
      %v1660 = vunpack.c.l.b16 %v1500
      %v1661 = vpack.c.b16 %v1654, %v1653
      %v1662 = vpack.c.b16 %v1656, %v1655
      %v1663 = vpack.c.b16 %v1658, %v1657
      %v1664 = vpack.c.b16 %v1660, %v1659
      %v1669 = vunpack.c.l.b16 %v1522
      %v1670 = vunpack.c.l.b16 %v1536
      %v1671 = vunpack.c.l.b16 %v1550
      %v1672 = vunpack.c.l.b16 %v1564
      %v1673 = vunpack.c.l.b16 %v1578
      %v1674 = vunpack.c.l.b16 %v1592
      %v1675 = vunpack.c.l.b16 %v1606
      %v1676 = vunpack.c.l.b16 %v1620
      %v1677 = vpack.c.b16 %v1670, %v1669
      %v1678 = vpack.c.b16 %v1672, %v1671
      %v1679 = vpack.c.b16 %v1674, %v1673
      %v1680 = vpack.c.b16 %v1676, %v1675
      %v1685 = vld [vmem:[%s1 + $0x180] sm:$0xf]
      %v1686 = vld [vmem:[%s1 + $0x184] sm:$0xf]
      %v1687 = vld [vmem:[%s1 + $0x188] sm:$0xf]
      %v1688 = vld [vmem:[%s1 + $0x18c] sm:$0xf]
      %v1689 = vld [vmem:[%s1 + $0x190] sm:$0xf]
      %v1690 = vld [vmem:[%s1 + $0x194] sm:$0xf]
      %v1691 = vld [vmem:[%s1 + $0x198] sm:$0xf]
      %v1692 = vld [vmem:[%s1 + $0x19c] sm:$0xf]
      %v1693 = vld [vmem:[%s1 + $0x1a0] sm:$0xf]
      %v1694 = vld [vmem:[%s1 + $0x1a4] sm:$0xf]
      %v1695 = vld [vmem:[%s1 + $0x1a8] sm:$0xf]
      %v1696 = vld [vmem:[%s1 + $0x1ac] sm:$0xf]
      %v1697 = vld [vmem:[%s1 + $0x1b0] sm:$0xf]
      %v1698 = vld [vmem:[%s1 + $0x1b4] sm:$0xf]
      %v1699 = vld [vmem:[%s1 + $0x1b8] sm:$0xf]
      %v1700 = vld [vmem:[%s1 + $0x1bc] sm:$0xf]
      %v1701 = vld [vmem:[%s1 + $0x1c0] sm:$0xf]
      %v1702 = vld [vmem:[%s1 + $0x1c4] sm:$0xf]
      %v1703 = vld [vmem:[%s1 + $0x1c8] sm:$0xf]
      %v1704 = vld [vmem:[%s1 + $0x1cc] sm:$0xf]
      %v1705 = vld [vmem:[%s1 + $0x1d0] sm:$0xf]
      %v1706 = vld [vmem:[%s1 + $0x1d4] sm:$0xf]
      %v1707 = vld [vmem:[%s1 + $0x1d8] sm:$0xf]
      %v1708 = vld [vmem:[%s1 + $0x1dc] sm:$0xf]
      %v1709 = vld [vmem:[%s1 + $0x1e0] sm:$0xf]
      %v1710 = vld [vmem:[%s1 + $0x1e4] sm:$0xf]
      %v1711 = vld [vmem:[%s1 + $0x1e8] sm:$0xf]
      %v1712 = vld [vmem:[%s1 + $0x1ec] sm:$0xf]
      %v1713 = vld [vmem:[%s1 + $0x1f0] sm:$0xf]
      %v1714 = vld [vmem:[%s1 + $0x1f4] sm:$0xf]
      %v1715 = vld [vmem:[%s1 + $0x1f8] sm:$0xf]
      %v1716 = vld [vmem:[%s1 + $0x1fc] sm:$0xf]
      %v1717 = vld [vmem:[%s1 + $0x200] sm:$0xf]
      %v1718 = vld [vmem:[%s1 + $0x204] sm:$0xf]
      %v1719 = vld [vmem:[%s1 + $0x208] sm:$0xf]
      %v1720 = vld [vmem:[%s1 + $0x20c] sm:$0xf]
      %v1721 = vld [vmem:[%s1 + $0x210] sm:$0xf]
      %v1722 = vld [vmem:[%s1 + $0x214] sm:$0xf]
      %v1723 = vld [vmem:[%s1 + $0x218] sm:$0xf]
      %v1724 = vld [vmem:[%s1 + $0x21c] sm:$0xf]
      %v1725 = vld [vmem:[%s1 + $0x220] sm:$0xf]
      %v1726 = vld [vmem:[%s1 + $0x224] sm:$0xf]
      %v1727 = vld [vmem:[%s1 + $0x228] sm:$0xf]
      %v1728 = vld [vmem:[%s1 + $0x22c] sm:$0xf]
      %v1729 = vld [vmem:[%s1 + $0x230] sm:$0xf]
      %v1730 = vld [vmem:[%s1 + $0x234] sm:$0xf]
      %v1731 = vld [vmem:[%s1 + $0x238] sm:$0xf]
      %v1732 = vld [vmem:[%s1 + $0x23c] sm:$0xf]
      %v1781 = vunpack.c.l.b16 %v1685
      %v1782 = vunpack.c.l.b16 %v1686
      %v1783 = vunpack.c.l.b16 %v1687
      %v1784 = vunpack.c.l.b16 %v1688
      %v1785 = vunpack.c.l.b16 %v1689
      %v1786 = vunpack.c.l.b16 %v1690
      %v1787 = vunpack.c.l.b16 %v1691
      %v1788 = vunpack.c.l.b16 %v1692
      %v1789 = vunpack.c.l.b16 %v1693
      %v1790 = vunpack.c.l.b16 %v1694
      %v1791 = vunpack.c.l.b16 %v1695
      %v1792 = vunpack.c.l.b16 %v1696
      %v1793 = vunpack.c.l.b16 %v1697
      %v1794 = vunpack.c.l.b16 %v1698
      %v1795 = vunpack.c.l.b16 %v1699
      %v1796 = vunpack.c.l.b16 %v1700
      %v1797 = vunpack.c.l.b16 %v1701
      %v1798 = vunpack.c.l.b16 %v1702
      %v1799 = vunpack.c.l.b16 %v1703
      %v1800 = vunpack.c.l.b16 %v1704
      %v1801 = vunpack.c.l.b16 %v1705
      %v1802 = vunpack.c.l.b16 %v1706
      %v1803 = vunpack.c.l.b16 %v1707
      %v1804 = vunpack.c.l.b16 %v1708
      %v1805 = vunpack.c.l.b16 %v1709
      %v1806 = vunpack.c.l.b16 %v1710
      %v1807 = vunpack.c.l.b16 %v1711
      %v1808 = vunpack.c.l.b16 %v1712
      %v1809 = vunpack.c.l.b16 %v1713
      %v1810 = vunpack.c.l.b16 %v1714
      %v1811 = vunpack.c.l.b16 %v1715
      %v1812 = vunpack.c.l.b16 %v1716
      %v1813 = vunpack.c.l.b16 %v1717
      %v1814 = vunpack.c.l.b16 %v1718
      %v1815 = vunpack.c.l.b16 %v1719
      %v1816 = vunpack.c.l.b16 %v1720
      %v1817 = vunpack.c.l.b16 %v1721
      %v1818 = vunpack.c.l.b16 %v1722
      %v1819 = vunpack.c.l.b16 %v1723
      %v1820 = vunpack.c.l.b16 %v1724
      %v1821 = vunpack.c.l.b16 %v1725
      %v1822 = vunpack.c.l.b16 %v1726
      %v1823 = vunpack.c.l.b16 %v1727
      %v1824 = vunpack.c.l.b16 %v1728
      %v1825 = vunpack.c.l.b16 %v1729
      %v1826 = vunpack.c.l.b16 %v1730
      %v1827 = vunpack.c.l.b16 %v1731
      %v1828 = vunpack.c.l.b16 %v1732
      %v1829 = vpack.c.b16 %v1782, %v1781
      %v1830 = vpack.c.b16 %v1784, %v1783
      %v1831 = vpack.c.b16 %v1786, %v1785
      %v1832 = vpack.c.b16 %v1788, %v1787
      %v1833 = vpack.c.b16 %v1790, %v1789
      %v1834 = vpack.c.b16 %v1792, %v1791
      %v1835 = vpack.c.b16 %v1794, %v1793
      %v1836 = vpack.c.b16 %v1796, %v1795
      %v1837 = vpack.c.b16 %v1798, %v1797
      %v1838 = vpack.c.b16 %v1800, %v1799
      %v1839 = vpack.c.b16 %v1802, %v1801
      %v1840 = vpack.c.b16 %v1804, %v1803
      %v1841 = vpack.c.b16 %v1806, %v1805
      %v1842 = vpack.c.b16 %v1808, %v1807
      %v1843 = vpack.c.b16 %v1810, %v1809
      %v1844 = vpack.c.b16 %v1812, %v1811
      %v1845 = vpack.c.b16 %v1814, %v1813
      %v1846 = vpack.c.b16 %v1816, %v1815
      %v1847 = vpack.c.b16 %v1818, %v1817
      %v1848 = vpack.c.b16 %v1820, %v1819
      %v1849 = vpack.c.b16 %v1822, %v1821
      %v1850 = vpack.c.b16 %v1824, %v1823
      %v1851 = vpack.c.b16 %v1826, %v1825
      %v1852 = vpack.c.b16 %v1828, %v1827
      %1877 = vmatprep.subr.bf16.mxu0 0
      %1878 = vmatpush1.bf16.msra.mxu0 %v1829
      %1879 = vmatprep.subr.bf16.mxu0 0
      %1880 = vmatpush1.bf16.msra.mxu0 %v1830
      %1881 = vmatprep.subr.bf16.mxu0 0
      %1882 = vmatpush1.bf16.msra.mxu0 %v1831
      %1883 = vmatprep.subr.bf16.mxu0 0
      %1884 = vmatpush1.bf16.msra.mxu0 %v1832
      %1885 = vmatprep.subr.bf16.mxu0 0
      %1886 = vmatpush1.bf16.msra.mxu0 %v1833
      %1887 = vmatprep.subr.bf16.mxu0 0
      %1888 = vmatpush1.bf16.msra.mxu0 %v1834
      %1889 = vmatprep.subr.bf16.mxu0 0
      %1890 = vmatpush1.bf16.msra.mxu0 %v1835
      %1891 = vmatprep.subr.bf16.mxu0 0
      %1892 = vmatpush1.bf16.msra.mxu0 %v1836
      %1893 = vmatprep.subr.bf16.mxu0 0
      %1894 = vmatpush1.bf16.msra.mxu0 %v1837
      %1895 = vmatprep.subr.bf16.mxu0 0
      %1896 = vmatpush1.bf16.msra.mxu0 %v1838
      %1897 = vmatprep.subr.bf16.mxu0 0
      %1898 = vmatpush1.bf16.msra.mxu0 %v1839
      %1899 = vmatprep.subr.bf16.mxu0 0
      %1900 = vmatpush1.bf16.msra.mxu0 %v1840
      %1901 = vmatprep.subr.bf16.mxu0 0
      %1902 = vmatpush1.bf16.msra.mxu0 %v1841
      %1903 = vmatprep.subr.bf16.mxu0 0
      %1904 = vmatpush1.bf16.msra.mxu0 %v1842
      %1905 = vmatprep.subr.bf16.mxu0 0
      %1906 = vmatpush1.bf16.msra.mxu0 %v1843
      %1907 = vmatprep.subr.bf16.mxu0 0
      %1908 = vmatpush1.bf16.msra.mxu0 %v1844
      %1909 = vmatprep.mubr.bf16.mxu0 %v1661
      %1910 = vmatmul.mubr.bf16.gmra.mrb[0].mxu0 %v1637
      %v1911 = vpop.f32.mrb[0].mxu0
      %v1912 = vadd.f32 0.0, %v1911
      %v1913 = vpop.f32.mrb[0].mxu0
      %v1914 = vpop.f32.mrb[0].mxu0
      %v1915 = vadd.f32 0.0, %v1914
      %v1916 = vpop.f32.mrb[0].mxu0
      %1917 = vmatprep.mubr.bf16.mxu0 %v1662
      %1918 = vmatmul.mubr.bf16.gmra.mrb[0].mxu0 %v1638
      %v1919 = vpop.f32.mrb[0].mxu0
      %v1920 = vadd.f32 0.0, %v1919
      %v1921 = vpop.f32.mrb[0].mxu0
      %v1922 = vpop.f32.mrb[0].mxu0
      %v1923 = vadd.f32 0.0, %v1922
      %v1924 = vpop.f32.mrb[0].mxu0
      %1925 = vmatprep.mubr.bf16.mxu0 %v1663
      %1926 = vmatmul.mubr.bf16.gmra.mrb[0].mxu0 %v1639
      %v1927 = vpop.f32.mrb[0].mxu0
      %v1928 = vadd.f32 0.0, %v1927
      %v1929 = vpop.f32.mrb[0].mxu0
      %v1930 = vpop.f32.mrb[0].mxu0
      %v1931 = vadd.f32 0.0, %v1930
      %v1932 = vpop.f32.mrb[0].mxu0
      %1933 = vmatprep.mubr.bf16.mxu0 %v1664
      %1934 = vmatmul.mubr.bf16.gmra.mrb[0].mxu0 %v1640
      %v1935 = vpop.f32.mrb[0].mxu0
      %v1936 = vadd.f32 0.0, %v1935
      %v1937 = vpop.f32.mrb[0].mxu0
      %v1938 = vpop.f32.mrb[0].mxu0
      %v1939 = vadd.f32 0.0, %v1938
      %v1940 = vpop.f32.mrb[0].mxu0
      %1941 = vdwg.mxu0
      %1942 = vmatprep.subr.bf16.mxu0 0
      %1943 = vmatpush1.bf16.msra.mxu0 %v1845
      %1944 = vmatprep.subr.bf16.mxu0 0
      %1945 = vmatpush1.bf16.msra.mxu0 %v1846
      %1946 = vmatprep.subr.bf16.mxu0 0
      %1947 = vmatpush1.bf16.msra.mxu0 %v1847
      %1948 = vmatprep.subr.bf16.mxu0 0
      %1949 = vmatpush1.bf16.msra.mxu0 %v1848
      %1950 = vmatprep.subr.bf16.mxu0 0
      %1951 = vmatpush1.bf16.msra.mxu0 %v1849
      %1952 = vmatprep.subr.bf16.mxu0 0
      %1953 = vmatpush1.bf16.msra.mxu0 %v1850
      %1954 = vmatprep.subr.bf16.mxu0 0
      %1955 = vmatpush1.bf16.msra.mxu0 %v1851
      %1956 = vmatprep.subr.bf16.mxu0 0
      %1957 = vmatpush1.bf16.msra.mxu0 %v1852
      %1958 = vmatprep.subr.bf16.mxu0 0
      %1959 = vmatpush1.bf16.msra.mxu0 0
      %1960 = vmatprep.subr.bf16.mxu0 0
      %1961 = vmatpush1.bf16.msra.mxu0 0
      %1962 = vmatprep.subr.bf16.mxu0 0
      %1963 = vmatpush1.bf16.msra.mxu0 0
      %1964 = vmatprep.subr.bf16.mxu0 0
      %1965 = vmatpush1.bf16.msra.mxu0 0
      %1966 = vmatprep.subr.bf16.mxu0 0
      %1967 = vmatpush1.bf16.msra.mxu0 0
      %1968 = vmatprep.subr.bf16.mxu0 0
      %1969 = vmatpush1.bf16.msra.mxu0 0
      %1970 = vmatprep.subr.bf16.mxu0 0
      %1971 = vmatpush1.bf16.msra.mxu0 0
      %1972 = vmatprep.subr.bf16.mxu0 0
      %1973 = vmatpush1.bf16.msra.mxu0 0
      %1974 = vmatprep.mubr.bf16.mxu0 0
      %1975 = vmatmul.mubr.bf16.gmra.mrb[0].mxu0 %v1677
      %v1976 = vpop.f32.mrb[0].mxu0
      %v1977 = vadd.f32 %v1912, %v1976
      %v1978 = vpop.f32.mrb[0].mxu0
      %v1979 = vpop.f32.mrb[0].mxu0
      %v1980 = vadd.f32 %v1915, %v1979
      %v1981 = vpop.f32.mrb[0].mxu0
      %1982 = vmatprep.mubr.bf16.mxu0 0
      %1983 = vmatmul.mubr.bf16.gmra.mrb[0].mxu0 %v1678
      %v1984 = vpop.f32.mrb[0].mxu0
      %v1985 = vadd.f32 %v1920, %v1984
      %v1986 = vpop.f32.mrb[0].mxu0
      %v1987 = vpop.f32.mrb[0].mxu0
      %v1988 = vadd.f32 %v1923, %v1987
      %v1989 = vpop.f32.mrb[0].mxu0
      %1990 = vmatprep.mubr.bf16.mxu0 0
      %1991 = vmatmul.mubr.bf16.gmra.mrb[0].mxu0 %v1679
      %v1992 = vpop.f32.mrb[0].mxu0
      %v1993 = vadd.f32 %v1928, %v1992
      %v1994 = vpop.f32.mrb[0].mxu0
      %v1995 = vpop.f32.mrb[0].mxu0
      %v1996 = vadd.f32 %v1931, %v1995
      %v1997 = vpop.f32.mrb[0].mxu0
      %1998 = vmatprep.mubr.bf16.mxu0 0
      %1999 = vmatmul.mubr.bf16.gmra.mrb[0].mxu0 %v1680
      %v2000 = vpop.f32.mrb[0].mxu0
      %v2001 = vadd.f32 %v1936, %v2000
      %v2002 = vpop.f32.mrb[0].mxu0
      %v2003 = vpop.f32.mrb[0].mxu0
      %v2004 = vadd.f32 %v1939, %v2003
      %v2005 = vpop.f32.mrb[0].mxu0
      %2006 = vdwg.mxu0
      %v2007 = vadd.f32 %v1453, %v1977
      %v2008 = vadd.f32 %v1456, %v1980
      %v2009 = vadd.f32 %v1461, %v1985
      %v2010 = vadd.f32 %v1464, %v1988
      %v2011 = vadd.f32 %v1469, %v1993
      %v2012 = vadd.f32 %v1472, %v1996
      %v2013 = vadd.f32 %v1477, %v2001
      %v2014 = vadd.f32 %v1480, %v2004
      %v2015 = vld [vmem:[%s9] sm:$0xf]
      %v2016 = vld [vmem:[%s9 + $0x4] sm:$0xf]
      %v2017 = vld [vmem:[%s9 + $0x8] sm:$0xf]
      %v2018 = vld [vmem:[%s9 + $0xc] sm:$0xf]
      %v2019 = vld [vmem:[%s9 + $0x10] sm:$0xf]
      %v2020 = vld [vmem:[%s9 + $0x14] sm:$0xf]
      %v2021 = vld [vmem:[%s9 + $0x18] sm:$0xf]
      %v2022 = vld [vmem:[%s9 + $0x1c] sm:$0xf]
      %v2023 = vld [vmem:[%s9 + $0x20] sm:$0xf]
      %v2024 = vld [vmem:[%s9 + $0x24] sm:$0xf]
      %v2025 = vld [vmem:[%s9 + $0x28] sm:$0xf]
      %v2026 = vld [vmem:[%s9 + $0x2c] sm:$0xf]
      %v2027 = vld [vmem:[%s9 + $0x30] sm:$0xf]
      %v2028 = vld [vmem:[%s9 + $0x34] sm:$0xf]
      %v2029 = vld [vmem:[%s9 + $0x38] sm:$0xf]
      %v2030 = vld [vmem:[%s9 + $0x3c] sm:$0xf]
      %v2047 = vunpack.c.l.b16 %v2015
      %v2048 = vunpack.c.l.b16 %v2016
      %v2049 = vunpack.c.l.b16 %v2017
      %v2050 = vunpack.c.l.b16 %v2018
      %v2051 = vunpack.c.l.b16 %v2019
      %v2052 = vunpack.c.l.b16 %v2020
      %v2053 = vunpack.c.l.b16 %v2021
      %v2054 = vunpack.c.l.b16 %v2022
      %v2055 = vunpack.c.l.b16 %v2023
      %v2056 = vunpack.c.l.b16 %v2024
      %v2057 = vunpack.c.l.b16 %v2025
      %v2058 = vunpack.c.l.b16 %v2026
      %v2059 = vunpack.c.l.b16 %v2027
      %v2060 = vunpack.c.l.b16 %v2028
      %v2061 = vunpack.c.l.b16 %v2029
      %v2062 = vunpack.c.l.b16 %v2030
      %v2063 = vpack.c.b16 %v2048, %v2047
      %v2064 = vpack.c.b16 %v2050, %v2049
      %v2065 = vpack.c.b16 %v2052, %v2051
      %v2066 = vpack.c.b16 %v2054, %v2053
      %v2067 = vpack.c.b16 %v2056, %v2055
      %v2068 = vpack.c.b16 %v2058, %v2057
      %v2069 = vpack.c.b16 %v2060, %v2059
      %v2070 = vpack.c.b16 %v2062, %v2061
      %2079 = vmatprep.subr.bf16.mxu0 0
      %2080 = vmatpush1.bf16.msra.mxu0 %v2063
      %2081 = vmatprep.subr.bf16.mxu0 0
      %2082 = vmatpush1.bf16.msra.mxu0 %v2064
      %2083 = vmatprep.subr.bf16.mxu0 0
      %2084 = vmatpush1.bf16.msra.mxu0 %v2065
      %2085 = vmatprep.subr.bf16.mxu0 0
      %2086 = vmatpush1.bf16.msra.mxu0 %v2066
      %2087 = vmatprep.subr.bf16.mxu0 0
      %2088 = vmatpush1.bf16.msra.mxu0 %v2067
      %2089 = vmatprep.subr.bf16.mxu0 0
      %2090 = vmatpush1.bf16.msra.mxu0 %v2068
      %2091 = vmatprep.subr.bf16.mxu0 0
      %2092 = vmatpush1.bf16.msra.mxu0 %v2069
      %2093 = vmatprep.subr.bf16.mxu0 0
      %2094 = vmatpush1.bf16.msra.mxu0 %v2070
      %2095 = vmatprep.subr.bf16.mxu0 0
      %2096 = vmatpush1.bf16.msra.mxu0 0
      %2097 = vmatprep.subr.bf16.mxu0 0
      %2098 = vmatpush1.bf16.msra.mxu0 0
      %2099 = vmatprep.subr.bf16.mxu0 0
      %2100 = vmatpush1.bf16.msra.mxu0 0
      %2101 = vmatprep.subr.bf16.mxu0 0
      %2102 = vmatpush1.bf16.msra.mxu0 0
      %2103 = vmatprep.subr.bf16.mxu0 0
      %2104 = vmatpush1.bf16.msra.mxu0 0
      %2105 = vmatprep.subr.bf16.mxu0 0
      %2106 = vmatpush1.bf16.msra.mxu0 0
      %2107 = vmatprep.subr.bf16.mxu0 0
      %2108 = vmatpush1.bf16.msra.mxu0 0
      %2109 = vmatprep.subr.bf16.mxu0 0
      %2110 = vmatpush1.bf16.msra.mxu0 0
      %2111 = vmatprep.mubr.bf16.mxu0 0
      %2112 = vmatmul.mubr.bf16.gmra.mrb[0].mxu0 %v863
      %v2113 = vpop.f32.mrb[0].mxu0
      %v2114 = vadd.f32 0.0, %v2113
      %v2115 = vpop.f32.mrb[0].mxu0
      %v2116 = vpop.f32.mrb[0].mxu0
      %v2117 = vadd.f32 0.0, %v2116
      %v2118 = vpop.f32.mrb[0].mxu0
      %2119 = vmatprep.mubr.bf16.mxu0 0
      %2120 = vmatmul.mubr.bf16.gmra.mrb[0].mxu0 %v864
      %v2121 = vpop.f32.mrb[0].mxu0
      %v2122 = vadd.f32 0.0, %v2121
      %v2123 = vpop.f32.mrb[0].mxu0
      %v2124 = vpop.f32.mrb[0].mxu0
      %v2125 = vadd.f32 0.0, %v2124
      %v2126 = vpop.f32.mrb[0].mxu0
      %2127 = vmatprep.mubr.bf16.mxu0 0
      %2128 = vmatmul.mubr.bf16.gmra.mrb[0].mxu0 %v865
      %v2129 = vpop.f32.mrb[0].mxu0
      %v2130 = vadd.f32 0.0, %v2129
      %v2131 = vpop.f32.mrb[0].mxu0
      %v2132 = vpop.f32.mrb[0].mxu0
      %v2133 = vadd.f32 0.0, %v2132
      %v2134 = vpop.f32.mrb[0].mxu0
      %2135 = vmatprep.mubr.bf16.mxu0 0
      %2136 = vmatmul.mubr.bf16.gmra.mrb[0].mxu0 %v866
      %v2137 = vpop.f32.mrb[0].mxu0
      %v2138 = vadd.f32 0.0, %v2137
      %v2139 = vpop.f32.mrb[0].mxu0
      %v2140 = vpop.f32.mrb[0].mxu0
      %v2141 = vadd.f32 0.0, %v2140
      %v2142 = vpop.f32.mrb[0].mxu0
      %2143 = vdwg.mxu0
      %v2144 = vld [vmem:[%s10] sm:$0x1]
      %v2146 = vlaneseq
      %v2147 = vshrl.u32 %v2146, 7
      %v2148 = vsub.s32 0, %v2147
      %v2149 = vrot.slane %v2144, %v2148
      %v2151 = vmul.f32 %v2114, %v2149
      %v2152 = vmul.f32 %v2117, %v2149
      %v2153 = vmul.f32 %v2122, %v2149
      %v2154 = vmul.f32 %v2125, %v2149
      %v2155 = vmul.f32 %v2130, %v2149
      %v2156 = vmul.f32 %v2133, %v2149
      %v2157 = vmul.f32 %v2138, %v2149
      %v2158 = vmul.f32 %v2141, %v2149
      %v2159 = vld [vmem:[%s11] sm:$0x1]
      %v2161 = vlaneseq
      %v2162 = vshrl.u32 %v2161, 7
      %v2163 = vsub.s32 0, %v2162
      %v2164 = vrot.slane %v2159, %v2163
      %v2166 = vadd.f32 %v2151, %v2164
      %v2167 = vadd.f32 %v2152, %v2164
      %v2168 = vadd.f32 %v2153, %v2164
      %v2169 = vadd.f32 %v2154, %v2164
      %v2170 = vadd.f32 %v2155, %v2164
      %v2171 = vadd.f32 %v2156, %v2164
      %v2172 = vadd.f32 %v2157, %v2164
      %v2173 = vadd.f32 %v2158, %v2164
      %v2174 = vld [vmem:[%s2] sm:$0x1]
      %v2176 = vlaneseq
      %v2177 = vshrl.u32 %v2176, 7
      %v2178 = vsub.s32 0, %v2177
      %v2179 = vrot.slane %v2174, %v2178
      %v2181 = vmul.f32 %v2007, %v2179
      %v2182 = vmul.f32 %v2008, %v2179
      %v2183 = vmul.f32 %v2009, %v2179
      %v2184 = vmul.f32 %v2010, %v2179
      %v2185 = vmul.f32 %v2011, %v2179
      %v2186 = vmul.f32 %v2012, %v2179
      %v2187 = vmul.f32 %v2013, %v2179
      %v2188 = vmul.f32 %v2014, %v2179
      %v2189 = vld [vmem:[%s3] sm:$0x1]
      %v2191 = vlaneseq
      %v2192 = vshrl.u32 %v2191, 7
      %v2193 = vsub.s32 0, %v2192
      %v2194 = vrot.slane %v2189, %v2193
      %v2196 = vadd.f32 %v2181, %v2194
      %v2197 = vadd.f32 %v2182, %v2194
      %v2198 = vadd.f32 %v2183, %v2194
      %v2199 = vadd.f32 %v2184, %v2194
      %v2200 = vadd.f32 %v2185, %v2194
      %v2201 = vadd.f32 %v2186, %v2194
      %v2202 = vadd.f32 %v2187, %v2194
      %v2203 = vadd.f32 %v2188, %v2194
      %v2204 = vmax.f32 %v2196, 0.0
      %v2205 = vmax.f32 %v2197, 0.0
      %v2206 = vmax.f32 %v2198, 0.0
      %v2207 = vmax.f32 %v2199, 0.0
      %v2208 = vmax.f32 %v2200, 0.0
      %v2209 = vmax.f32 %v2201, 0.0
      %v2210 = vmax.f32 %v2202, 0.0
      %v2211 = vmax.f32 %v2203, 0.0
      %v2212 = vpack.c.bf16 %v2205, %v2204
      %v2213 = vpack.c.bf16 %v2207, %v2206
      %v2214 = vpack.c.bf16 %v2209, %v2208
      %v2215 = vpack.c.bf16 %v2211, %v2210
      %2216 = vst [vmem:[#allocation2 + $0x8] sm:$0xff] %v2212
      %2217 = vst [vmem:[#allocation2 + $0x10] sm:$0xff] %v2213
      %2218 = vst [vmem:[#allocation2 + $0x18] sm:$0xff] %v2214
      %2219 = vst [vmem:[#allocation2 + $0x20] sm:$0xff] %v2215
      %v2220 = vld [vmem:[#allocation2] sm:$0xf8]
      %v2221 = vld [vmem:[#allocation2 + $0x8] sm:$0xff]
      %v2222 = vld [vmem:[#allocation2 + $0x10] sm:$0xff]
      %v2223 = vld [vmem:[#allocation2 + $0x18] sm:$0xff]
      %v2224 = vld [vmem:[#allocation2 + $0x20] sm:$0xf]
      %2226 = vset.pattern.permute.xlu0 0
      %2227 = vperm.xlu0 %2226, %v415
      %v2228 = vpop.permute.xlu0 %2227
      %v2231 = vunpack.c.l.s4 839922192
      %v2232 = vunpack.c.0.s8 %v2231
      %v2233 = vlaneseq
      %v2234 = vshrl.u32 %v2233, 7
      %v2235 = vsub.s32 %v2232, %v2234
      %v2236 = vrot.slane %v2228, %v2235
      %2238 = vset.pattern.permute.xlu0 0
      %2239 = vperm.xlu0 %2238, %v416
      %v2240 = vpop.permute.xlu0 %2239
      %v2243 = vunpack.c.l.s4 839922192
      %v2244 = vunpack.c.0.s8 %v2243
      %v2245 = vlaneseq
      %v2246 = vshrl.u32 %v2245, 7
      %v2247 = vsub.s32 %v2244, %v2246
      %v2248 = vrot.slane %v2240, %v2247
      %2250 = vset.pattern.permute.xlu0 0
      %2251 = vperm.xlu0 %2250, %v417
      %v2252 = vpop.permute.xlu0 %2251
      %v2255 = vunpack.c.l.s4 839922192
      %v2256 = vunpack.c.0.s8 %v2255
      %v2257 = vlaneseq
      %v2258 = vshrl.u32 %v2257, 7
      %v2259 = vsub.s32 %v2256, %v2258
      %v2260 = vrot.slane %v2252, %v2259
      %2262 = vset.pattern.permute.xlu0 0
      %2263 = vperm.xlu0 %2262, %v418
      %v2264 = vpop.permute.xlu0 %2263
      %v2267 = vunpack.c.l.s4 839922192
      %v2268 = vunpack.c.0.s8 %v2267
      %v2269 = vlaneseq
      %v2270 = vshrl.u32 %v2269, 7
      %v2271 = vsub.s32 %v2268, %v2270
      %v2272 = vrot.slane %v2264, %v2271
      %2274 = vset.pattern.permute.xlu0 0
      %2275 = vperm.xlu0 %2274, %v419
      %v2276 = vpop.permute.xlu0 %2275
      %v2279 = vunpack.c.l.s4 839922192
      %v2280 = vunpack.c.0.s8 %v2279
      %v2281 = vlaneseq
      %v2282 = vshrl.u32 %v2281, 7
      %v2283 = vsub.s32 %v2280, %v2282
      %v2284 = vrot.slane %v2276, %v2283
      %2286 = vset.pattern.permute.xlu0 0
      %2287 = vperm.xlu0 %2286, %v420
      %v2288 = vpop.permute.xlu0 %2287
      %v2291 = vunpack.c.l.s4 839922192
      %v2292 = vunpack.c.0.s8 %v2291
      %v2293 = vlaneseq
      %v2294 = vshrl.u32 %v2293, 7
      %v2295 = vsub.s32 %v2292, %v2294
      %v2296 = vrot.slane %v2288, %v2295
      %2298 = vset.pattern.permute.xlu0 0
      %2299 = vperm.xlu0 %2298, %v421
      %v2300 = vpop.permute.xlu0 %2299
      %v2303 = vunpack.c.l.s4 839922192
      %v2304 = vunpack.c.0.s8 %v2303
      %v2305 = vlaneseq
      %v2306 = vshrl.u32 %v2305, 7
      %v2307 = vsub.s32 %v2304, %v2306
      %v2308 = vrot.slane %v2300, %v2307
      %2310 = vset.pattern.permute.xlu0 0
      %2311 = vperm.xlu0 %2310, %v422
      %v2312 = vpop.permute.xlu0 %2311
      %v2315 = vunpack.c.l.s4 839922192
      %v2316 = vunpack.c.0.s8 %v2315
      %v2317 = vlaneseq
      %v2318 = vshrl.u32 %v2317, 7
      %v2319 = vsub.s32 %v2316, %v2318
      %v2320 = vrot.slane %v2312, %v2319
      %v2329 = vunpack.c.l.b16 %v2236
      %v2330 = vunpack.c.l.b16 %v2248
      %v2331 = vunpack.c.l.b16 %v2260
      %v2332 = vunpack.c.l.b16 %v2272
      %v2333 = vunpack.c.l.b16 %v2284
      %v2334 = vunpack.c.l.b16 %v2296
      %v2335 = vunpack.c.l.b16 %v2308
      %v2336 = vunpack.c.l.b16 %v2320
      %v2337 = vpack.c.b16 %v2330, %v2329
      %v2338 = vpack.c.b16 %v2332, %v2331
      %v2339 = vpack.c.b16 %v2334, %v2333
      %v2340 = vpack.c.b16 %v2336, %v2335
      %v2342 = vshrl.u32 %v2337, 16
      %v2344 = vrot.slane %v2342, 4
      %v2345 = vshll.u32 %v2337, 16
      %v2347 = vrot.slane %v2345, 5
      %v2348 = vor.u32 %v2344, %v2347
      %v2350 = vshrl.u32 %v2338, 16
      %v2352 = vrot.slane %v2350, 4
      %v2353 = vshll.u32 %v2338, 16
      %v2355 = vrot.slane %v2353, 5
      %v2356 = vor.u32 %v2352, %v2355
      %v2357 = vsel %vm458, %v2348, %v2356
      %v2359 = vshrl.u32 %v2339, 16
      %v2361 = vrot.slane %v2359, 4
      %v2362 = vshll.u32 %v2339, 16
      %v2364 = vrot.slane %v2362, 5
      %v2365 = vor.u32 %v2361, %v2364
      %v2366 = vsel %vm458, %v2356, %v2365
      %v2368 = vshrl.u32 %v2340, 16
      %v2370 = vrot.slane %v2368, 4
      %v2371 = vshll.u32 %v2340, 16
      %v2373 = vrot.slane %v2371, 5
      %v2374 = vor.u32 %v2370, %v2373
      %v2375 = vsel %vm458, %v2365, %v2374
      %v2381 = vmul.bf16 %v2220, %v2348
      %v2382 = vmul.bf16 %v2221, %v2357
      %v2383 = vmul.bf16 %v2222, %v2366
      %v2384 = vmul.bf16 %v2223, %v2375
      %v2385 = vmul.bf16 %v2224, %v2374
      %v2386 = vld [vmem:[#allocation2] sm:$0xf0]
      %v2387 = vld [vmem:[#allocation2 + $0x20] sm:$0x1f]
      %2389 = vset.pattern.permute.xlu0 0
      %2390 = vperm.xlu0 %2389, %v423
      %v2391 = vpop.permute.xlu0 %2390
      %v2394 = vunpack.c.l.s4 839922192
      %v2395 = vunpack.c.0.s8 %v2394
      %v2396 = vlaneseq
      %v2397 = vshrl.u32 %v2396, 7
      %v2398 = vsub.s32 %v2395, %v2397
      %v2399 = vrot.slane %v2391, %v2398
      %2401 = vset.pattern.permute.xlu0 0
      %2402 = vperm.xlu0 %2401, %v424
      %v2403 = vpop.permute.xlu0 %2402
      %v2406 = vunpack.c.l.s4 839922192
      %v2407 = vunpack.c.0.s8 %v2406
      %v2408 = vlaneseq
      %v2409 = vshrl.u32 %v2408, 7
      %v2410 = vsub.s32 %v2407, %v2409
      %v2411 = vrot.slane %v2403, %v2410
      %2413 = vset.pattern.permute.xlu0 0
      %2414 = vperm.xlu0 %2413, %v425
      %v2415 = vpop.permute.xlu0 %2414
      %v2418 = vunpack.c.l.s4 839922192
      %v2419 = vunpack.c.0.s8 %v2418
      %v2420 = vlaneseq
      %v2421 = vshrl.u32 %v2420, 7
      %v2422 = vsub.s32 %v2419, %v2421
      %v2423 = vrot.slane %v2415, %v2422
      %2425 = vset.pattern.permute.xlu0 0
      %2426 = vperm.xlu0 %2425, %v426
      %v2427 = vpop.permute.xlu0 %2426
      %v2430 = vunpack.c.l.s4 839922192
      %v2431 = vunpack.c.0.s8 %v2430
      %v2432 = vlaneseq
      %v2433 = vshrl.u32 %v2432, 7
      %v2434 = vsub.s32 %v2431, %v2433
      %v2435 = vrot.slane %v2427, %v2434
      %2437 = vset.pattern.permute.xlu0 0
      %2438 = vperm.xlu0 %2437, %v427
      %v2439 = vpop.permute.xlu0 %2438
      %v2442 = vunpack.c.l.s4 839922192
      %v2443 = vunpack.c.0.s8 %v2442
      %v2444 = vlaneseq
      %v2445 = vshrl.u32 %v2444, 7
      %v2446 = vsub.s32 %v2443, %v2445
      %v2447 = vrot.slane %v2439, %v2446
      %2449 = vset.pattern.permute.xlu0 0
      %2450 = vperm.xlu0 %2449, %v428
      %v2451 = vpop.permute.xlu0 %2450
      %v2454 = vunpack.c.l.s4 839922192
      %v2455 = vunpack.c.0.s8 %v2454
      %v2456 = vlaneseq
      %v2457 = vshrl.u32 %v2456, 7
      %v2458 = vsub.s32 %v2455, %v2457
      %v2459 = vrot.slane %v2451, %v2458
      %2461 = vset.pattern.permute.xlu0 0
      %2462 = vperm.xlu0 %2461, %v429
      %v2463 = vpop.permute.xlu0 %2462
      %v2466 = vunpack.c.l.s4 839922192
      %v2467 = vunpack.c.0.s8 %v2466
      %v2468 = vlaneseq
      %v2469 = vshrl.u32 %v2468, 7
      %v2470 = vsub.s32 %v2467, %v2469
      %v2471 = vrot.slane %v2463, %v2470
      %2473 = vset.pattern.permute.xlu0 0
      %2474 = vperm.xlu0 %2473, %v430
      %v2475 = vpop.permute.xlu0 %2474
      %v2478 = vunpack.c.l.s4 839922192
      %v2479 = vunpack.c.0.s8 %v2478
      %v2480 = vlaneseq
      %v2481 = vshrl.u32 %v2480, 7
      %v2482 = vsub.s32 %v2479, %v2481
      %v2483 = vrot.slane %v2475, %v2482
      %v2492 = vunpack.c.l.b16 %v2399
      %v2493 = vunpack.c.l.b16 %v2411
      %v2494 = vunpack.c.l.b16 %v2423
      %v2495 = vunpack.c.l.b16 %v2435
      %v2496 = vunpack.c.l.b16 %v2447
      %v2497 = vunpack.c.l.b16 %v2459
      %v2498 = vunpack.c.l.b16 %v2471
      %v2499 = vunpack.c.l.b16 %v2483
      %v2500 = vpack.c.b16 %v2493, %v2492
      %v2501 = vpack.c.b16 %v2495, %v2494
      %v2502 = vpack.c.b16 %v2497, %v2496
      %v2503 = vpack.c.b16 %v2499, %v2498
      %vm2504 = vsmask.f32 4352
      %v2506 = vshrl.u32 %v2500, 16
      %v2508 = vrot.slane %v2506, 3
      %v2509 = vshll.u32 %v2500, 16
      %v2511 = vrot.slane %v2509, 4
      %v2512 = vor.u32 %v2508, %v2511
      %v2514 = vshrl.u32 %v2501, 16
      %v2516 = vrot.slane %v2514, 3
      %v2517 = vshll.u32 %v2501, 16
      %v2519 = vrot.slane %v2517, 4
      %v2520 = vor.u32 %v2516, %v2519
      %v2521 = vsel %vm2504, %v2512, %v2520
      %v2523 = vshrl.u32 %v2502, 16
      %v2525 = vrot.slane %v2523, 3
      %v2526 = vshll.u32 %v2502, 16
      %v2528 = vrot.slane %v2526, 4
      %v2529 = vor.u32 %v2525, %v2528
      %v2530 = vsel %vm2504, %v2520, %v2529
      %v2532 = vshrl.u32 %v2503, 16
      %v2534 = vrot.slane %v2532, 3
      %v2535 = vshll.u32 %v2503, 16
      %v2537 = vrot.slane %v2535, 4
      %v2538 = vor.u32 %v2534, %v2537
      %v2539 = vsel %vm2504, %v2529, %v2538
      %v2545 = vmul.bf16 %v2386, %v2512
      %v2546 = vmul.bf16 %v2221, %v2521
      %v2547 = vmul.bf16 %v2222, %v2530
      %v2548 = vmul.bf16 %v2223, %v2539
      %v2549 = vmul.bf16 %v2387, %v2538
      %vm2550 = vsmask.f32 7424
      %v2552 = vshrl.u32 %v2386, 16
      %v2554 = vshll.u32 %v2386, 16
      %v2556 = vrot.slane %v2554, 1
      %v2557 = vor.u32 %v2552, %v2556
      %v2559 = vshll.u32 %v2221, 16
      %v2561 = vrot.slane %v2559, 1
      %v2562 = vsel %vm2550, %v2557, %v2561
      %v2563 = vshrl.u32 %v2221, 16
      %v2565 = vor.u32 %v2563, %v2561
      %v2567 = vshll.u32 %v2222, 16
      %v2569 = vrot.slane %v2567, 1
      %v2570 = vsel %vm2550, %v2565, %v2569
      %v2571 = vshrl.u32 %v2222, 16
      %v2573 = vor.u32 %v2571, %v2569
      %v2575 = vshll.u32 %v2223, 16
      %v2577 = vrot.slane %v2575, 1
      %v2578 = vsel %vm2550, %v2573, %v2577
      %v2579 = vshrl.u32 %v2223, 16
      %v2581 = vor.u32 %v2579, %v2577
      %v2583 = vshll.u32 %v2224, 16
      %v2585 = vrot.slane %v2583, 1
      %v2586 = vsel %vm2550, %v2581, %v2585
      %v2587 = vshrl.u32 %v2224, 16
      %v2589 = vor.u32 %v2587, %v2585
      %vm2595 = vcmask 1046528
      %v2596 = vrot.slane %v2545, 1
      %v2597 = vrot.slane %v2546, 1
      %v2598 = vsel %vm2595, %v2596, %v2597
      %v2599 = vrot.slane %v2547, 1
      %v2600 = vsel %vm2595, %v2597, %v2599
      %v2601 = vrot.slane %v2548, 1
      %v2602 = vsel %vm2595, %v2599, %v2601
      %v2603 = vrot.slane %v2549, 1
      %v2604 = vsel %vm2595, %v2601, %v2603
      %v2605 = vld [vmem:[%s4] sm:$0xf]
      %v2606 = vld [vmem:[%s4 + $0x4] sm:$0xf]
      %v2607 = vld [vmem:[%s4 + $0x8] sm:$0xf]
      %v2608 = vld [vmem:[%s4 + $0xc] sm:$0xf]
      %v2609 = vld [vmem:[%s4 + $0x10] sm:$0xf]
      %v2610 = vld [vmem:[%s4 + $0x14] sm:$0xf]
      %v2611 = vld [vmem:[%s4 + $0x18] sm:$0xf]
      %v2612 = vld [vmem:[%s4 + $0x1c] sm:$0xf]
      %v2613 = vld [vmem:[%s4 + $0x20] sm:$0xf]
      %v2614 = vld [vmem:[%s4 + $0x24] sm:$0xf]
      %v2615 = vld [vmem:[%s4 + $0x28] sm:$0xf]
      %v2616 = vld [vmem:[%s4 + $0x2c] sm:$0xf]
      %v2617 = vld [vmem:[%s4 + $0x30] sm:$0xf]
      %v2618 = vld [vmem:[%s4 + $0x34] sm:$0xf]
      %v2619 = vld [vmem:[%s4 + $0x38] sm:$0xf]
      %v2620 = vld [vmem:[%s4 + $0x3c] sm:$0xf]
      %v2621 = vld [vmem:[%s4 + $0x40] sm:$0xf]
      %v2622 = vld [vmem:[%s4 + $0x44] sm:$0xf]
      %v2623 = vld [vmem:[%s4 + $0x48] sm:$0xf]
      %v2624 = vld [vmem:[%s4 + $0x4c] sm:$0xf]
      %v2625 = vld [vmem:[%s4 + $0x50] sm:$0xf]
      %v2626 = vld [vmem:[%s4 + $0x54] sm:$0xf]
      %v2627 = vld [vmem:[%s4 + $0x58] sm:$0xf]
      %v2628 = vld [vmem:[%s4 + $0x5c] sm:$0xf]
      %v2629 = vld [vmem:[%s4 + $0x60] sm:$0xf]
      %v2630 = vld [vmem:[%s4 + $0x64] sm:$0xf]
      %v2631 = vld [vmem:[%s4 + $0x68] sm:$0xf]
      %v2632 = vld [vmem:[%s4 + $0x6c] sm:$0xf]
      %v2633 = vld [vmem:[%s4 + $0x70] sm:$0xf]
      %v2634 = vld [vmem:[%s4 + $0x74] sm:$0xf]
      %v2635 = vld [vmem:[%s4 + $0x78] sm:$0xf]
      %v2636 = vld [vmem:[%s4 + $0x7c] sm:$0xf]
      %v2637 = vld [vmem:[%s4 + $0x80] sm:$0xf]
      %v2638 = vld [vmem:[%s4 + $0x84] sm:$0xf]
      %v2639 = vld [vmem:[%s4 + $0x88] sm:$0xf]
      %v2640 = vld [vmem:[%s4 + $0x8c] sm:$0xf]
      %v2641 = vld [vmem:[%s4 + $0x90] sm:$0xf]
      %v2642 = vld [vmem:[%s4 + $0x94] sm:$0xf]
      %v2643 = vld [vmem:[%s4 + $0x98] sm:$0xf]
      %v2644 = vld [vmem:[%s4 + $0x9c] sm:$0xf]
      %v2645 = vld [vmem:[%s4 + $0xa0] sm:$0xf]
      %v2646 = vld [vmem:[%s4 + $0xa4] sm:$0xf]
      %v2647 = vld [vmem:[%s4 + $0xa8] sm:$0xf]
      %v2648 = vld [vmem:[%s4 + $0xac] sm:$0xf]
      %v2649 = vld [vmem:[%s4 + $0xb0] sm:$0xf]
      %v2650 = vld [vmem:[%s4 + $0xb4] sm:$0xf]
      %v2651 = vld [vmem:[%s4 + $0xb8] sm:$0xf]
      %v2652 = vld [vmem:[%s4 + $0xbc] sm:$0xf]
      %v2653 = vld [vmem:[#allocation2] sm:$0x80]
      %v2654 = vld [vmem:[#allocation2 + $0x20] sm:$0xff]
      %v2655 = vrot.slane %v2345, 1
      %v2656 = vor.u32 %v2342, %v2655
      %v2657 = vrot.slane %v2353, 1
      %v2658 = vsel %vm2550, %v2656, %v2657
      %v2659 = vor.u32 %v2350, %v2657
      %v2660 = vrot.slane %v2362, 1
      %v2661 = vsel %vm2550, %v2659, %v2660
      %v2662 = vor.u32 %v2359, %v2660
      %v2663 = vrot.slane %v2371, 1
      %v2664 = vsel %vm2550, %v2662, %v2663
      %v2665 = vor.u32 %v2368, %v2663
      %v2671 = vmul.bf16 %v2653, %v2655
      %v2672 = vmul.bf16 %v2221, %v2658
      %v2673 = vmul.bf16 %v2222, %v2661
      %v2674 = vmul.bf16 %v2223, %v2664
      %v2675 = vmul.bf16 %v2654, %v2665
      %v2676 = vld [vmem:[#allocation2 + $0x8] sm:$0xff]
      %v2677 = vld [vmem:[#allocation2 + $0x10] sm:$0xff]
      %v2678 = vld [vmem:[#allocation2 + $0x18] sm:$0xff]
      %v2679 = vld [vmem:[#allocation2 + $0x20] sm:$0xff]
      %v2680 = vld [vmem:[#allocation2 + $0x28] sm:$0x1]
      %vm2681 = vsmask.f32 256
      %v2682 = vrot.slane %v2506, 7
      %v2683 = vor.u32 %v2682, %v2509
      %v2684 = vrot.slane %v2514, 7
      %v2685 = vor.u32 %v2684, %v2517
      %v2686 = vsel %vm2681, %v2682, %v2685
      %v2687 = vrot.slane %v2523, 7
      %v2688 = vor.u32 %v2687, %v2526
      %v2689 = vsel %vm2681, %v2684, %v2688
      %v2690 = vrot.slane %v2532, 7
      %v2691 = vor.u32 %v2690, %v2535
      %v2692 = vsel %vm2681, %v2687, %v2691
      %v2698 = vmul.bf16 %v2676, %v2683
      %v2699 = vmul.bf16 %v2677, %v2686
      %v2700 = vmul.bf16 %v2678, %v2689
      %v2701 = vmul.bf16 %v2679, %v2692
      %v2702 = vmul.bf16 %v2680, %v2690
      %v2704 = vshll.u32 %v2654, 16
      %v2706 = vrot.slane %v2704, 1
      %v2707 = vsel %vm2550, %v2581, %v2706
      %v2708 = vshrl.u32 %v2654, 16
      %v2710 = vor.u32 %v2708, %v2706
      %v2716 = vrot.slane %v2698, 1
      %v2717 = vrot.slane %v2699, 1
      %v2718 = vsel %vm2595, %v2716, %v2717
      %v2719 = vrot.slane %v2700, 1
      %v2720 = vsel %vm2595, %v2717, %v2719
      %v2721 = vrot.slane %v2701, 1
      %v2722 = vsel %vm2595, %v2719, %v2721
      %v2723 = vrot.slane %v2702, 1
      %v2724 = vsel %vm2595, %v2721, %v2723
      %v2725 = vld [vmem:[%s4 + $0xc0] sm:$0xf]
      %v2726 = vld [vmem:[%s4 + $0xc4] sm:$0xf]
      %v2727 = vld [vmem:[%s4 + $0xc8] sm:$0xf]
      %v2728 = vld [vmem:[%s4 + $0xcc] sm:$0xf]
      %v2729 = vld [vmem:[%s4 + $0xd0] sm:$0xf]
      %v2730 = vld [vmem:[%s4 + $0xd4] sm:$0xf]
      %v2731 = vld [vmem:[%s4 + $0xd8] sm:$0xf]
      %v2732 = vld [vmem:[%s4 + $0xdc] sm:$0xf]
      %v2733 = vld [vmem:[%s4 + $0xe0] sm:$0xf]
      %v2734 = vld [vmem:[%s4 + $0xe4] sm:$0xf]
      %v2735 = vld [vmem:[%s4 + $0xe8] sm:$0xf]
      %v2736 = vld [vmem:[%s4 + $0xec] sm:$0xf]
      %v2737 = vld [vmem:[%s4 + $0xf0] sm:$0xf]
      %v2738 = vld [vmem:[%s4 + $0xf4] sm:$0xf]
      %v2739 = vld [vmem:[%s4 + $0xf8] sm:$0xf]
      %v2740 = vld [vmem:[%s4 + $0xfc] sm:$0xf]
      %v2741 = vld [vmem:[%s4 + $0x100] sm:$0xf]
      %v2742 = vld [vmem:[%s4 + $0x104] sm:$0xf]
      %v2743 = vld [vmem:[%s4 + $0x108] sm:$0xf]
      %v2744 = vld [vmem:[%s4 + $0x10c] sm:$0xf]
      %v2745 = vld [vmem:[%s4 + $0x110] sm:$0xf]
      %v2746 = vld [vmem:[%s4 + $0x114] sm:$0xf]
      %v2747 = vld [vmem:[%s4 + $0x118] sm:$0xf]
      %v2748 = vld [vmem:[%s4 + $0x11c] sm:$0xf]
      %v2749 = vld [vmem:[%s4 + $0x120] sm:$0xf]
      %v2750 = vld [vmem:[%s4 + $0x124] sm:$0xf]
      %v2751 = vld [vmem:[%s4 + $0x128] sm:$0xf]
      %v2752 = vld [vmem:[%s4 + $0x12c] sm:$0xf]
      %v2753 = vld [vmem:[%s4 + $0x130] sm:$0xf]
      %v2754 = vld [vmem:[%s4 + $0x134] sm:$0xf]
      %v2755 = vld [vmem:[%s4 + $0x138] sm:$0xf]
      %v2756 = vld [vmem:[%s4 + $0x13c] sm:$0xf]
      %v2757 = vld [vmem:[%s4 + $0x140] sm:$0xf]
      %v2758 = vld [vmem:[%s4 + $0x144] sm:$0xf]
      %v2759 = vld [vmem:[%s4 + $0x148] sm:$0xf]
      %v2760 = vld [vmem:[%s4 + $0x14c] sm:$0xf]
      %v2761 = vld [vmem:[%s4 + $0x150] sm:$0xf]
      %v2762 = vld [vmem:[%s4 + $0x154] sm:$0xf]
      %v2763 = vld [vmem:[%s4 + $0x158] sm:$0xf]
      %v2764 = vld [vmem:[%s4 + $0x15c] sm:$0xf]
      %v2765 = vld [vmem:[%s4 + $0x160] sm:$0xf]
      %v2766 = vld [vmem:[%s4 + $0x164] sm:$0xf]
      %v2767 = vld [vmem:[%s4 + $0x168] sm:$0xf]
      %v2768 = vld [vmem:[%s4 + $0x16c] sm:$0xf]
      %v2769 = vld [vmem:[%s4 + $0x170] sm:$0xf]
      %v2770 = vld [vmem:[%s4 + $0x174] sm:$0xf]
      %v2771 = vld [vmem:[%s4 + $0x178] sm:$0xf]
      %v2772 = vld [vmem:[%s4 + $0x17c] sm:$0xf]
      %v2774 = vshrl.u32 %v2671, 16
      %v2776 = vrot.slane %v2774, 7
      %v2778 = vshrl.u32 %v2672, 16
      %v2780 = vrot.slane %v2778, 7
      %v2781 = vshll.u32 %v2672, 16
      %v2783 = vor.u32 %v2780, %v2781
      %v2784 = vsel %vm2681, %v2776, %v2783
      %v2786 = vshrl.u32 %v2561, 16
      %v2788 = vrot.slane %v2786, 7
      %v2790 = vshrl.u32 %v2570, 16
      %v2792 = vrot.slane %v2790, 7
      %v2793 = vshll.u32 %v2570, 16
      %v2795 = vor.u32 %v2792, %v2793
      %v2796 = vsel %vm2681, %v2788, %v2795
      %v2798 = vshrl.u32 %v2716, 16
      %v2800 = vrot.slane %v2798, 7
      %v2802 = vshrl.u32 %v2718, 16
      %v2804 = vrot.slane %v2802, 7
      %v2805 = vshll.u32 %v2718, 16
      %v2807 = vor.u32 %v2804, %v2805
      %v2808 = vsel %vm2681, %v2800, %v2807
      %v2810 = vshrl.u32 %v2673, 16
      %v2812 = vrot.slane %v2810, 7
      %v2813 = vshll.u32 %v2673, 16
      %v2815 = vor.u32 %v2812, %v2813
      %v2816 = vsel %vm2681, %v2780, %v2815
      %v2818 = vshrl.u32 %v2578, 16
      %v2820 = vrot.slane %v2818, 7
      %v2821 = vshll.u32 %v2578, 16
      %v2823 = vor.u32 %v2820, %v2821
      %v2824 = vsel %vm2681, %v2792, %v2823
      %v2826 = vshrl.u32 %v2720, 16
      %v2828 = vrot.slane %v2826, 7
      %v2829 = vshll.u32 %v2720, 16
      %v2831 = vor.u32 %v2828, %v2829
      %v2832 = vsel %vm2681, %v2804, %v2831
      %v2834 = vshrl.u32 %v2674, 16
      %v2836 = vrot.slane %v2834, 7
      %v2837 = vshll.u32 %v2674, 16
      %v2839 = vor.u32 %v2836, %v2837
      %v2840 = vsel %vm2681, %v2812, %v2839
      %v2842 = vshrl.u32 %v2707, 16
      %v2844 = vrot.slane %v2842, 7
      %v2845 = vshll.u32 %v2707, 16
      %v2847 = vor.u32 %v2844, %v2845
      %v2848 = vsel %vm2681, %v2820, %v2847
      %v2850 = vshrl.u32 %v2722, 16
      %v2852 = vrot.slane %v2850, 7
      %v2853 = vshll.u32 %v2722, 16
      %v2855 = vor.u32 %v2852, %v2853
      %v2856 = vsel %vm2681, %v2828, %v2855
      %v2858 = vshrl.u32 %v2675, 16
      %v2860 = vrot.slane %v2858, 7
      %v2861 = vshll.u32 %v2675, 16
      %v2863 = vor.u32 %v2860, %v2861
      %v2864 = vsel %vm2681, %v2836, %v2863
      %v2866 = vshrl.u32 %v2710, 16
      %v2868 = vrot.slane %v2866, 7
      %v2869 = vshll.u32 %v2710, 16
      %v2871 = vor.u32 %v2868, %v2869
      %v2872 = vsel %vm2681, %v2844, %v2871
      %v2874 = vshrl.u32 %v2724, 16
      %v2876 = vrot.slane %v2874, 7
      %v2877 = vshll.u32 %v2724, 16
      %v2879 = vor.u32 %v2876, %v2877
      %v2880 = vsel %vm2681, %v2852, %v2879
      %v2941 = vunpack.c.l.b16 %v2725
      %v2942 = vunpack.c.l.b16 %v2726
      %v2943 = vunpack.c.l.b16 %v2727
      %v2944 = vunpack.c.l.b16 %v2728
      %v2945 = vunpack.c.l.b16 %v2729
      %v2946 = vunpack.c.l.b16 %v2730
      %v2947 = vunpack.c.l.b16 %v2731
      %v2948 = vunpack.c.l.b16 %v2732
      %v2949 = vunpack.c.l.b16 %v2733
      %v2950 = vunpack.c.l.b16 %v2734
      %v2951 = vunpack.c.l.b16 %v2735
      %v2952 = vunpack.c.l.b16 %v2736
      %v2953 = vunpack.c.l.b16 %v2737
      %v2954 = vunpack.c.l.b16 %v2738
      %v2955 = vunpack.c.l.b16 %v2739
      %v2956 = vunpack.c.l.b16 %v2740
      %v2957 = vunpack.c.l.b16 %v2741
      %v2958 = vunpack.c.l.b16 %v2742
      %v2959 = vunpack.c.l.b16 %v2743
      %v2960 = vunpack.c.l.b16 %v2744
      %v2961 = vunpack.c.l.b16 %v2745
      %v2962 = vunpack.c.l.b16 %v2746
      %v2963 = vunpack.c.l.b16 %v2747
      %v2964 = vunpack.c.l.b16 %v2748
      %v2965 = vunpack.c.l.b16 %v2749
      %v2966 = vunpack.c.l.b16 %v2750
      %v2967 = vunpack.c.l.b16 %v2751
      %v2968 = vunpack.c.l.b16 %v2752
      %v2969 = vunpack.c.l.b16 %v2753
      %v2970 = vunpack.c.l.b16 %v2754
      %v2971 = vunpack.c.l.b16 %v2755
      %v2972 = vunpack.c.l.b16 %v2756
      %v2973 = vunpack.c.l.b16 %v2757
      %v2974 = vunpack.c.l.b16 %v2758
      %v2975 = vunpack.c.l.b16 %v2759
      %v2976 = vunpack.c.l.b16 %v2760
      %v2977 = vunpack.c.l.b16 %v2761
      %v2978 = vunpack.c.l.b16 %v2762
      %v2979 = vunpack.c.l.b16 %v2763
      %v2980 = vunpack.c.l.b16 %v2764
      %v2981 = vunpack.c.l.b16 %v2765
      %v2982 = vunpack.c.l.b16 %v2766
      %v2983 = vunpack.c.l.b16 %v2767
      %v2984 = vunpack.c.l.b16 %v2768
      %v2985 = vunpack.c.l.b16 %v2769
      %v2986 = vunpack.c.l.b16 %v2770
      %v2987 = vunpack.c.l.b16 %v2771
      %v2988 = vunpack.c.l.b16 %v2772
      %v2989 = vpack.c.b16 %v2942, %v2941
      %v2990 = vpack.c.b16 %v2944, %v2943
      %v2991 = vpack.c.b16 %v2946, %v2945
      %v2992 = vpack.c.b16 %v2948, %v2947
      %v2993 = vpack.c.b16 %v2950, %v2949
      %v2994 = vpack.c.b16 %v2952, %v2951
      %v2995 = vpack.c.b16 %v2954, %v2953
      %v2996 = vpack.c.b16 %v2956, %v2955
      %v2997 = vpack.c.b16 %v2958, %v2957
      %v2998 = vpack.c.b16 %v2960, %v2959
      %v2999 = vpack.c.b16 %v2962, %v2961
      %v3000 = vpack.c.b16 %v2964, %v2963
      %v3001 = vpack.c.b16 %v2966, %v2965
      %v3002 = vpack.c.b16 %v2968, %v2967
      %v3003 = vpack.c.b16 %v2970, %v2969
      %v3004 = vpack.c.b16 %v2972, %v2971
      %v3005 = vpack.c.b16 %v2974, %v2973
      %v3006 = vpack.c.b16 %v2976, %v2975
      %v3007 = vpack.c.b16 %v2978, %v2977
      %v3008 = vpack.c.b16 %v2980, %v2979
      %v3009 = vpack.c.b16 %v2982, %v2981
      %v3010 = vpack.c.b16 %v2984, %v2983
      %v3011 = vpack.c.b16 %v2986, %v2985
      %v3012 = vpack.c.b16 %v2988, %v2987
      %3037 = vmatprep.subr.bf16.mxu0 0
      %3038 = vmatpush1.bf16.msra.mxu0 %v2989
      %3039 = vmatprep.subr.bf16.mxu0 0
      %3040 = vmatpush1.bf16.msra.mxu0 %v2990
      %3041 = vmatprep.subr.bf16.mxu0 0
      %3042 = vmatpush1.bf16.msra.mxu0 %v2991
      %3043 = vmatprep.subr.bf16.mxu0 0
      %3044 = vmatpush1.bf16.msra.mxu0 %v2992
      %3045 = vmatprep.subr.bf16.mxu0 0
      %3046 = vmatpush1.bf16.msra.mxu0 %v2993
      %3047 = vmatprep.subr.bf16.mxu0 0
      %3048 = vmatpush1.bf16.msra.mxu0 %v2994
      %3049 = vmatprep.subr.bf16.mxu0 0
      %3050 = vmatpush1.bf16.msra.mxu0 %v2995
      %3051 = vmatprep.subr.bf16.mxu0 0
      %3052 = vmatpush1.bf16.msra.mxu0 %v2996
      %3053 = vmatprep.subr.bf16.mxu0 0
      %3054 = vmatpush1.bf16.msra.mxu0 %v2997
      %3055 = vmatprep.subr.bf16.mxu0 0
      %3056 = vmatpush1.bf16.msra.mxu0 %v2998
      %3057 = vmatprep.subr.bf16.mxu0 0
      %3058 = vmatpush1.bf16.msra.mxu0 %v2999
      %3059 = vmatprep.subr.bf16.mxu0 0
      %3060 = vmatpush1.bf16.msra.mxu0 %v3000
      %3061 = vmatprep.subr.bf16.mxu0 0
      %3062 = vmatpush1.bf16.msra.mxu0 %v3001
      %3063 = vmatprep.subr.bf16.mxu0 0
      %3064 = vmatpush1.bf16.msra.mxu0 %v3002
      %3065 = vmatprep.subr.bf16.mxu0 0
      %3066 = vmatpush1.bf16.msra.mxu0 %v3003
      %3067 = vmatprep.subr.bf16.mxu0 0
      %3068 = vmatpush1.bf16.msra.mxu0 %v3004
      %3069 = vmatprep.mubr.bf16.mxu0 %v2796
      %3070 = vmatmul.mubr.bf16.gmra.mrb[0].mxu0 %v2784
      %v3071 = vpop.f32.mrb[0].mxu0
      %v3072 = vadd.f32 0.0, %v3071
      %v3073 = vpop.f32.mrb[0].mxu0
      %v3074 = vpop.f32.mrb[0].mxu0
      %v3075 = vadd.f32 0.0, %v3074
      %v3076 = vpop.f32.mrb[0].mxu0
      %3077 = vmatprep.mubr.bf16.mxu0 %v2824
      %3078 = vmatmul.mubr.bf16.gmra.mrb[0].mxu0 %v2816
      %v3079 = vpop.f32.mrb[0].mxu0
      %v3080 = vadd.f32 0.0, %v3079
      %v3081 = vpop.f32.mrb[0].mxu0
      %v3082 = vpop.f32.mrb[0].mxu0
      %v3083 = vadd.f32 0.0, %v3082
      %v3084 = vpop.f32.mrb[0].mxu0
      %3085 = vmatprep.mubr.bf16.mxu0 %v2848
      %3086 = vmatmul.mubr.bf16.gmra.mrb[0].mxu0 %v2840
      %v3087 = vpop.f32.mrb[0].mxu0
      %v3088 = vadd.f32 0.0, %v3087
      %v3089 = vpop.f32.mrb[0].mxu0
      %v3090 = vpop.f32.mrb[0].mxu0
      %v3091 = vadd.f32 0.0, %v3090
      %v3092 = vpop.f32.mrb[0].mxu0
      %3093 = vmatprep.mubr.bf16.mxu0 %v2872
      %3094 = vmatmul.mubr.bf16.gmra.mrb[0].mxu0 %v2864
      %v3095 = vpop.f32.mrb[0].mxu0
      %v3096 = vadd.f32 0.0, %v3095
      %v3097 = vpop.f32.mrb[0].mxu0
      %v3098 = vpop.f32.mrb[0].mxu0
      %v3099 = vadd.f32 0.0, %v3098
      %v3100 = vpop.f32.mrb[0].mxu0
      %3101 = vdwg.mxu0
      %3102 = vmatprep.subr.bf16.mxu0 0
      %3103 = vmatpush1.bf16.msra.mxu0 %v3005
      %3104 = vmatprep.subr.bf16.mxu0 0
      %3105 = vmatpush1.bf16.msra.mxu0 %v3006
      %3106 = vmatprep.subr.bf16.mxu0 0
      %3107 = vmatpush1.bf16.msra.mxu0 %v3007
      %3108 = vmatprep.subr.bf16.mxu0 0
      %3109 = vmatpush1.bf16.msra.mxu0 %v3008
      %3110 = vmatprep.subr.bf16.mxu0 0
      %3111 = vmatpush1.bf16.msra.mxu0 %v3009
      %3112 = vmatprep.subr.bf16.mxu0 0
      %3113 = vmatpush1.bf16.msra.mxu0 %v3010
      %3114 = vmatprep.subr.bf16.mxu0 0
      %3115 = vmatpush1.bf16.msra.mxu0 %v3011
      %3116 = vmatprep.subr.bf16.mxu0 0
      %3117 = vmatpush1.bf16.msra.mxu0 %v3012
      %3118 = vmatprep.subr.bf16.mxu0 0
      %3119 = vmatpush1.bf16.msra.mxu0 0
      %3120 = vmatprep.subr.bf16.mxu0 0
      %3121 = vmatpush1.bf16.msra.mxu0 0
      %3122 = vmatprep.subr.bf16.mxu0 0
      %3123 = vmatpush1.bf16.msra.mxu0 0
      %3124 = vmatprep.subr.bf16.mxu0 0
      %3125 = vmatpush1.bf16.msra.mxu0 0
      %3126 = vmatprep.subr.bf16.mxu0 0
      %3127 = vmatpush1.bf16.msra.mxu0 0
      %3128 = vmatprep.subr.bf16.mxu0 0
      %3129 = vmatpush1.bf16.msra.mxu0 0
      %3130 = vmatprep.subr.bf16.mxu0 0
      %3131 = vmatpush1.bf16.msra.mxu0 0
      %3132 = vmatprep.subr.bf16.mxu0 0
      %3133 = vmatpush1.bf16.msra.mxu0 0
      %3134 = vmatprep.mubr.bf16.mxu0 0
      %3135 = vmatmul.mubr.bf16.gmra.mrb[0].mxu0 %v2808
      %v3136 = vpop.f32.mrb[0].mxu0
      %v3137 = vadd.f32 %v3072, %v3136
      %v3138 = vpop.f32.mrb[0].mxu0
      %v3139 = vpop.f32.mrb[0].mxu0
      %v3140 = vadd.f32 %v3075, %v3139
      %v3141 = vpop.f32.mrb[0].mxu0
      %3142 = vmatprep.mubr.bf16.mxu0 0
      %3143 = vmatmul.mubr.bf16.gmra.mrb[0].mxu0 %v2832
      %v3144 = vpop.f32.mrb[0].mxu0
      %v3145 = vadd.f32 %v3080, %v3144
      %v3146 = vpop.f32.mrb[0].mxu0
      %v3147 = vpop.f32.mrb[0].mxu0
      %v3148 = vadd.f32 %v3083, %v3147
      %v3149 = vpop.f32.mrb[0].mxu0
      %3150 = vmatprep.mubr.bf16.mxu0 0
      %3151 = vmatmul.mubr.bf16.gmra.mrb[0].mxu0 %v2856
      %v3152 = vpop.f32.mrb[0].mxu0
      %v3153 = vadd.f32 %v3088, %v3152
      %v3154 = vpop.f32.mrb[0].mxu0
      %v3155 = vpop.f32.mrb[0].mxu0
      %v3156 = vadd.f32 %v3091, %v3155
      %v3157 = vpop.f32.mrb[0].mxu0
      %3158 = vmatprep.mubr.bf16.mxu0 0
      %3159 = vmatmul.mubr.bf16.gmra.mrb[0].mxu0 %v2880
      %v3160 = vpop.f32.mrb[0].mxu0
      %v3161 = vadd.f32 %v3096, %v3160
      %v3162 = vpop.f32.mrb[0].mxu0
      %v3163 = vpop.f32.mrb[0].mxu0
      %v3164 = vadd.f32 %v3099, %v3163
      %v3165 = vpop.f32.mrb[0].mxu0
      %3166 = vdwg.mxu0
      %v3168 = vshrl.u32 %v2381, 16
      %v3170 = vrot.slane %v3168, 3
      %v3171 = vshll.u32 %v2381, 16
      %v3173 = vrot.slane %v3171, 4
      %v3174 = vor.u32 %v3170, %v3173
      %v3176 = vshrl.u32 %v2382, 16
      %v3178 = vrot.slane %v3176, 3
      %v3179 = vshll.u32 %v2382, 16
      %v3181 = vrot.slane %v3179, 4
      %v3182 = vor.u32 %v3178, %v3181
      %v3183 = vsel %vm2504, %v3174, %v3182
      %v3185 = vshrl.u32 %v2562, 16
      %v3187 = vrot.slane %v3185, 3
      %v3188 = vshll.u32 %v2562, 16
      %v3190 = vrot.slane %v3188, 4
      %v3191 = vor.u32 %v3187, %v3190
      %v3192 = vrot.slane %v2790, 3
      %v3193 = vrot.slane %v2793, 4
      %v3194 = vor.u32 %v3192, %v3193
      %v3195 = vsel %vm2504, %v3191, %v3194
      %v3197 = vshrl.u32 %v2598, 16
      %v3199 = vrot.slane %v3197, 3
      %v3200 = vshll.u32 %v2598, 16
      %v3202 = vrot.slane %v3200, 4
      %v3203 = vor.u32 %v3199, %v3202
      %v3205 = vshrl.u32 %v2600, 16
      %v3207 = vrot.slane %v3205, 3
      %v3208 = vshll.u32 %v2600, 16
      %v3210 = vrot.slane %v3208, 4
      %v3211 = vor.u32 %v3207, %v3210
      %v3212 = vsel %vm2504, %v3203, %v3211
      %v3214 = vshrl.u32 %v2383, 16
      %v3216 = vrot.slane %v3214, 3
      %v3217 = vshll.u32 %v2383, 16
      %v3219 = vrot.slane %v3217, 4
      %v3220 = vor.u32 %v3216, %v3219
      %v3221 = vsel %vm2504, %v3182, %v3220
      %v3222 = vrot.slane %v2818, 3
      %v3223 = vrot.slane %v2821, 4
      %v3224 = vor.u32 %v3222, %v3223
      %v3225 = vsel %vm2504, %v3194, %v3224
      %v3227 = vshrl.u32 %v2602, 16
      %v3229 = vrot.slane %v3227, 3
      %v3230 = vshll.u32 %v2602, 16
      %v3232 = vrot.slane %v3230, 4
      %v3233 = vor.u32 %v3229, %v3232
      %v3234 = vsel %vm2504, %v3211, %v3233
      %v3236 = vshrl.u32 %v2384, 16
      %v3238 = vrot.slane %v3236, 3
      %v3239 = vshll.u32 %v2384, 16
      %v3241 = vrot.slane %v3239, 4
      %v3242 = vor.u32 %v3238, %v3241
      %v3243 = vsel %vm2504, %v3220, %v3242
      %v3245 = vshrl.u32 %v2586, 16
      %v3247 = vrot.slane %v3245, 3
      %v3248 = vshll.u32 %v2586, 16
      %v3250 = vrot.slane %v3248, 4
      %v3251 = vor.u32 %v3247, %v3250
      %v3252 = vsel %vm2504, %v3224, %v3251
      %v3254 = vshrl.u32 %v2604, 16
      %v3256 = vrot.slane %v3254, 3
      %v3257 = vshll.u32 %v2604, 16
      %v3259 = vrot.slane %v3257, 4
      %v3260 = vor.u32 %v3256, %v3259
      %v3261 = vsel %vm2504, %v3233, %v3260
      %v3263 = vshrl.u32 %v2385, 16
      %v3265 = vrot.slane %v3263, 3
      %v3266 = vshll.u32 %v2385, 16
      %v3268 = vrot.slane %v3266, 4
      %v3269 = vor.u32 %v3265, %v3268
      %v3270 = vsel %vm2504, %v3242, %v3269
      %v3272 = vshrl.u32 %v2589, 16
      %v3274 = vrot.slane %v3272, 3
      %v3275 = vshll.u32 %v2589, 16
      %v3277 = vrot.slane %v3275, 4
      %v3278 = vor.u32 %v3274, %v3277
      %v3279 = vsel %vm2504, %v3251, %v3278
      %v3281 = vshrl.u32 %v2603, 16
      %v3283 = vrot.slane %v3281, 3
      %v3284 = vshll.u32 %v2603, 16
      %v3286 = vrot.slane %v3284, 4
      %v3287 = vor.u32 %v3283, %v3286
      %v3288 = vsel %vm2504, %v3260, %v3287
      %v3349 = vunpack.c.l.b16 %v2605
      %v3350 = vunpack.c.l.b16 %v2606
      %v3351 = vunpack.c.l.b16 %v2607
      %v3352 = vunpack.c.l.b16 %v2608
      %v3353 = vunpack.c.l.b16 %v2609
      %v3354 = vunpack.c.l.b16 %v2610
      %v3355 = vunpack.c.l.b16 %v2611
      %v3356 = vunpack.c.l.b16 %v2612
      %v3357 = vunpack.c.l.b16 %v2613
      %v3358 = vunpack.c.l.b16 %v2614
      %v3359 = vunpack.c.l.b16 %v2615
      %v3360 = vunpack.c.l.b16 %v2616
      %v3361 = vunpack.c.l.b16 %v2617
      %v3362 = vunpack.c.l.b16 %v2618
      %v3363 = vunpack.c.l.b16 %v2619
      %v3364 = vunpack.c.l.b16 %v2620
      %v3365 = vunpack.c.l.b16 %v2621
      %v3366 = vunpack.c.l.b16 %v2622
      %v3367 = vunpack.c.l.b16 %v2623
      %v3368 = vunpack.c.l.b16 %v2624
      %v3369 = vunpack.c.l.b16 %v2625
      %v3370 = vunpack.c.l.b16 %v2626
      %v3371 = vunpack.c.l.b16 %v2627
      %v3372 = vunpack.c.l.b16 %v2628
      %v3373 = vunpack.c.l.b16 %v2629
      %v3374 = vunpack.c.l.b16 %v2630
      %v3375 = vunpack.c.l.b16 %v2631
      %v3376 = vunpack.c.l.b16 %v2632
      %v3377 = vunpack.c.l.b16 %v2633
      %v3378 = vunpack.c.l.b16 %v2634
      %v3379 = vunpack.c.l.b16 %v2635
      %v3380 = vunpack.c.l.b16 %v2636
      %v3381 = vunpack.c.l.b16 %v2637
      %v3382 = vunpack.c.l.b16 %v2638
      %v3383 = vunpack.c.l.b16 %v2639
      %v3384 = vunpack.c.l.b16 %v2640
      %v3385 = vunpack.c.l.b16 %v2641
      %v3386 = vunpack.c.l.b16 %v2642
      %v3387 = vunpack.c.l.b16 %v2643
      %v3388 = vunpack.c.l.b16 %v2644
      %v3389 = vunpack.c.l.b16 %v2645
      %v3390 = vunpack.c.l.b16 %v2646
      %v3391 = vunpack.c.l.b16 %v2647
      %v3392 = vunpack.c.l.b16 %v2648
      %v3393 = vunpack.c.l.b16 %v2649
      %v3394 = vunpack.c.l.b16 %v2650
      %v3395 = vunpack.c.l.b16 %v2651
      %v3396 = vunpack.c.l.b16 %v2652
      %v3397 = vpack.c.b16 %v3350, %v3349
      %v3398 = vpack.c.b16 %v3352, %v3351
      %v3399 = vpack.c.b16 %v3354, %v3353
      %v3400 = vpack.c.b16 %v3356, %v3355
      %v3401 = vpack.c.b16 %v3358, %v3357
      %v3402 = vpack.c.b16 %v3360, %v3359
      %v3403 = vpack.c.b16 %v3362, %v3361
      %v3404 = vpack.c.b16 %v3364, %v3363
      %v3405 = vpack.c.b16 %v3366, %v3365
      %v3406 = vpack.c.b16 %v3368, %v3367
      %v3407 = vpack.c.b16 %v3370, %v3369
      %v3408 = vpack.c.b16 %v3372, %v3371
      %v3409 = vpack.c.b16 %v3374, %v3373
      %v3410 = vpack.c.b16 %v3376, %v3375
      %v3411 = vpack.c.b16 %v3378, %v3377
      %v3412 = vpack.c.b16 %v3380, %v3379
      %v3413 = vpack.c.b16 %v3382, %v3381
      %v3414 = vpack.c.b16 %v3384, %v3383
      %v3415 = vpack.c.b16 %v3386, %v3385
      %v3416 = vpack.c.b16 %v3388, %v3387
      %v3417 = vpack.c.b16 %v3390, %v3389
      %v3418 = vpack.c.b16 %v3392, %v3391
      %v3419 = vpack.c.b16 %v3394, %v3393
      %v3420 = vpack.c.b16 %v3396, %v3395
      %3445 = vmatprep.subr.bf16.mxu0 0
      %3446 = vmatpush1.bf16.msra.mxu0 %v3397
      %3447 = vmatprep.subr.bf16.mxu0 0
      %3448 = vmatpush1.bf16.msra.mxu0 %v3398
      %3449 = vmatprep.subr.bf16.mxu0 0
      %3450 = vmatpush1.bf16.msra.mxu0 %v3399
      %3451 = vmatprep.subr.bf16.mxu0 0
      %3452 = vmatpush1.bf16.msra.mxu0 %v3400
      %3453 = vmatprep.subr.bf16.mxu0 0
      %3454 = vmatpush1.bf16.msra.mxu0 %v3401
      %3455 = vmatprep.subr.bf16.mxu0 0
      %3456 = vmatpush1.bf16.msra.mxu0 %v3402
      %3457 = vmatprep.subr.bf16.mxu0 0
      %3458 = vmatpush1.bf16.msra.mxu0 %v3403
      %3459 = vmatprep.subr.bf16.mxu0 0
      %3460 = vmatpush1.bf16.msra.mxu0 %v3404
      %3461 = vmatprep.subr.bf16.mxu0 0
      %3462 = vmatpush1.bf16.msra.mxu0 %v3405
      %3463 = vmatprep.subr.bf16.mxu0 0
      %3464 = vmatpush1.bf16.msra.mxu0 %v3406
      %3465 = vmatprep.subr.bf16.mxu0 0
      %3466 = vmatpush1.bf16.msra.mxu0 %v3407
      %3467 = vmatprep.subr.bf16.mxu0 0
      %3468 = vmatpush1.bf16.msra.mxu0 %v3408
      %3469 = vmatprep.subr.bf16.mxu0 0
      %3470 = vmatpush1.bf16.msra.mxu0 %v3409
      %3471 = vmatprep.subr.bf16.mxu0 0
      %3472 = vmatpush1.bf16.msra.mxu0 %v3410
      %3473 = vmatprep.subr.bf16.mxu0 0
      %3474 = vmatpush1.bf16.msra.mxu0 %v3411
      %3475 = vmatprep.subr.bf16.mxu0 0
      %3476 = vmatpush1.bf16.msra.mxu0 %v3412
      %3477 = vmatprep.mubr.bf16.mxu0 %v3195
      %3478 = vmatmul.mubr.bf16.gmra.mrb[0].mxu0 %v3183
      %v3479 = vpop.f32.mrb[0].mxu0
      %v3480 = vadd.f32 %v3137, %v3479
      %v3481 = vpop.f32.mrb[0].mxu0
      %v3482 = vpop.f32.mrb[0].mxu0
      %v3483 = vadd.f32 %v3140, %v3482
      %v3484 = vpop.f32.mrb[0].mxu0
      %3485 = vmatprep.mubr.bf16.mxu0 %v3225
      %3486 = vmatmul.mubr.bf16.gmra.mrb[0].mxu0 %v3221
      %v3487 = vpop.f32.mrb[0].mxu0
      %v3488 = vadd.f32 %v3145, %v3487
      %v3489 = vpop.f32.mrb[0].mxu0
      %v3490 = vpop.f32.mrb[0].mxu0
      %v3491 = vadd.f32 %v3148, %v3490
      %v3492 = vpop.f32.mrb[0].mxu0
      %3493 = vmatprep.mubr.bf16.mxu0 %v3252
      %3494 = vmatmul.mubr.bf16.gmra.mrb[0].mxu0 %v3243
      %v3495 = vpop.f32.mrb[0].mxu0
      %v3496 = vadd.f32 %v3153, %v3495
      %v3497 = vpop.f32.mrb[0].mxu0
      %v3498 = vpop.f32.mrb[0].mxu0
      %v3499 = vadd.f32 %v3156, %v3498
      %v3500 = vpop.f32.mrb[0].mxu0
      %3501 = vmatprep.mubr.bf16.mxu0 %v3279
      %3502 = vmatmul.mubr.bf16.gmra.mrb[0].mxu0 %v3270
      %v3503 = vpop.f32.mrb[0].mxu0
      %v3504 = vadd.f32 %v3161, %v3503
      %v3505 = vpop.f32.mrb[0].mxu0
      %v3506 = vpop.f32.mrb[0].mxu0
      %v3507 = vadd.f32 %v3164, %v3506
      %v3508 = vpop.f32.mrb[0].mxu0
      %3509 = vdwg.mxu0
      %3510 = vmatprep.subr.bf16.mxu0 0
      %3511 = vmatpush1.bf16.msra.mxu0 %v3413
      %3512 = vmatprep.subr.bf16.mxu0 0
      %3513 = vmatpush1.bf16.msra.mxu0 %v3414
      %3514 = vmatprep.subr.bf16.mxu0 0
      %3515 = vmatpush1.bf16.msra.mxu0 %v3415
      %3516 = vmatprep.subr.bf16.mxu0 0
      %3517 = vmatpush1.bf16.msra.mxu0 %v3416
      %3518 = vmatprep.subr.bf16.mxu0 0
      %3519 = vmatpush1.bf16.msra.mxu0 %v3417
      %3520 = vmatprep.subr.bf16.mxu0 0
      %3521 = vmatpush1.bf16.msra.mxu0 %v3418
      %3522 = vmatprep.subr.bf16.mxu0 0
      %3523 = vmatpush1.bf16.msra.mxu0 %v3419
      %3524 = vmatprep.subr.bf16.mxu0 0
      %3525 = vmatpush1.bf16.msra.mxu0 %v3420
      %3526 = vmatprep.subr.bf16.mxu0 0
      %3527 = vmatpush1.bf16.msra.mxu0 0
      %3528 = vmatprep.subr.bf16.mxu0 0
      %3529 = vmatpush1.bf16.msra.mxu0 0
      %3530 = vmatprep.subr.bf16.mxu0 0
      %3531 = vmatpush1.bf16.msra.mxu0 0
      %3532 = vmatprep.subr.bf16.mxu0 0
      %3533 = vmatpush1.bf16.msra.mxu0 0
      %3534 = vmatprep.subr.bf16.mxu0 0
      %3535 = vmatpush1.bf16.msra.mxu0 0
      %3536 = vmatprep.subr.bf16.mxu0 0
      %3537 = vmatpush1.bf16.msra.mxu0 0
      %3538 = vmatprep.subr.bf16.mxu0 0
      %3539 = vmatpush1.bf16.msra.mxu0 0
      %3540 = vmatprep.subr.bf16.mxu0 0
      %3541 = vmatpush1.bf16.msra.mxu0 0
      %3542 = vmatprep.mubr.bf16.mxu0 0
      %3543 = vmatmul.mubr.bf16.gmra.mrb[0].mxu0 %v3212
      %v3544 = vpop.f32.mrb[0].mxu0
      %v3545 = vadd.f32 %v3480, %v3544
      %v3546 = vpop.f32.mrb[0].mxu0
      %v3547 = vpop.f32.mrb[0].mxu0
      %v3548 = vadd.f32 %v3483, %v3547
      %v3549 = vpop.f32.mrb[0].mxu0
      %3550 = vmatprep.mubr.bf16.mxu0 0
      %3551 = vmatmul.mubr.bf16.gmra.mrb[0].mxu0 %v3234
      %v3552 = vpop.f32.mrb[0].mxu0
      %v3553 = vadd.f32 %v3488, %v3552
      %v3554 = vpop.f32.mrb[0].mxu0
      %v3555 = vpop.f32.mrb[0].mxu0
      %v3556 = vadd.f32 %v3491, %v3555
      %v3557 = vpop.f32.mrb[0].mxu0
      %3558 = vmatprep.mubr.bf16.mxu0 0
      %3559 = vmatmul.mubr.bf16.gmra.mrb[0].mxu0 %v3261
      %v3560 = vpop.f32.mrb[0].mxu0
      %v3561 = vadd.f32 %v3496, %v3560
      %v3562 = vpop.f32.mrb[0].mxu0
      %v3563 = vpop.f32.mrb[0].mxu0
      %v3564 = vadd.f32 %v3499, %v3563
      %v3565 = vpop.f32.mrb[0].mxu0
      %3566 = vmatprep.mubr.bf16.mxu0 0
      %3567 = vmatmul.mubr.bf16.gmra.mrb[0].mxu0 %v3288
      %v3568 = vpop.f32.mrb[0].mxu0
      %v3569 = vadd.f32 %v3504, %v3568
      %v3570 = vpop.f32.mrb[0].mxu0
      %v3571 = vpop.f32.mrb[0].mxu0
      %v3572 = vadd.f32 %v3507, %v3571
      %v3573 = vpop.f32.mrb[0].mxu0
      %3574 = vdwg.mxu0
      %v3575 = vld [vmem:[#allocation2 + $0x8] sm:$0xf8]
      %v3576 = vld [vmem:[#allocation2 + $0x28] sm:$0xf]
      %v3577 = vmul.bf16 %v3575, %v2348
      %v3578 = vmul.bf16 %v2677, %v2357
      %v3579 = vmul.bf16 %v2678, %v2366
      %v3580 = vmul.bf16 %v2679, %v2375
      %v3581 = vmul.bf16 %v3576, %v2374
      %v3582 = vld [vmem:[#allocation2 + $0x8] sm:$0xf0]
      %v3583 = vld [vmem:[#allocation2 + $0x28] sm:$0x1f]
      %v3584 = vmul.bf16 %v3582, %v2512
      %v3585 = vmul.bf16 %v2677, %v2521
      %v3586 = vmul.bf16 %v2678, %v2530
      %v3587 = vmul.bf16 %v2679, %v2539
      %v3588 = vmul.bf16 %v3583, %v2538
      %v3590 = vshrl.u32 %v3582, 16
      %v3592 = vshll.u32 %v3582, 16
      %v3594 = vrot.slane %v3592, 1
      %v3595 = vor.u32 %v3590, %v3594
      %v3597 = vshll.u32 %v2677, 16
      %v3599 = vrot.slane %v3597, 1
      %v3600 = vsel %vm2550, %v3595, %v3599
      %v3601 = vshrl.u32 %v2677, 16
      %v3603 = vor.u32 %v3601, %v3599
      %v3605 = vshll.u32 %v2678, 16
      %v3607 = vrot.slane %v3605, 1
      %v3608 = vsel %vm2550, %v3603, %v3607
      %v3609 = vshrl.u32 %v2678, 16
      %v3611 = vor.u32 %v3609, %v3607
      %v3613 = vshll.u32 %v2679, 16
      %v3615 = vrot.slane %v3613, 1
      %v3616 = vsel %vm2550, %v3611, %v3615
      %v3617 = vshrl.u32 %v2679, 16
      %v3619 = vor.u32 %v3617, %v3615
      %v3621 = vshll.u32 %v3576, 16
      %v3623 = vrot.slane %v3621, 1
      %v3624 = vsel %vm2550, %v3619, %v3623
      %v3625 = vshrl.u32 %v3576, 16
      %v3627 = vor.u32 %v3625, %v3623
      %v3633 = vrot.slane %v3584, 1
      %v3634 = vrot.slane %v3585, 1
      %v3635 = vsel %vm2595, %v3633, %v3634
      %v3636 = vrot.slane %v3586, 1
      %v3637 = vsel %vm2595, %v3634, %v3636
      %v3638 = vrot.slane %v3587, 1
      %v3639 = vsel %vm2595, %v3636, %v3638
      %v3640 = vrot.slane %v3588, 1
      %v3641 = vsel %vm2595, %v3638, %v3640
      %v3642 = vld [vmem:[%s4 + $0x180] sm:$0xf]
      %v3643 = vld [vmem:[%s4 + $0x184] sm:$0xf]
      %v3644 = vld [vmem:[%s4 + $0x188] sm:$0xf]
      %v3645 = vld [vmem:[%s4 + $0x18c] sm:$0xf]
      %v3646 = vld [vmem:[%s4 + $0x190] sm:$0xf]
      %v3647 = vld [vmem:[%s4 + $0x194] sm:$0xf]
      %v3648 = vld [vmem:[%s4 + $0x198] sm:$0xf]
      %v3649 = vld [vmem:[%s4 + $0x19c] sm:$0xf]
      %v3650 = vld [vmem:[%s4 + $0x1a0] sm:$0xf]
      %v3651 = vld [vmem:[%s4 + $0x1a4] sm:$0xf]
      %v3652 = vld [vmem:[%s4 + $0x1a8] sm:$0xf]
      %v3653 = vld [vmem:[%s4 + $0x1ac] sm:$0xf]
      %v3654 = vld [vmem:[%s4 + $0x1b0] sm:$0xf]
      %v3655 = vld [vmem:[%s4 + $0x1b4] sm:$0xf]
      %v3656 = vld [vmem:[%s4 + $0x1b8] sm:$0xf]
      %v3657 = vld [vmem:[%s4 + $0x1bc] sm:$0xf]
      %v3658 = vld [vmem:[%s4 + $0x1c0] sm:$0xf]
      %v3659 = vld [vmem:[%s4 + $0x1c4] sm:$0xf]
      %v3660 = vld [vmem:[%s4 + $0x1c8] sm:$0xf]
      %v3661 = vld [vmem:[%s4 + $0x1cc] sm:$0xf]
      %v3662 = vld [vmem:[%s4 + $0x1d0] sm:$0xf]
      %v3663 = vld [vmem:[%s4 + $0x1d4] sm:$0xf]
      %v3664 = vld [vmem:[%s4 + $0x1d8] sm:$0xf]
      %v3665 = vld [vmem:[%s4 + $0x1dc] sm:$0xf]
      %v3666 = vld [vmem:[%s4 + $0x1e0] sm:$0xf]
      %v3667 = vld [vmem:[%s4 + $0x1e4] sm:$0xf]
      %v3668 = vld [vmem:[%s4 + $0x1e8] sm:$0xf]
      %v3669 = vld [vmem:[%s4 + $0x1ec] sm:$0xf]
      %v3670 = vld [vmem:[%s4 + $0x1f0] sm:$0xf]
      %v3671 = vld [vmem:[%s4 + $0x1f4] sm:$0xf]
      %v3672 = vld [vmem:[%s4 + $0x1f8] sm:$0xf]
      %v3673 = vld [vmem:[%s4 + $0x1fc] sm:$0xf]
      %v3674 = vld [vmem:[%s4 + $0x200] sm:$0xf]
      %v3675 = vld [vmem:[%s4 + $0x204] sm:$0xf]
      %v3676 = vld [vmem:[%s4 + $0x208] sm:$0xf]
      %v3677 = vld [vmem:[%s4 + $0x20c] sm:$0xf]
      %v3678 = vld [vmem:[%s4 + $0x210] sm:$0xf]
      %v3679 = vld [vmem:[%s4 + $0x214] sm:$0xf]
      %v3680 = vld [vmem:[%s4 + $0x218] sm:$0xf]
      %v3681 = vld [vmem:[%s4 + $0x21c] sm:$0xf]
      %v3682 = vld [vmem:[%s4 + $0x220] sm:$0xf]
      %v3683 = vld [vmem:[%s4 + $0x224] sm:$0xf]
      %v3684 = vld [vmem:[%s4 + $0x228] sm:$0xf]
      %v3685 = vld [vmem:[%s4 + $0x22c] sm:$0xf]
      %v3686 = vld [vmem:[%s4 + $0x230] sm:$0xf]
      %v3687 = vld [vmem:[%s4 + $0x234] sm:$0xf]
      %v3688 = vld [vmem:[%s4 + $0x238] sm:$0xf]
      %v3689 = vld [vmem:[%s4 + $0x23c] sm:$0xf]
      %v3691 = vshrl.u32 %v3577, 16
      %v3693 = vrot.slane %v3691, 3
      %v3694 = vshll.u32 %v3577, 16
      %v3696 = vrot.slane %v3694, 4
      %v3697 = vor.u32 %v3693, %v3696
      %v3699 = vshrl.u32 %v3578, 16
      %v3701 = vrot.slane %v3699, 3
      %v3702 = vshll.u32 %v3578, 16
      %v3704 = vrot.slane %v3702, 4
      %v3705 = vor.u32 %v3701, %v3704
      %v3706 = vsel %vm2504, %v3697, %v3705
      %v3708 = vshrl.u32 %v3600, 16
      %v3710 = vrot.slane %v3708, 3
      %v3711 = vshll.u32 %v3600, 16
      %v3713 = vrot.slane %v3711, 4
      %v3714 = vor.u32 %v3710, %v3713
      %v3716 = vshrl.u32 %v3608, 16
      %v3718 = vrot.slane %v3716, 3
      %v3719 = vshll.u32 %v3608, 16
      %v3721 = vrot.slane %v3719, 4
      %v3722 = vor.u32 %v3718, %v3721
      %v3723 = vsel %vm2504, %v3714, %v3722
      %v3725 = vshrl.u32 %v3635, 16
      %v3727 = vrot.slane %v3725, 3
      %v3728 = vshll.u32 %v3635, 16
      %v3730 = vrot.slane %v3728, 4
      %v3731 = vor.u32 %v3727, %v3730
      %v3733 = vshrl.u32 %v3637, 16
      %v3735 = vrot.slane %v3733, 3
      %v3736 = vshll.u32 %v3637, 16
      %v3738 = vrot.slane %v3736, 4
      %v3739 = vor.u32 %v3735, %v3738
      %v3740 = vsel %vm2504, %v3731, %v3739
      %v3742 = vshrl.u32 %v3579, 16
      %v3744 = vrot.slane %v3742, 3
      %v3745 = vshll.u32 %v3579, 16
      %v3747 = vrot.slane %v3745, 4
      %v3748 = vor.u32 %v3744, %v3747
      %v3749 = vsel %vm2504, %v3705, %v3748
      %v3751 = vshrl.u32 %v3616, 16
      %v3753 = vrot.slane %v3751, 3
      %v3754 = vshll.u32 %v3616, 16
      %v3756 = vrot.slane %v3754, 4
      %v3757 = vor.u32 %v3753, %v3756
      %v3758 = vsel %vm2504, %v3722, %v3757
      %v3760 = vshrl.u32 %v3639, 16
      %v3762 = vrot.slane %v3760, 3
      %v3763 = vshll.u32 %v3639, 16
      %v3765 = vrot.slane %v3763, 4
      %v3766 = vor.u32 %v3762, %v3765
      %v3767 = vsel %vm2504, %v3739, %v3766
      %v3769 = vshrl.u32 %v3580, 16
      %v3771 = vrot.slane %v3769, 3
      %v3772 = vshll.u32 %v3580, 16
      %v3774 = vrot.slane %v3772, 4
      %v3775 = vor.u32 %v3771, %v3774
      %v3776 = vsel %vm2504, %v3748, %v3775
      %v3778 = vshrl.u32 %v3624, 16
      %v3780 = vrot.slane %v3778, 3
      %v3781 = vshll.u32 %v3624, 16
      %v3783 = vrot.slane %v3781, 4
      %v3784 = vor.u32 %v3780, %v3783
      %v3785 = vsel %vm2504, %v3757, %v3784
      %v3787 = vshrl.u32 %v3641, 16
      %v3789 = vrot.slane %v3787, 3
      %v3790 = vshll.u32 %v3641, 16
      %v3792 = vrot.slane %v3790, 4
      %v3793 = vor.u32 %v3789, %v3792
      %v3794 = vsel %vm2504, %v3766, %v3793
      %v3796 = vshrl.u32 %v3581, 16
      %v3798 = vrot.slane %v3796, 3
      %v3799 = vshll.u32 %v3581, 16
      %v3801 = vrot.slane %v3799, 4
      %v3802 = vor.u32 %v3798, %v3801
      %v3803 = vsel %vm2504, %v3775, %v3802
      %v3805 = vshrl.u32 %v3627, 16
      %v3807 = vrot.slane %v3805, 3
      %v3808 = vshll.u32 %v3627, 16
      %v3810 = vrot.slane %v3808, 4
      %v3811 = vor.u32 %v3807, %v3810
      %v3812 = vsel %vm2504, %v3784, %v3811
      %v3814 = vshrl.u32 %v3640, 16
      %v3816 = vrot.slane %v3814, 3
      %v3817 = vshll.u32 %v3640, 16
      %v3819 = vrot.slane %v3817, 4
      %v3820 = vor.u32 %v3816, %v3819
      %v3821 = vsel %vm2504, %v3793, %v3820
      %v3882 = vunpack.c.l.b16 %v3642
      %v3883 = vunpack.c.l.b16 %v3643
      %v3884 = vunpack.c.l.b16 %v3644
      %v3885 = vunpack.c.l.b16 %v3645
      %v3886 = vunpack.c.l.b16 %v3646
      %v3887 = vunpack.c.l.b16 %v3647
      %v3888 = vunpack.c.l.b16 %v3648
      %v3889 = vunpack.c.l.b16 %v3649
      %v3890 = vunpack.c.l.b16 %v3650
      %v3891 = vunpack.c.l.b16 %v3651
      %v3892 = vunpack.c.l.b16 %v3652
      %v3893 = vunpack.c.l.b16 %v3653
      %v3894 = vunpack.c.l.b16 %v3654
      %v3895 = vunpack.c.l.b16 %v3655
      %v3896 = vunpack.c.l.b16 %v3656
      %v3897 = vunpack.c.l.b16 %v3657
      %v3898 = vunpack.c.l.b16 %v3658
      %v3899 = vunpack.c.l.b16 %v3659
      %v3900 = vunpack.c.l.b16 %v3660
      %v3901 = vunpack.c.l.b16 %v3661
      %v3902 = vunpack.c.l.b16 %v3662
      %v3903 = vunpack.c.l.b16 %v3663
      %v3904 = vunpack.c.l.b16 %v3664
      %v3905 = vunpack.c.l.b16 %v3665
      %v3906 = vunpack.c.l.b16 %v3666
      %v3907 = vunpack.c.l.b16 %v3667
      %v3908 = vunpack.c.l.b16 %v3668
      %v3909 = vunpack.c.l.b16 %v3669
      %v3910 = vunpack.c.l.b16 %v3670
      %v3911 = vunpack.c.l.b16 %v3671
      %v3912 = vunpack.c.l.b16 %v3672
      %v3913 = vunpack.c.l.b16 %v3673
      %v3914 = vunpack.c.l.b16 %v3674
      %v3915 = vunpack.c.l.b16 %v3675
      %v3916 = vunpack.c.l.b16 %v3676
      %v3917 = vunpack.c.l.b16 %v3677
      %v3918 = vunpack.c.l.b16 %v3678
      %v3919 = vunpack.c.l.b16 %v3679
      %v3920 = vunpack.c.l.b16 %v3680
      %v3921 = vunpack.c.l.b16 %v3681
      %v3922 = vunpack.c.l.b16 %v3682
      %v3923 = vunpack.c.l.b16 %v3683
      %v3924 = vunpack.c.l.b16 %v3684
      %v3925 = vunpack.c.l.b16 %v3685
      %v3926 = vunpack.c.l.b16 %v3686
      %v3927 = vunpack.c.l.b16 %v3687
      %v3928 = vunpack.c.l.b16 %v3688
      %v3929 = vunpack.c.l.b16 %v3689
      %v3930 = vpack.c.b16 %v3883, %v3882
      %v3931 = vpack.c.b16 %v3885, %v3884
      %v3932 = vpack.c.b16 %v3887, %v3886
      %v3933 = vpack.c.b16 %v3889, %v3888
      %v3934 = vpack.c.b16 %v3891, %v3890
      %v3935 = vpack.c.b16 %v3893, %v3892
      %v3936 = vpack.c.b16 %v3895, %v3894
      %v3937 = vpack.c.b16 %v3897, %v3896
      %v3938 = vpack.c.b16 %v3899, %v3898
      %v3939 = vpack.c.b16 %v3901, %v3900
      %v3940 = vpack.c.b16 %v3903, %v3902
      %v3941 = vpack.c.b16 %v3905, %v3904
      %v3942 = vpack.c.b16 %v3907, %v3906
      %v3943 = vpack.c.b16 %v3909, %v3908
      %v3944 = vpack.c.b16 %v3911, %v3910
      %v3945 = vpack.c.b16 %v3913, %v3912
      %v3946 = vpack.c.b16 %v3915, %v3914
      %v3947 = vpack.c.b16 %v3917, %v3916
      %v3948 = vpack.c.b16 %v3919, %v3918
      %v3949 = vpack.c.b16 %v3921, %v3920
      %v3950 = vpack.c.b16 %v3923, %v3922
      %v3951 = vpack.c.b16 %v3925, %v3924
      %v3952 = vpack.c.b16 %v3927, %v3926
      %v3953 = vpack.c.b16 %v3929, %v3928
      %3978 = vmatprep.subr.bf16.mxu0 0
      %3979 = vmatpush1.bf16.msra.mxu0 %v3930
      %3980 = vmatprep.subr.bf16.mxu0 0
      %3981 = vmatpush1.bf16.msra.mxu0 %v3931
      %3982 = vmatprep.subr.bf16.mxu0 0
      %3983 = vmatpush1.bf16.msra.mxu0 %v3932
      %3984 = vmatprep.subr.bf16.mxu0 0
      %3985 = vmatpush1.bf16.msra.mxu0 %v3933
      %3986 = vmatprep.subr.bf16.mxu0 0
      %3987 = vmatpush1.bf16.msra.mxu0 %v3934
      %3988 = vmatprep.subr.bf16.mxu0 0
      %3989 = vmatpush1.bf16.msra.mxu0 %v3935
      %3990 = vmatprep.subr.bf16.mxu0 0
      %3991 = vmatpush1.bf16.msra.mxu0 %v3936
      %3992 = vmatprep.subr.bf16.mxu0 0
      %3993 = vmatpush1.bf16.msra.mxu0 %v3937
      %3994 = vmatprep.subr.bf16.mxu0 0
      %3995 = vmatpush1.bf16.msra.mxu0 %v3938
      %3996 = vmatprep.subr.bf16.mxu0 0
      %3997 = vmatpush1.bf16.msra.mxu0 %v3939
      %3998 = vmatprep.subr.bf16.mxu0 0
      %3999 = vmatpush1.bf16.msra.mxu0 %v3940
      %4000 = vmatprep.subr.bf16.mxu0 0
      %4001 = vmatpush1.bf16.msra.mxu0 %v3941
      %4002 = vmatprep.subr.bf16.mxu0 0
      %4003 = vmatpush1.bf16.msra.mxu0 %v3942
      %4004 = vmatprep.subr.bf16.mxu0 0
      %4005 = vmatpush1.bf16.msra.mxu0 %v3943
      %4006 = vmatprep.subr.bf16.mxu0 0
      %4007 = vmatpush1.bf16.msra.mxu0 %v3944
      %4008 = vmatprep.subr.bf16.mxu0 0
      %4009 = vmatpush1.bf16.msra.mxu0 %v3945
      %4010 = vmatprep.mubr.bf16.mxu0 %v3723
      %4011 = vmatmul.mubr.bf16.gmra.mrb[0].mxu0 %v3706
      %v4012 = vpop.f32.mrb[0].mxu0
      %v4013 = vadd.f32 0.0, %v4012
      %v4014 = vpop.f32.mrb[0].mxu0
      %v4015 = vpop.f32.mrb[0].mxu0
      %v4016 = vadd.f32 0.0, %v4015
      %v4017 = vpop.f32.mrb[0].mxu0
      %4018 = vmatprep.mubr.bf16.mxu0 %v3758
      %4019 = vmatmul.mubr.bf16.gmra.mrb[0].mxu0 %v3749
      %v4020 = vpop.f32.mrb[0].mxu0
      %v4021 = vadd.f32 0.0, %v4020
      %v4022 = vpop.f32.mrb[0].mxu0
      %v4023 = vpop.f32.mrb[0].mxu0
      %v4024 = vadd.f32 0.0, %v4023
      %v4025 = vpop.f32.mrb[0].mxu0
      %4026 = vmatprep.mubr.bf16.mxu0 %v3785
      %4027 = vmatmul.mubr.bf16.gmra.mrb[0].mxu0 %v3776
      %v4028 = vpop.f32.mrb[0].mxu0
      %v4029 = vadd.f32 0.0, %v4028
      %v4030 = vpop.f32.mrb[0].mxu0
      %v4031 = vpop.f32.mrb[0].mxu0
      %v4032 = vadd.f32 0.0, %v4031
      %v4033 = vpop.f32.mrb[0].mxu0
      %4034 = vmatprep.mubr.bf16.mxu0 %v3812
      %4035 = vmatmul.mubr.bf16.gmra.mrb[0].mxu0 %v3803
      %v4036 = vpop.f32.mrb[0].mxu0
      %v4037 = vadd.f32 0.0, %v4036
      %v4038 = vpop.f32.mrb[0].mxu0
      %v4039 = vpop.f32.mrb[0].mxu0
      %v4040 = vadd.f32 0.0, %v4039
      %v4041 = vpop.f32.mrb[0].mxu0
      %4042 = vdwg.mxu0
      %4043 = vmatprep.subr.bf16.mxu0 0
      %4044 = vmatpush1.bf16.msra.mxu0 %v3946
      %4045 = vmatprep.subr.bf16.mxu0 0
      %4046 = vmatpush1.bf16.msra.mxu0 %v3947
      %4047 = vmatprep.subr.bf16.mxu0 0
      %4048 = vmatpush1.bf16.msra.mxu0 %v3948
      %4049 = vmatprep.subr.bf16.mxu0 0
      %4050 = vmatpush1.bf16.msra.mxu0 %v3949
      %4051 = vmatprep.subr.bf16.mxu0 0
      %4052 = vmatpush1.bf16.msra.mxu0 %v3950
      %4053 = vmatprep.subr.bf16.mxu0 0
      %4054 = vmatpush1.bf16.msra.mxu0 %v3951
      %4055 = vmatprep.subr.bf16.mxu0 0
      %4056 = vmatpush1.bf16.msra.mxu0 %v3952
      %4057 = vmatprep.subr.bf16.mxu0 0
      %4058 = vmatpush1.bf16.msra.mxu0 %v3953
      %4059 = vmatprep.subr.bf16.mxu0 0
      %4060 = vmatpush1.bf16.msra.mxu0 0
      %4061 = vmatprep.subr.bf16.mxu0 0
      %4062 = vmatpush1.bf16.msra.mxu0 0
      %4063 = vmatprep.subr.bf16.mxu0 0
      %4064 = vmatpush1.bf16.msra.mxu0 0
      %4065 = vmatprep.subr.bf16.mxu0 0
      %4066 = vmatpush1.bf16.msra.mxu0 0
      %4067 = vmatprep.subr.bf16.mxu0 0
      %4068 = vmatpush1.bf16.msra.mxu0 0
      %4069 = vmatprep.subr.bf16.mxu0 0
      %4070 = vmatpush1.bf16.msra.mxu0 0
      %4071 = vmatprep.subr.bf16.mxu0 0
      %4072 = vmatpush1.bf16.msra.mxu0 0
      %4073 = vmatprep.subr.bf16.mxu0 0
      %4074 = vmatpush1.bf16.msra.mxu0 0
      %4075 = vmatprep.mubr.bf16.mxu0 0
      %4076 = vmatmul.mubr.bf16.gmra.mrb[0].mxu0 %v3740
      %v4077 = vpop.f32.mrb[0].mxu0
      %v4078 = vadd.f32 %v4013, %v4077
      %v4079 = vpop.f32.mrb[0].mxu0
      %v4080 = vpop.f32.mrb[0].mxu0
      %v4081 = vadd.f32 %v4016, %v4080
      %v4082 = vpop.f32.mrb[0].mxu0
      %4083 = vmatprep.mubr.bf16.mxu0 0
      %4084 = vmatmul.mubr.bf16.gmra.mrb[0].mxu0 %v3767
      %v4085 = vpop.f32.mrb[0].mxu0
      %v4086 = vadd.f32 %v4021, %v4085
      %v4087 = vpop.f32.mrb[0].mxu0
      %v4088 = vpop.f32.mrb[0].mxu0
      %v4089 = vadd.f32 %v4024, %v4088
      %v4090 = vpop.f32.mrb[0].mxu0
      %4091 = vmatprep.mubr.bf16.mxu0 0
      %4092 = vmatmul.mubr.bf16.gmra.mrb[0].mxu0 %v3794
      %v4093 = vpop.f32.mrb[0].mxu0
      %v4094 = vadd.f32 %v4029, %v4093
      %v4095 = vpop.f32.mrb[0].mxu0
      %v4096 = vpop.f32.mrb[0].mxu0
      %v4097 = vadd.f32 %v4032, %v4096
      %v4098 = vpop.f32.mrb[0].mxu0
      %4099 = vmatprep.mubr.bf16.mxu0 0
      %4100 = vmatmul.mubr.bf16.gmra.mrb[0].mxu0 %v3821
      %v4101 = vpop.f32.mrb[0].mxu0
      %v4102 = vadd.f32 %v4037, %v4101
      %v4103 = vpop.f32.mrb[0].mxu0
      %v4104 = vpop.f32.mrb[0].mxu0
      %v4105 = vadd.f32 %v4040, %v4104
      %v4106 = vpop.f32.mrb[0].mxu0
      %4107 = vdwg.mxu0
      %v4108 = vadd.f32 %v3545, %v4078
      %v4109 = vadd.f32 %v3548, %v4081
      %v4110 = vadd.f32 %v3553, %v4086
      %v4111 = vadd.f32 %v3556, %v4089
      %v4112 = vadd.f32 %v3561, %v4094
      %v4113 = vadd.f32 %v3564, %v4097
      %v4114 = vadd.f32 %v3569, %v4102
      %v4115 = vadd.f32 %v3572, %v4105
      %v4116 = vld [vmem:[%s5] sm:$0x1]
      %v4118 = vlaneseq
      %v4119 = vshrl.u32 %v4118, 7
      %v4120 = vsub.s32 0, %v4119
      %v4121 = vrot.slane %v4116, %v4120
      %v4123 = vmul.f32 %v4108, %v4121
      %v4124 = vmul.f32 %v4109, %v4121
      %v4125 = vmul.f32 %v4110, %v4121
      %v4126 = vmul.f32 %v4111, %v4121
      %v4127 = vmul.f32 %v4112, %v4121
      %v4128 = vmul.f32 %v4113, %v4121
      %v4129 = vmul.f32 %v4114, %v4121
      %v4130 = vmul.f32 %v4115, %v4121
      %v4131 = vld [vmem:[%s6] sm:$0x1]
      %v4133 = vlaneseq
      %v4134 = vshrl.u32 %v4133, 7
      %v4135 = vsub.s32 0, %v4134
      %v4136 = vrot.slane %v4131, %v4135
      %v4138 = vadd.f32 %v4123, %v4136
      %v4139 = vadd.f32 %v4124, %v4136
      %v4140 = vadd.f32 %v4125, %v4136
      %v4141 = vadd.f32 %v4126, %v4136
      %v4142 = vadd.f32 %v4127, %v4136
      %v4143 = vadd.f32 %v4128, %v4136
      %v4144 = vadd.f32 %v4129, %v4136
      %v4145 = vadd.f32 %v4130, %v4136
      %v4146 = vadd.f32 %v4138, %v2166
      %v4147 = vadd.f32 %v4139, %v2167
      %v4148 = vadd.f32 %v4140, %v2168
      %v4149 = vadd.f32 %v4141, %v2169
      %v4150 = vadd.f32 %v4142, %v2170
      %v4151 = vadd.f32 %v4143, %v2171
      %v4152 = vadd.f32 %v4144, %v2172
      %v4153 = vadd.f32 %v4145, %v2173
      %v4154 = vmax.f32 %v4146, 0.0
      %v4155 = vmax.f32 %v4147, 0.0
      %v4156 = vmax.f32 %v4148, 0.0
      %v4157 = vmax.f32 %v4149, 0.0
      %v4158 = vmax.f32 %v4150, 0.0
      %v4159 = vmax.f32 %v4151, 0.0
      %v4160 = vmax.f32 %v4152, 0.0
      %v4161 = vmax.f32 %v4153, 0.0
      %v4162 = vpack.c.bf16 %v4154, %v4154
      %v4163 = vpack.c.bf16 %v4155, %v4155
      %v4164 = vpack.c.bf16 %v4156, %v4156
      %v4165 = vpack.c.bf16 %v4157, %v4157
      %v4166 = vpack.c.bf16 %v4158, %v4158
      %v4167 = vpack.c.bf16 %v4159, %v4159
      %v4168 = vpack.c.bf16 %v4160, %v4160
      %v4169 = vpack.c.bf16 %v4161, %v4161
      %4170 = vst [vmem:[%s413] sm:$0xf] %v4162
      %4171 = vst [vmem:[%s413 + $0x4] sm:$0xf] %v4163
      %4172 = vst [vmem:[%s413 + $0x8] sm:$0xf] %v4164
      %4173 = vst [vmem:[%s413 + $0xc] sm:$0xf] %v4165
      %4174 = vst [vmem:[%s413 + $0x10] sm:$0xf] %v4166
      %4175 = vst [vmem:[%s413 + $0x14] sm:$0xf] %v4167
      %4176 = vst [vmem:[%s413 + $0x18] sm:$0xf] %v4168
      %4177 = vst [vmem:[%s413 + $0x1c] sm:$0xf] %v4169
      %p4178 = scmp.lt.s32.totalorder %s23, 1
      %s4179 = scalar_select %p4178, %s23, 1
      %s4180 = smul.addr %s4179, 8
      %s4181 = smul.addr %s4180, 4
      %s4182 = scalar_lea.vmem %s12, %s4181
      // Predicated region
      $region69: #{resblock_forward.1} parent=67 // pred_check
        %p4183 = pneg %p298
      $region70: #{resblock_forward.1} parent=67 // pred_check_branch
        %4185 = sbr.rel (%p4183) target = $region72
      $region71: #{resblock_forward.1} parent=67 // pred_region
        _
      $region72: #{resblock_forward.1} parent=67 // pred_fallthru
        _
    $region68: #{resblock_forward.1} parent=5 // pred_fallthru
      _
    %p4186 = scmp.le.s32.totalorder 2, %s18
    // Predicated region
    $region73: #{resblock_forward.1} parent=5 // pred_check
      %p4187 = pneg %p4186
    $region74: #{resblock_forward.1} parent=5 // pred_check_branch
      %4189 = sbr.rel (%p4187) target = $region76
    $region75: #{resblock_forward.1} parent=5 // pred_region
      %s4190 = ssub.s32 %s18, 2
      // Predicated region
      $region77: #{resblock_forward.1} parent=75 // pred_check
        %p4191 = pneg %p304
      $region78: #{resblock_forward.1} parent=75 // pred_check_branch
        %4193 = sbr.rel (%p4191) target = $region80
      $region79: #{resblock_forward.1} parent=75 // pred_region
        %p4194 = scmp.lt.s32.totalorder %s24, 1
        %s4195 = scalar_select %p4194, %s24, 1
        %s4196 = smul.addr %s4195, 8
        %s4197 = smul.addr %s4196, 4
        %s4198 = scalar_lea.vmem %s12, %s4197
      $region80: #{resblock_forward.1} parent=75 // pred_fallthru
        _
    $region76: #{resblock_forward.1} parent=5 // pred_fallthru
      _
  $region6: #{resblock_forward.1} parent=0 // loop_footer
    %s22 = sadd.s32 1, %s18
  $region7: #{resblock_forward.1} parent=0 // loop_footer_branch
    %17 = sbr.rel target = $region3
  $region8: #{resblock_forward.1} parent=0 // loop_exit
    _

</llo_original>
